<compile_context>
chip_gen: v6e
topology: v6e:2x2x1
jax: 0.10.0
libtpu: 0.0.40
codegen_flags: <defaults>
</compile_context>

<pallas_src>
import functools

import jax
import jax.numpy as jnp
from jax.experimental import pallas as pl
from jax.experimental.pallas import tpu as pltpu


# ------------------------------ helpers ------------------------------------

def _mix(w, x):
    """Contraction out[co, p] = sum_k w[co, k] * x[k, p].

    For tiny K (this module's channel counts) use VPU broadcast-FMAs instead of the
    MXU (which would run at a few % utilization at K=4..8); fall back to jnp.dot for
    real UNet channel counts.
    """
    K = w.shape[1]
    if K <= 32:
        acc = w[:, 0:1] * x[0:1, :]
        for k in range(1, K):
            acc = acc + w[:, k:k + 1] * x[k:k + 1, :]
        return acc
    return jnp.dot(w, x, preferred_element_type=jnp.float32)


def _pick_th(H, W):
    """Rows of the small image processed per grid step."""
    if H * W <= 4096:           # whole image fits easily -> one block per image
        return H
    for th in range(min(H, 32), 0, -1):
        if H % th == 0 and (th * W) % 128 == 0:   # keep blocks lane-aligned
            return th
    return H


# ----------------------------- Pallas kernels ------------------------------

def _produce_kernel(up_ref, x_ref, wmix_ref, bup_ref, wx_ref, bx_ref,
                    y_ref, stats_ref, *, up_out, W, TH):
    """Fused tr_conv + 1x1 conv + concat + ReLU + per-channel stats accumulation."""
    W2 = 2 * W
    hb = pl.program_id(1)

    @pl.when(hb == 0)
    def _init():
        stats_ref[...] = jnp.zeros_like(stats_ref)

    U = up_ref[...]            # (up_in, TH*W)       pixels-on-lane
    X = x_ref[...]             # (x_in, 2*TH*W2)     pixels-on-lane
    Wmix = wmix_ref[...]       # (4*up_out, up_in)   rows ordered (kh, kw, co)
    Wx = wx_ref[...]           # (x_out, x_in)
    bup = bup_ref[...]         # (up_out, 1)
    bx = bx_ref[...]           # (x_out, 1)

    # ---- 1x1 conv branch over the whole lane-dense tile (VPU), fused ReLU
    y_x = jnp.maximum(_mix(Wx, X) + bx, 0.0)         # (x_out, 2*TH*W2)

    # ---- transposed-conv branch: channel mix first (small-width domain)
    Q = _mix(Wmix, U)                                # (4*up_out, TH*W)

    # stride-2 lane-scatter matrices: R_kw[w, 2*w + kw] = 1  (pixel shuffle along width)
    col = jax.lax.broadcasted_iota(jnp.int32, (W, W2), 1)
    row = jax.lax.broadcasted_iota(jnp.int32, (W, W2), 0)
    R0 = (col == 2 * row).astype(jnp.float32)
    R1 = (col == 2 * row + 1).astype(jnp.float32)

    up_rows = []
    for hl in range(TH):                             # static, unrolled
        Qh = Q[:, hl * W:(hl + 1) * W]               # (4*up_out, W)
        for kh in range(2):
            q0 = Qh[(2 * kh) * up_out:(2 * kh + 1) * up_out, :]       # kw = 0
            q1 = Qh[(2 * kh + 1) * up_out:(2 * kh + 2) * up_out, :]   # kw = 1
            r = (jnp.dot(q0, R0, preferred_element_type=jnp.float32)
                 + jnp.dot(q1, R1, preferred_element_type=jnp.float32) + bup)
            up_rows.append(jnp.maximum(r, 0.0))      # (up_out, W2) -> output row 2*h + kh
    y_up = jnp.concatenate(up_rows, axis=-1)         # (up_out, 2*TH*W2), rows in output order

    Y = jnp.concatenate([y_up, y_x], axis=0)         # (C, 2*TH*W2)  ReLU'd concat slab
    y_ref[...] = Y.astype(y_ref.dtype)

    # per-channel partial sums for training-mode BatchNorm statistics
    s = jnp.concatenate([jnp.sum(Y, axis=-1, keepdims=True),
                         jnp.sum(Y * Y, axis=-1, keepdims=True)], axis=-1)  # (C, 2)
    stats_ref[...] = stats_ref[...] + s


def _normalize_kernel(y_ref, scale_ref, shift_ref, o_ref):
    o_ref[...] = (y_ref[...] * scale_ref[...] + shift_ref[...]).astype(o_ref.dtype)


# ------------------------------ module wrapper ------------------------------

def unet_up_block(up_p, x_p, params, *, eps=1e-5):
    """Forward pass of UNet_Up_Block. up_p, x_p are NCHW; returns NCHW."""
    W_tr, b_tr, W_x, b_x, gamma, beta = params
    N, up_in, H, W = up_p.shape
    Nx, x_in, H2, W2 = x_p.shape
    up_out = W_tr.shape[1]
    x_out = W_x.shape[0]
    C = up_out + x_out
    assert Nx == N and H2 == 2 * H and W2 == 2 * W

    TH = _pick_th(H, W)
    P2 = H2 * W2
    blk = 2 * TH * W2                     # output lanes per block
    grid = (N, H // TH)

    # Free (trailing-dim) reshapes; no NCHW<->NHWC transposes anywhere.
    up_flat = up_p.reshape(N, up_in, H * W)
    x_flat = x_p.reshape(N, x_in, P2)
    w_mix = jnp.transpose(W_tr, (2, 3, 1, 0)).reshape(4 * up_out, up_in)  # rows (kh, kw, co)
    b_up = b_tr.reshape(up_out, 1)
    w_x = W_x.reshape(x_out, x_in)
    b_xr = b_x.reshape(x_out, 1)

    cparams = pltpu.CompilerParams(
        dimension_semantics=("parallel", "arbitrary"),
        vmem_limit_bytes=32 * 1024 * 1024)

    y_flat, stats = pl.pallas_call(
        functools.partial(_produce_kernel, up_out=up_out, W=W, TH=TH),
        out_shape=(jax.ShapeDtypeStruct((N, C, P2), jnp.float32),
                   jax.ShapeDtypeStruct((N, C, 2), jnp.float32)),
        grid_spec=pltpu.PrefetchScalarGridSpec(
            num_scalar_prefetch=0,
            grid=grid,
            in_specs=[
                pl.BlockSpec((None, up_in, TH * W), lambda n, hb: (n, 0, hb)),
                pl.BlockSpec((None, x_in, blk), lambda n, hb: (n, 0, hb)),
                pl.BlockSpec((4 * up_out, up_in), lambda n, hb: (0, 0)),
                pl.BlockSpec((up_out, 1), lambda n, hb: (0, 0)),
                pl.BlockSpec((x_out, x_in), lambda n, hb: (0, 0)),
                pl.BlockSpec((x_out, 1), lambda n, hb: (0, 0)),
            ],
            out_specs=(
                pl.BlockSpec((None, C, blk), lambda n, hb: (n, 0, hb)),
                pl.BlockSpec((None, C, 2), lambda n, hb: (n, 0, 0)),   # resident accumulator
            ),
        ),
        compiler_params=cparams,
    )(up_flat, x_flat, w_mix, b_up, w_x, b_xr)

    # Tiny per-channel reduction over batch + scale/shift (BatchNorm training statistics).
    # TODO(synk): running_mean / running_var buffer updates (stateful) are not modeled;
    # they do not affect the forward output in training mode.
    totals = jnp.sum(stats, axis=0)                      # (C, 2)
    cnt = jnp.float32(N * P2)
    mean = totals[:, 0] / cnt
    var = totals[:, 1] / cnt - mean * mean               # biased variance (training mode)
    scale = gamma * jax.lax.rsqrt(var + eps)
    shift = beta - mean * scale

    out_flat = pl.pallas_call(
        _normalize_kernel,
        out_shape=jax.ShapeDtypeStruct((N, C, P2), jnp.float32),
        grid_spec=pltpu.PrefetchScalarGridSpec(
            num_scalar_prefetch=0,
            grid=grid,
            in_specs=[
                pl.BlockSpec((None, C, blk), lambda n, pb: (n, 0, pb)),
                pl.BlockSpec((C, 1), lambda n, pb: (0, 0)),
                pl.BlockSpec((C, 1), lambda n, pb: (0, 0)),
            ],
            out_specs=pl.BlockSpec((None, C, blk), lambda n, pb: (n, 0, pb)),
        ),
        compiler_params=pltpu.CompilerParams(
            dimension_semantics=("parallel", "parallel"),
            vmem_limit_bytes=32 * 1024 * 1024),
    )(y_flat, scale.reshape(C, 1), shift.reshape(C, 1))

    return out_flat.reshape(N, C, H2, W2)                # already NCHW; reshape is free


# --------------------------- pure-JAX reference -----------------------------

def unet_up_block_ref(up_p, x_p, params, *, eps=1e-5):
    W_tr, b_tr, W_x, b_x, gamma, beta = params
    N, up_in, H, W = up_p.shape
    up_out = W_tr.shape[1]
    x_out = W_x.shape[0]
    up = jnp.einsum('nihw,iokl->nohkwl', up_p, W_tr).reshape(N, up_out, 2 * H, 2 * W)
    up = up + b_tr[None, :, None, None]
    xo = jnp.einsum('nihw,oi->nohw', x_p, W_x.reshape(x_out, -1)) + b_x[None, :, None, None]
    cat = jnp.concatenate([up, xo], axis=1)
    r = jnp.maximum(cat, 0.0)
    mean = jnp.mean(r, axis=(0, 2, 3), keepdims=True)
    var = jnp.mean(jnp.square(r - mean), axis=(0, 2, 3), keepdims=True)
    return ((r - mean) * jax.lax.rsqrt(var + eps)
            * gamma[None, :, None, None] + beta[None, :, None, None])


# ---------------------------------- main ------------------------------------

if __name__ == "__main__":
    # Module config: UNet_Up_Block(up_in=8, x_in=4, n_out=8) -> up_out = x_out = 4
    N, up_in, x_in, n_out = 2, 8, 4, 8
    up_out = x_out = n_out // 2
    H = W = 8          # up_p spatial; x_p spatial is 2H x 2W = 16 x 16

    key = jax.random.PRNGKey(0)
    k1, k2, k3, k4, k5 = jax.random.split(key, 5)

    # Deterministic synthetic parameters (shapes match the PyTorch module).
    W_tr = 0.1 * jax.random.normal(k1, (up_in, up_out, 2, 2), jnp.float32)   # ConvTranspose2d weight
    b_tr = 0.05 * jax.random.normal(k2, (up_out,), jnp.float32)
    W_x = 0.1 * jax.random.normal(k3, (x_out, x_in, 1, 1), jnp.float32)      # Conv2d 1x1 weight
    b_x = 0.05 * jax.random.normal(k4, (x_out,), jnp.float32)
    gamma = 1.0 + 0.1 * jnp.arange(n_out, dtype=jnp.float32)                 # BN weight
    beta = 0.01 * jnp.arange(n_out, dtype=jnp.float32)                       # BN bias
    params = (W_tr, b_tr, W_x, b_x, gamma, beta)

    up_p = jax.random.normal(k5, (N, up_in, H, W), jnp.float32)
    x_p = jax.random.normal(jax.random.fold_in(key, 7), (N, x_in, 2 * H, 2 * W), jnp.float32)

    out = jax.block_until_ready(unet_up_block(up_p, x_p, params))
    ref = jax.block_until_ready(unet_up_block_ref(up_p, x_p, params))

    assert out.shape == (N, n_out, 2 * H, 2 * W), out.shape
    assert jnp.allclose(out, ref, atol=1e-4, rtol=1e-4), float(jnp.max(jnp.abs(out - ref)))
    print("KERNEL_OK")
</pallas_src>

<mosaic_0001>
module attributes {stable_mosaic.version = 11 : i64} {
  func.func @_produce_kernel(%arg0: i32, %arg1: i32, %arg2: memref<1x8x64xf32, #tpu.memory_space<vmem>>, %arg3: memref<1x4x256xf32, #tpu.memory_space<vmem>>, %arg4: memref<16x8xf32, #tpu.memory_space<vmem>>, %arg5: memref<4x1xf32, #tpu.memory_space<vmem>>, %arg6: memref<4x4xf32, #tpu.memory_space<vmem>>, %arg7: memref<4x1xf32, #tpu.memory_space<vmem>>, %arg8: memref<1x8x256xf32, #tpu.memory_space<vmem>>, %arg9: memref<1x8x2xf32, #tpu.memory_space<vmem>>) attributes {dimension_semantics = [#tpu.dimension_semantics<parallel>, #tpu.dimension_semantics<arbitrary>], iteration_bounds = array<i64: 2, 1>, scalar_prefetch = 0 : i64, scratch_operands = 0 : i64, tpu.core_type = #tpu.core_type<tc>, window_params = [{transform_indices = @transform_0, window_bounds = array<i64: 1, 8, 64>}, {transform_indices = @transform_1, window_bounds = array<i64: 1, 4, 256>}, {pipeline_mode = #tpu.pipeline_mode<synchronous>, transform_indices = @transform_2, window_bounds = array<i64: 16, 8>}, {pipeline_mode = #tpu.pipeline_mode<synchronous>, transform_indices = @transform_3, window_bounds = array<i64: 4, 1>}, {pipeline_mode = #tpu.pipeline_mode<synchronous>, transform_indices = @transform_4, window_bounds = array<i64: 4, 4>}, {pipeline_mode = #tpu.pipeline_mode<synchronous>, transform_indices = @transform_5, window_bounds = array<i64: 4, 1>}, {transform_indices = @transform_6, window_bounds = array<i64: 1, 8, 256>}, {transform_indices = @transform_7, window_bounds = array<i64: 1, 8, 2>}]} {
    %c0_i32 = arith.constant 0 : i32
    %0 = arith.cmpi eq, %arg1, %c0_i32 : i32
    %1 = arith.extui %0 : i1 to i32
    %c0_i32_0 = arith.constant 0 : i32
    %2 = arith.cmpi ne, %1, %c0_i32_0 : i32
    scf.if %2 {
      %cst_74 = arith.constant 0.000000e+00 : f32
      %268 = vector.broadcast %cst_74 : f32 to vector<8x2xf32>
      %c0_75 = arith.constant 0 : index
      %c0_76 = arith.constant 0 : index
      %c0_77 = arith.constant 0 : index
      %269 = vector.load %arg9[%c0_75, %c0_76, %c0_77] : memref<1x8x2xf32, #tpu.memory_space<vmem>>, vector<1x8x2xf32>
      %270 = vector.shape_cast %269 : vector<1x8x2xf32> to vector<8x2xf32>
      %271 = vector.shape_cast %268 : vector<8x2xf32> to vector<1x8x2xf32>
      tpu.vector_store %arg9[%c0_75, %c0_76, %c0_77], %271 {strides = array<i32>} : memref<1x8x2xf32, #tpu.memory_space<vmem>>, vector<1x8x2xf32>,
    } else {
    }
    %c0 = arith.constant 0 : index
    %c0_1 = arith.constant 0 : index
    %c0_2 = arith.constant 0 : index
    %3 = vector.load %arg2[%c0, %c0_1, %c0_2] : memref<1x8x64xf32, #tpu.memory_space<vmem>>, vector<1x8x64xf32>
    %4 = vector.shape_cast %3 : vector<1x8x64xf32> to vector<8x64xf32>
    %c0_3 = arith.constant 0 : index
    %c0_4 = arith.constant 0 : index
    %c0_5 = arith.constant 0 : index
    %5 = vector.load %arg3[%c0_3, %c0_4, %c0_5] : memref<1x4x256xf32, #tpu.memory_space<vmem>>, vector<1x4x256xf32>
    %6 = vector.shape_cast %5 : vector<1x4x256xf32> to vector<4x256xf32>
    %c0_6 = arith.constant 0 : index
    %c0_7 = arith.constant 0 : index
    %7 = vector.load %arg4[%c0_6, %c0_7] : memref<16x8xf32, #tpu.memory_space<vmem>>, vector<16x8xf32>
    %c0_8 = arith.constant 0 : index
    %c0_9 = arith.constant 0 : index
    %8 = vector.load %arg6[%c0_8, %c0_9] : memref<4x4xf32, #tpu.memory_space<vmem>>, vector<4x4xf32>
    %c0_10 = arith.constant 0 : index
    %c0_11 = arith.constant 0 : index
    %9 = vector.load %arg5[%c0_10, %c0_11] : memref<4x1xf32, #tpu.memory_space<vmem>>, vector<4x1xf32>
    %c0_12 = arith.constant 0 : index
    %c0_13 = arith.constant 0 : index
    %10 = vector.load %arg7[%c0_12, %c0_13] : memref<4x1xf32, #tpu.memory_space<vmem>>, vector<4x1xf32>
    %11 = vector.extract_strided_slice %8 {offsets = [0, 0], sizes = [4, 1], strides = [1, 1]} : vector<4x4xf32> to vector<4x1xf32>
    %12 = vector.extract_strided_slice %6 {offsets = [0, 0], sizes = [1, 256], strides = [1, 1]} : vector<4x256xf32> to vector<1x256xf32>
    %13 = vector.broadcast %11 : vector<4x1xf32> to vector<4x256xf32>
    %14 = vector.broadcast %12 : vector<1x256xf32> to vector<4x256xf32>
    %15 = arith.mulf %13, %14 : vector<4x256xf32>
    %16 = vector.extract_strided_slice %8 {offsets = [0, 1], sizes = [4, 1], strides = [1, 1]} : vector<4x4xf32> to vector<4x1xf32>
    %17 = vector.extract_strided_slice %6 {offsets = [1, 0], sizes = [1, 256], strides = [1, 1]} : vector<4x256xf32> to vector<1x256xf32>
    %18 = vector.broadcast %16 : vector<4x1xf32> to vector<4x256xf32>
    %19 = vector.broadcast %17 : vector<1x256xf32> to vector<4x256xf32>
    %20 = arith.mulf %18, %19 : vector<4x256xf32>
    %21 = arith.addf %15, %20 : vector<4x256xf32>
    %22 = vector.extract_strided_slice %8 {offsets = [0, 2], sizes = [4, 1], strides = [1, 1]} : vector<4x4xf32> to vector<4x1xf32>
    %23 = vector.extract_strided_slice %6 {offsets = [2, 0], sizes = [1, 256], strides = [1, 1]} : vector<4x256xf32> to vector<1x256xf32>
    %24 = vector.broadcast %22 : vector<4x1xf32> to vector<4x256xf32>
    %25 = vector.broadcast %23 : vector<1x256xf32> to vector<4x256xf32>
    %26 = arith.mulf %24, %25 : vector<4x256xf32>
    %27 = arith.addf %21, %26 : vector<4x256xf32>
    %28 = vector.extract_strided_slice %8 {offsets = [0, 3], sizes = [4, 1], strides = [1, 1]} : vector<4x4xf32> to vector<4x1xf32>
    %29 = vector.extract_strided_slice %6 {offsets = [3, 0], sizes = [1, 256], strides = [1, 1]} : vector<4x256xf32> to vector<1x256xf32>
    %30 = vector.broadcast %28 : vector<4x1xf32> to vector<4x256xf32>
    %31 = vector.broadcast %29 : vector<1x256xf32> to vector<4x256xf32>
    %32 = arith.mulf %30, %31 : vector<4x256xf32>
    %33 = arith.addf %27, %32 : vector<4x256xf32>
    %34 = vector.broadcast %10 : vector<4x1xf32> to vector<4x256xf32>
    %35 = arith.addf %33, %34 : vector<4x256xf32>
    %cst = arith.constant 0.000000e+00 : f32
    %36 = vector.broadcast %cst : f32 to vector<4x256xf32>
    %37 = arith.maximumf %35, %36 : vector<4x256xf32>
    %38 = vector.extract_strided_slice %7 {offsets = [0, 0], sizes = [16, 1], strides = [1, 1]} : vector<16x8xf32> to vector<16x1xf32>
    %39 = vector.extract_strided_slice %4 {offsets = [0, 0], sizes = [1, 64], strides = [1, 1]} : vector<8x64xf32> to vector<1x64xf32>
    %40 = vector.broadcast %38 : vector<16x1xf32> to vector<16x64xf32>
    %41 = vector.broadcast %39 : vector<1x64xf32> to vector<16x64xf32>
    %42 = arith.mulf %40, %41 : vector<16x64xf32>
    %43 = vector.extract_strided_slice %7 {offsets = [0, 1], sizes = [16, 1], strides = [1, 1]} : vector<16x8xf32> to vector<16x1xf32>
    %44 = vector.extract_strided_slice %4 {offsets = [1, 0], sizes = [1, 64], strides = [1, 1]} : vector<8x64xf32> to vector<1x64xf32>
    %45 = vector.broadcast %43 : vector<16x1xf32> to vector<16x64xf32>
    %46 = vector.broadcast %44 : vector<1x64xf32> to vector<16x64xf32>
    %47 = arith.mulf %45, %46 : vector<16x64xf32>
    %48 = arith.addf %42, %47 : vector<16x64xf32>
    %49 = vector.extract_strided_slice %7 {offsets = [0, 2], sizes = [16, 1], strides = [1, 1]} : vector<16x8xf32> to vector<16x1xf32>
    %50 = vector.extract_strided_slice %4 {offsets = [2, 0], sizes = [1, 64], strides = [1, 1]} : vector<8x64xf32> to vector<1x64xf32>
    %51 = vector.broadcast %49 : vector<16x1xf32> to vector<16x64xf32>
    %52 = vector.broadcast %50 : vector<1x64xf32> to vector<16x64xf32>
    %53 = arith.mulf %51, %52 : vector<16x64xf32>
    %54 = arith.addf %48, %53 : vector<16x64xf32>
    %55 = vector.extract_strided_slice %7 {offsets = [0, 3], sizes = [16, 1], strides = [1, 1]} : vector<16x8xf32> to vector<16x1xf32>
    %56 = vector.extract_strided_slice %4 {offsets = [3, 0], sizes = [1, 64], strides = [1, 1]} : vector<8x64xf32> to vector<1x64xf32>
    %57 = vector.broadcast %55 : vector<16x1xf32> to vector<16x64xf32>
    %58 = vector.broadcast %56 : vector<1x64xf32> to vector<16x64xf32>
    %59 = arith.mulf %57, %58 : vector<16x64xf32>
    %60 = arith.addf %54, %59 : vector<16x64xf32>
    %61 = vector.extract_strided_slice %7 {offsets = [0, 4], sizes = [16, 1], strides = [1, 1]} : vector<16x8xf32> to vector<16x1xf32>
    %62 = vector.extract_strided_slice %4 {offsets = [4, 0], sizes = [1, 64], strides = [1, 1]} : vector<8x64xf32> to vector<1x64xf32>
    %63 = vector.broadcast %61 : vector<16x1xf32> to vector<16x64xf32>
    %64 = vector.broadcast %62 : vector<1x64xf32> to vector<16x64xf32>
    %65 = arith.mulf %63, %64 : vector<16x64xf32>
    %66 = arith.addf %60, %65 : vector<16x64xf32>
    %67 = vector.extract_strided_slice %7 {offsets = [0, 5], sizes = [16, 1], strides = [1, 1]} : vector<16x8xf32> to vector<16x1xf32>
    %68 = vector.extract_strided_slice %4 {offsets = [5, 0], sizes = [1, 64], strides = [1, 1]} : vector<8x64xf32> to vector<1x64xf32>
    %69 = vector.broadcast %67 : vector<16x1xf32> to vector<16x64xf32>
    %70 = vector.broadcast %68 : vector<1x64xf32> to vector<16x64xf32>
    %71 = arith.mulf %69, %70 : vector<16x64xf32>
    %72 = arith.addf %66, %71 : vector<16x64xf32>
    %73 = vector.extract_strided_slice %7 {offsets = [0, 6], sizes = [16, 1], strides = [1, 1]} : vector<16x8xf32> to vector<16x1xf32>
    %74 = vector.extract_strided_slice %4 {offsets = [6, 0], sizes = [1, 64], strides = [1, 1]} : vector<8x64xf32> to vector<1x64xf32>
    %75 = vector.broadcast %73 : vector<16x1xf32> to vector<16x64xf32>
    %76 = vector.broadcast %74 : vector<1x64xf32> to vector<16x64xf32>
    %77 = arith.mulf %75, %76 : vector<16x64xf32>
    %78 = arith.addf %72, %77 : vector<16x64xf32>
    %79 = vector.extract_strided_slice %7 {offsets = [0, 7], sizes = [16, 1], strides = [1, 1]} : vector<16x8xf32> to vector<16x1xf32>
    %80 = vector.extract_strided_slice %4 {offsets = [7, 0], sizes = [1, 64], strides = [1, 1]} : vector<8x64xf32> to vector<1x64xf32>
    %81 = vector.broadcast %79 : vector<16x1xf32> to vector<16x64xf32>
    %82 = vector.broadcast %80 : vector<1x64xf32> to vector<16x64xf32>
    %83 = arith.mulf %81, %82 : vector<16x64xf32>
    %84 = arith.addf %78, %83 : vector<16x64xf32>
    %85 = tpu.iota {dimensions = array<i32: 1>} : vector<8x16xi32>
    %86 = tpu.iota {dimensions = array<i32: 0>} : vector<8x16xi32>
    %c2_i32 = arith.constant 2 : i32
    %87 = vector.broadcast %c2_i32 : i32 to vector<8x16xi32>
    %88 = arith.muli %87, %86 : vector<8x16xi32>
    %89 = arith.cmpi eq, %85, %88 : vector<8x16xi32>
    %90 = arith.extui %89 : vector<8x16xi1> to vector<8x16xi32>
    %91 = arith.sitofp %90 : vector<8x16xi32> to vector<8x16xf32>
    %c2_i32_14 = arith.constant 2 : i32
    %92 = vector.broadcast %c2_i32_14 : i32 to vector<8x16xi32>
    %93 = arith.muli %92, %86 : vector<8x16xi32>
    %c1_i32 = arith.constant 1 : i32
    %94 = vector.broadcast %c1_i32 : i32 to vector<8x16xi32>
    %95 = arith.addi %93, %94 : vector<8x16xi32>
    %96 = arith.cmpi eq, %85, %95 : vector<8x16xi32>
    %97 = arith.extui %96 : vector<8x16xi1> to vector<8x16xi32>
    %98 = arith.sitofp %97 : vector<8x16xi32> to vector<8x16xf32>
    %99 = vector.extract_strided_slice %84 {offsets = [0, 0], sizes = [16, 8], strides = [1, 1]} : vector<16x64xf32> to vector<16x8xf32>
    %100 = vector.extract_strided_slice %99 {offsets = [0, 0], sizes = [4, 8], strides = [1, 1]} : vector<16x8xf32> to vector<4x8xf32>
    %101 = vector.extract_strided_slice %99 {offsets = [4, 0], sizes = [4, 8], strides = [1, 1]} : vector<16x8xf32> to vector<4x8xf32>
    %cst_15 = arith.constant dense<0.000000e+00> : vector<4x16xf32>
    %102 = tpu.matmul %100, %91, %cst_15 {dimension_numbers = #tpu.dot_dimension_numbers<[1], [0], [0], [1], [0, 0, 1, 1], [], []>} : vector<4x8xf32>, vector<8x16xf32>, vector<4x16xf32> -> vector<4x16xf32>
    %cst_16 = arith.constant dense<0.000000e+00> : vector<4x16xf32>
    %103 = tpu.matmul %101, %98, %cst_16 {dimension_numbers = #tpu.dot_dimension_numbers<[1], [0], [0], [1], [0, 0, 1, 1], [], []>} : vector<4x8xf32>, vector<8x16xf32>, vector<4x16xf32> -> vector<4x16xf32>
    %104 = arith.addf %102, %103 : vector<4x16xf32>
    %105 = vector.broadcast %9 : vector<4x1xf32> to vector<4x16xf32>
    %106 = arith.addf %104, %105 : vector<4x16xf32>
    %cst_17 = arith.constant 0.000000e+00 : f32
    %107 = vector.broadcast %cst_17 : f32 to vector<4x16xf32>
    %108 = arith.maximumf %106, %107 : vector<4x16xf32>
    %109 = vector.extract_strided_slice %99 {offsets = [8, 0], sizes = [4, 8], strides = [1, 1]} : vector<16x8xf32> to vector<4x8xf32>
    %110 = vector.extract_strided_slice %99 {offsets = [12, 0], sizes = [4, 8], strides = [1, 1]} : vector<16x8xf32> to vector<4x8xf32>
    %cst_18 = arith.constant dense<0.000000e+00> : vector<4x16xf32>
    %111 = tpu.matmul %109, %91, %cst_18 {dimension_numbers = #tpu.dot_dimension_numbers<[1], [0], [0], [1], [0, 0, 1, 1], [], []>} : vector<4x8xf32>, vector<8x16xf32>, vector<4x16xf32> -> vector<4x16xf32>
    %cst_19 = arith.constant dense<0.000000e+00> : vector<4x16xf32>
    %112 = tpu.matmul %110, %98, %cst_19 {dimension_numbers = #tpu.dot_dimension_numbers<[1], [0], [0], [1], [0, 0, 1, 1], [], []>} : vector<4x8xf32>, vector<8x16xf32>, vector<4x16xf32> -> vector<4x16xf32>
    %113 = arith.addf %111, %112 : vector<4x16xf32>
    %114 = vector.broadcast %9 : vector<4x1xf32> to vector<4x16xf32>
    %115 = arith.addf %113, %114 : vector<4x16xf32>
    %cst_20 = arith.constant 0.000000e+00 : f32
    %116 = vector.broadcast %cst_20 : f32 to vector<4x16xf32>
    %117 = arith.maximumf %115, %116 : vector<4x16xf32>
    %118 = vector.extract_strided_slice %84 {offsets = [0, 8], sizes = [16, 8], strides = [1, 1]} : vector<16x64xf32> to vector<16x8xf32>
    %119 = vector.extract_strided_slice %118 {offsets = [0, 0], sizes = [4, 8], strides = [1, 1]} : vector<16x8xf32> to vector<4x8xf32>
    %120 = vector.extract_strided_slice %118 {offsets = [4, 0], sizes = [4, 8], strides = [1, 1]} : vector<16x8xf32> to vector<4x8xf32>
    %cst_21 = arith.constant dense<0.000000e+00> : vector<4x16xf32>
    %121 = tpu.matmul %119, %91, %cst_21 {dimension_numbers = #tpu.dot_dimension_numbers<[1], [0], [0], [1], [0, 0, 1, 1], [], []>} : vector<4x8xf32>, vector<8x16xf32>, vector<4x16xf32> -> vector<4x16xf32>
    %cst_22 = arith.constant dense<0.000000e+00> : vector<4x16xf32>
    %122 = tpu.matmul %120, %98, %cst_22 {dimension_numbers = #tpu.dot_dimension_numbers<[1], [0], [0], [1], [0, 0, 1, 1], [], []>} : vector<4x8xf32>, vector<8x16xf32>, vector<4x16xf32> -> vector<4x16xf32>
    %123 = arith.addf %121, %122 : vector<4x16xf32>
    %124 = vector.broadcast %9 : vector<4x1xf32> to vector<4x16xf32>
    %125 = arith.addf %123, %124 : vector<4x16xf32>
    %cst_23 = arith.constant 0.000000e+00 : f32
    %126 = vector.broadcast %cst_23 : f32 to vector<4x16xf32>
    %127 = arith.maximumf %125, %126 : vector<4x16xf32>
    %128 = vector.extract_strided_slice %118 {offsets = [8, 0], sizes = [4, 8], strides = [1, 1]} : vector<16x8xf32> to vector<4x8xf32>
    %129 = vector.extract_strided_slice %118 {offsets = [12, 0], sizes = [4, 8], strides = [1, 1]} : vector<16x8xf32> to vector<4x8xf32>
    %cst_24 = arith.constant dense<0.000000e+00> : vector<4x16xf32>
    %130 = tpu.matmul %128, %91, %cst_24 {dimension_numbers = #tpu.dot_dimension_numbers<[1], [0], [0], [1], [0, 0, 1, 1], [], []>} : vector<4x8xf32>, vector<8x16xf32>, vector<4x16xf32> -> vector<4x16xf32>
    %cst_25 = arith.constant dense<0.000000e+00> : vector<4x16xf32>
    %131 = tpu.matmul %129, %98, %cst_25 {dimension_numbers = #tpu.dot_dimension_numbers<[1], [0], [0], [1], [0, 0, 1, 1], [], []>} : vector<4x8xf32>, vector<8x16xf32>, vector<4x16xf32> -> vector<4x16xf32>
    %132 = arith.addf %130, %131 : vector<4x16xf32>
    %133 = vector.broadcast %9 : vector<4x1xf32> to vector<4x16xf32>
    %134 = arith.addf %132, %133 : vector<4x16xf32>
    %cst_26 = arith.constant 0.000000e+00 : f32
    %135 = vector.broadcast %cst_26 : f32 to vector<4x16xf32>
    %136 = arith.maximumf %134, %135 : vector<4x16xf32>
    %137 = vector.extract_strided_slice %84 {offsets = [0, 16], sizes = [16, 8], strides = [1, 1]} : vector<16x64xf32> to vector<16x8xf32>
    %138 = vector.extract_strided_slice %137 {offsets = [0, 0], sizes = [4, 8], strides = [1, 1]} : vector<16x8xf32> to vector<4x8xf32>
    %139 = vector.extract_strided_slice %137 {offsets = [4, 0], sizes = [4, 8], strides = [1, 1]} : vector<16x8xf32> to vector<4x8xf32>
    %cst_27 = arith.constant dense<0.000000e+00> : vector<4x16xf32>
    %140 = tpu.matmul %138, %91, %cst_27 {dimension_numbers = #tpu.dot_dimension_numbers<[1], [0], [0], [1], [0, 0, 1, 1], [], []>} : vector<4x8xf32>, vector<8x16xf32>, vector<4x16xf32> -> vector<4x16xf32>
    %cst_28 = arith.constant dense<0.000000e+00> : vector<4x16xf32>
    %141 = tpu.matmul %139, %98, %cst_28 {dimension_numbers = #tpu.dot_dimension_numbers<[1], [0], [0], [1], [0, 0, 1, 1], [], []>} : vector<4x8xf32>, vector<8x16xf32>, vector<4x16xf32> -> vector<4x16xf32>
    %142 = arith.addf %140, %141 : vector<4x16xf32>
    %143 = vector.broadcast %9 : vector<4x1xf32> to vector<4x16xf32>
    %144 = arith.addf %142, %143 : vector<4x16xf32>
    %cst_29 = arith.constant 0.000000e+00 : f32
    %145 = vector.broadcast %cst_29 : f32 to vector<4x16xf32>
    %146 = arith.maximumf %144, %145 : vector<4x16xf32>
    %147 = vector.extract_strided_slice %137 {offsets = [8, 0], sizes = [4, 8], strides = [1, 1]} : vector<16x8xf32> to vector<4x8xf32>
    %148 = vector.extract_strided_slice %137 {offsets = [12, 0], sizes = [4, 8], strides = [1, 1]} : vector<16x8xf32> to vector<4x8xf32>
    %cst_30 = arith.constant dense<0.000000e+00> : vector<4x16xf32>
    %149 = tpu.matmul %147, %91, %cst_30 {dimension_numbers = #tpu.dot_dimension_numbers<[1], [0], [0], [1], [0, 0, 1, 1], [], []>} : vector<4x8xf32>, vector<8x16xf32>, vector<4x16xf32> -> vector<4x16xf32>
    %cst_31 = arith.constant dense<0.000000e+00> : vector<4x16xf32>
    %150 = tpu.matmul %148, %98, %cst_31 {dimension_numbers = #tpu.dot_dimension_numbers<[1], [0], [0], [1], [0, 0, 1, 1], [], []>} : vector<4x8xf32>, vector<8x16xf32>, vector<4x16xf32> -> vector<4x16xf32>
    %151 = arith.addf %149, %150 : vector<4x16xf32>
    %152 = vector.broadcast %9 : vector<4x1xf32> to vector<4x16xf32>
    %153 = arith.addf %151, %152 : vector<4x16xf32>
    %cst_32 = arith.constant 0.000000e+00 : f32
    %154 = vector.broadcast %cst_32 : f32 to vector<4x16xf32>
    %155 = arith.maximumf %153, %154 : vector<4x16xf32>
    %156 = vector.extract_strided_slice %84 {offsets = [0, 24], sizes = [16, 8], strides = [1, 1]} : vector<16x64xf32> to vector<16x8xf32>
    %157 = vector.extract_strided_slice %156 {offsets = [0, 0], sizes = [4, 8], strides = [1, 1]} : vector<16x8xf32> to vector<4x8xf32>
    %158 = vector.extract_strided_slice %156 {offsets = [4, 0], sizes = [4, 8], strides = [1, 1]} : vector<16x8xf32> to vector<4x8xf32>
    %cst_33 = arith.constant dense<0.000000e+00> : vector<4x16xf32>
    %159 = tpu.matmul %157, %91, %cst_33 {dimension_numbers = #tpu.dot_dimension_numbers<[1], [0], [0], [1], [0, 0, 1, 1], [], []>} : vector<4x8xf32>, vector<8x16xf32>, vector<4x16xf32> -> vector<4x16xf32>
    %cst_34 = arith.constant dense<0.000000e+00> : vector<4x16xf32>
    %160 = tpu.matmul %158, %98, %cst_34 {dimension_numbers = #tpu.dot_dimension_numbers<[1], [0], [0], [1], [0, 0, 1, 1], [], []>} : vector<4x8xf32>, vector<8x16xf32>, vector<4x16xf32> -> vector<4x16xf32>
    %161 = arith.addf %159, %160 : vector<4x16xf32>
    %162 = vector.broadcast %9 : vector<4x1xf32> to vector<4x16xf32>
    %163 = arith.addf %161, %162 : vector<4x16xf32>
    %cst_35 = arith.constant 0.000000e+00 : f32
    %164 = vector.broadcast %cst_35 : f32 to vector<4x16xf32>
    %165 = arith.maximumf %163, %164 : vector<4x16xf32>
    %166 = vector.extract_strided_slice %156 {offsets = [8, 0], sizes = [4, 8], strides = [1, 1]} : vector<16x8xf32> to vector<4x8xf32>
    %167 = vector.extract_strided_slice %156 {offsets = [12, 0], sizes = [4, 8], strides = [1, 1]} : vector<16x8xf32> to vector<4x8xf32>
    %cst_36 = arith.constant dense<0.000000e+00> : vector<4x16xf32>
    %168 = tpu.matmul %166, %91, %cst_36 {dimension_numbers = #tpu.dot_dimension_numbers<[1], [0], [0], [1], [0, 0, 1, 1], [], []>} : vector<4x8xf32>, vector<8x16xf32>, vector<4x16xf32> -> vector<4x16xf32>
    %cst_37 = arith.constant dense<0.000000e+00> : vector<4x16xf32>
    %169 = tpu.matmul %167, %98, %cst_37 {dimension_numbers = #tpu.dot_dimension_numbers<[1], [0], [0], [1], [0, 0, 1, 1], [], []>} : vector<4x8xf32>, vector<8x16xf32>, vector<4x16xf32> -> vector<4x16xf32>
    %170 = arith.addf %168, %169 : vector<4x16xf32>
    %171 = vector.broadcast %9 : vector<4x1xf32> to vector<4x16xf32>
    %172 = arith.addf %170, %171 : vector<4x16xf32>
    %cst_38 = arith.constant 0.000000e+00 : f32
    %173 = vector.broadcast %cst_38 : f32 to vector<4x16xf32>
    %174 = arith.maximumf %172, %173 : vector<4x16xf32>
    %175 = vector.extract_strided_slice %84 {offsets = [0, 32], sizes = [16, 8], strides = [1, 1]} : vector<16x64xf32> to vector<16x8xf32>
    %176 = vector.extract_strided_slice %175 {offsets = [0, 0], sizes = [4, 8], strides = [1, 1]} : vector<16x8xf32> to vector<4x8xf32>
    %177 = vector.extract_strided_slice %175 {offsets = [4, 0], sizes = [4, 8], strides = [1, 1]} : vector<16x8xf32> to vector<4x8xf32>
    %cst_39 = arith.constant dense<0.000000e+00> : vector<4x16xf32>
    %178 = tpu.matmul %176, %91, %cst_39 {dimension_numbers = #tpu.dot_dimension_numbers<[1], [0], [0], [1], [0, 0, 1, 1], [], []>} : vector<4x8xf32>, vector<8x16xf32>, vector<4x16xf32> -> vector<4x16xf32>
    %cst_40 = arith.constant dense<0.000000e+00> : vector<4x16xf32>
    %179 = tpu.matmul %177, %98, %cst_40 {dimension_numbers = #tpu.dot_dimension_numbers<[1], [0], [0], [1], [0, 0, 1, 1], [], []>} : vector<4x8xf32>, vector<8x16xf32>, vector<4x16xf32> -> vector<4x16xf32>
    %180 = arith.addf %178, %179 : vector<4x16xf32>
    %181 = vector.broadcast %9 : vector<4x1xf32> to vector<4x16xf32>
    %182 = arith.addf %180, %181 : vector<4x16xf32>
    %cst_41 = arith.constant 0.000000e+00 : f32
    %183 = vector.broadcast %cst_41 : f32 to vector<4x16xf32>
    %184 = arith.maximumf %182, %183 : vector<4x16xf32>
    %185 = vector.extract_strided_slice %175 {offsets = [8, 0], sizes = [4, 8], strides = [1, 1]} : vector<16x8xf32> to vector<4x8xf32>
    %186 = vector.extract_strided_slice %175 {offsets = [12, 0], sizes = [4, 8], strides = [1, 1]} : vector<16x8xf32> to vector<4x8xf32>
    %cst_42 = arith.constant dense<0.000000e+00> : vector<4x16xf32>
    %187 = tpu.matmul %185, %91, %cst_42 {dimension_numbers = #tpu.dot_dimension_numbers<[1], [0], [0], [1], [0, 0, 1, 1], [], []>} : vector<4x8xf32>, vector<8x16xf32>, vector<4x16xf32> -> vector<4x16xf32>
    %cst_43 = arith.constant dense<0.000000e+00> : vector<4x16xf32>
    %188 = tpu.matmul %186, %98, %cst_43 {dimension_numbers = #tpu.dot_dimension_numbers<[1], [0], [0], [1], [0, 0, 1, 1], [], []>} : vector<4x8xf32>, vector<8x16xf32>, vector<4x16xf32> -> vector<4x16xf32>
    %189 = arith.addf %187, %188 : vector<4x16xf32>
    %190 = vector.broadcast %9 : vector<4x1xf32> to vector<4x16xf32>
    %191 = arith.addf %189, %190 : vector<4x16xf32>
    %cst_44 = arith.constant 0.000000e+00 : f32
    %192 = vector.broadcast %cst_44 : f32 to vector<4x16xf32>
    %193 = arith.maximumf %191, %192 : vector<4x16xf32>
    %194 = vector.extract_strided_slice %84 {offsets = [0, 40], sizes = [16, 8], strides = [1, 1]} : vector<16x64xf32> to vector<16x8xf32>
    %195 = vector.extract_strided_slice %194 {offsets = [0, 0], sizes = [4, 8], strides = [1, 1]} : vector<16x8xf32> to vector<4x8xf32>
    %196 = vector.extract_strided_slice %194 {offsets = [4, 0], sizes = [4, 8], strides = [1, 1]} : vector<16x8xf32> to vector<4x8xf32>
    %cst_45 = arith.constant dense<0.000000e+00> : vector<4x16xf32>
    %197 = tpu.matmul %195, %91, %cst_45 {dimension_numbers = #tpu.dot_dimension_numbers<[1], [0], [0], [1], [0, 0, 1, 1], [], []>} : vector<4x8xf32>, vector<8x16xf32>, vector<4x16xf32> -> vector<4x16xf32>
    %cst_46 = arith.constant dense<0.000000e+00> : vector<4x16xf32>
    %198 = tpu.matmul %196, %98, %cst_46 {dimension_numbers = #tpu.dot_dimension_numbers<[1], [0], [0], [1], [0, 0, 1, 1], [], []>} : vector<4x8xf32>, vector<8x16xf32>, vector<4x16xf32> -> vector<4x16xf32>
    %199 = arith.addf %197, %198 : vector<4x16xf32>
    %200 = vector.broadcast %9 : vector<4x1xf32> to vector<4x16xf32>
    %201 = arith.addf %199, %200 : vector<4x16xf32>
    %cst_47 = arith.constant 0.000000e+00 : f32
    %202 = vector.broadcast %cst_47 : f32 to vector<4x16xf32>
    %203 = arith.maximumf %201, %202 : vector<4x16xf32>
    %204 = vector.extract_strided_slice %194 {offsets = [8, 0], sizes = [4, 8], strides = [1, 1]} : vector<16x8xf32> to vector<4x8xf32>
    %205 = vector.extract_strided_slice %194 {offsets = [12, 0], sizes = [4, 8], strides = [1, 1]} : vector<16x8xf32> to vector<4x8xf32>
    %cst_48 = arith.constant dense<0.000000e+00> : vector<4x16xf32>
    %206 = tpu.matmul %204, %91, %cst_48 {dimension_numbers = #tpu.dot_dimension_numbers<[1], [0], [0], [1], [0, 0, 1, 1], [], []>} : vector<4x8xf32>, vector<8x16xf32>, vector<4x16xf32> -> vector<4x16xf32>
    %cst_49 = arith.constant dense<0.000000e+00> : vector<4x16xf32>
    %207 = tpu.matmul %205, %98, %cst_49 {dimension_numbers = #tpu.dot_dimension_numbers<[1], [0], [0], [1], [0, 0, 1, 1], [], []>} : vector<4x8xf32>, vector<8x16xf32>, vector<4x16xf32> -> vector<4x16xf32>
    %208 = arith.addf %206, %207 : vector<4x16xf32>
    %209 = vector.broadcast %9 : vector<4x1xf32> to vector<4x16xf32>
    %210 = arith.addf %208, %209 : vector<4x16xf32>
    %cst_50 = arith.constant 0.000000e+00 : f32
    %211 = vector.broadcast %cst_50 : f32 to vector<4x16xf32>
    %212 = arith.maximumf %210, %211 : vector<4x16xf32>
    %213 = vector.extract_strided_slice %84 {offsets = [0, 48], sizes = [16, 8], strides = [1, 1]} : vector<16x64xf32> to vector<16x8xf32>
    %214 = vector.extract_strided_slice %213 {offsets = [0, 0], sizes = [4, 8], strides = [1, 1]} : vector<16x8xf32> to vector<4x8xf32>
    %215 = vector.extract_strided_slice %213 {offsets = [4, 0], sizes = [4, 8], strides = [1, 1]} : vector<16x8xf32> to vector<4x8xf32>
    %cst_51 = arith.constant dense<0.000000e+00> : vector<4x16xf32>
    %216 = tpu.matmul %214, %91, %cst_51 {dimension_numbers = #tpu.dot_dimension_numbers<[1], [0], [0], [1], [0, 0, 1, 1], [], []>} : vector<4x8xf32>, vector<8x16xf32>, vector<4x16xf32> -> vector<4x16xf32>
    %cst_52 = arith.constant dense<0.000000e+00> : vector<4x16xf32>
    %217 = tpu.matmul %215, %98, %cst_52 {dimension_numbers = #tpu.dot_dimension_numbers<[1], [0], [0], [1], [0, 0, 1, 1], [], []>} : vector<4x8xf32>, vector<8x16xf32>, vector<4x16xf32> -> vector<4x16xf32>
    %218 = arith.addf %216, %217 : vector<4x16xf32>
    %219 = vector.broadcast %9 : vector<4x1xf32> to vector<4x16xf32>
    %220 = arith.addf %218, %219 : vector<4x16xf32>
    %cst_53 = arith.constant 0.000000e+00 : f32
    %221 = vector.broadcast %cst_53 : f32 to vector<4x16xf32>
    %222 = arith.maximumf %220, %221 : vector<4x16xf32>
    %223 = vector.extract_strided_slice %213 {offsets = [8, 0], sizes = [4, 8], strides = [1, 1]} : vector<16x8xf32> to vector<4x8xf32>
    %224 = vector.extract_strided_slice %213 {offsets = [12, 0], sizes = [4, 8], strides = [1, 1]} : vector<16x8xf32> to vector<4x8xf32>
    %cst_54 = arith.constant dense<0.000000e+00> : vector<4x16xf32>
    %225 = tpu.matmul %223, %91, %cst_54 {dimension_numbers = #tpu.dot_dimension_numbers<[1], [0], [0], [1], [0, 0, 1, 1], [], []>} : vector<4x8xf32>, vector<8x16xf32>, vector<4x16xf32> -> vector<4x16xf32>
    %cst_55 = arith.constant dense<0.000000e+00> : vector<4x16xf32>
    %226 = tpu.matmul %224, %98, %cst_55 {dimension_numbers = #tpu.dot_dimension_numbers<[1], [0], [0], [1], [0, 0, 1, 1], [], []>} : vector<4x8xf32>, vector<8x16xf32>, vector<4x16xf32> -> vector<4x16xf32>
    %227 = arith.addf %225, %226 : vector<4x16xf32>
    %228 = vector.broadcast %9 : vector<4x1xf32> to vector<4x16xf32>
    %229 = arith.addf %227, %228 : vector<4x16xf32>
    %cst_56 = arith.constant 0.000000e+00 : f32
    %230 = vector.broadcast %cst_56 : f32 to vector<4x16xf32>
    %231 = arith.maximumf %229, %230 : vector<4x16xf32>
    %232 = vector.extract_strided_slice %84 {offsets = [0, 56], sizes = [16, 8], strides = [1, 1]} : vector<16x64xf32> to vector<16x8xf32>
    %233 = vector.extract_strided_slice %232 {offsets = [0, 0], sizes = [4, 8], strides = [1, 1]} : vector<16x8xf32> to vector<4x8xf32>
    %234 = vector.extract_strided_slice %232 {offsets = [4, 0], sizes = [4, 8], strides = [1, 1]} : vector<16x8xf32> to vector<4x8xf32>
    %cst_57 = arith.constant dense<0.000000e+00> : vector<4x16xf32>
    %235 = tpu.matmul %233, %91, %cst_57 {dimension_numbers = #tpu.dot_dimension_numbers<[1], [0], [0], [1], [0, 0, 1, 1], [], []>} : vector<4x8xf32>, vector<8x16xf32>, vector<4x16xf32> -> vector<4x16xf32>
    %cst_58 = arith.constant dense<0.000000e+00> : vector<4x16xf32>
    %236 = tpu.matmul %234, %98, %cst_58 {dimension_numbers = #tpu.dot_dimension_numbers<[1], [0], [0], [1], [0, 0, 1, 1], [], []>} : vector<4x8xf32>, vector<8x16xf32>, vector<4x16xf32> -> vector<4x16xf32>
    %237 = arith.addf %235, %236 : vector<4x16xf32>
    %238 = vector.broadcast %9 : vector<4x1xf32> to vector<4x16xf32>
    %239 = arith.addf %237, %238 : vector<4x16xf32>
    %cst_59 = arith.constant 0.000000e+00 : f32
    %240 = vector.broadcast %cst_59 : f32 to vector<4x16xf32>
    %241 = arith.maximumf %239, %240 : vector<4x16xf32>
    %242 = vector.extract_strided_slice %232 {offsets = [8, 0], sizes = [4, 8], strides = [1, 1]} : vector<16x8xf32> to vector<4x8xf32>
    %243 = vector.extract_strided_slice %232 {offsets = [12, 0], sizes = [4, 8], strides = [1, 1]} : vector<16x8xf32> to vector<4x8xf32>
    %cst_60 = arith.constant dense<0.000000e+00> : vector<4x16xf32>
    %244 = tpu.matmul %242, %91, %cst_60 {dimension_numbers = #tpu.dot_dimension_numbers<[1], [0], [0], [1], [0, 0, 1, 1], [], []>} : vector<4x8xf32>, vector<8x16xf32>, vector<4x16xf32> -> vector<4x16xf32>
    %cst_61 = arith.constant dense<0.000000e+00> : vector<4x16xf32>
    %245 = tpu.matmul %243, %98, %cst_61 {dimension_numbers = #tpu.dot_dimension_numbers<[1], [0], [0], [1], [0, 0, 1, 1], [], []>} : vector<4x8xf32>, vector<8x16xf32>, vector<4x16xf32> -> vector<4x16xf32>
    %246 = arith.addf %244, %245 : vector<4x16xf32>
    %247 = vector.broadcast %9 : vector<4x1xf32> to vector<4x16xf32>
    %248 = arith.addf %246, %247 : vector<4x16xf32>
    %cst_62 = arith.constant 0.000000e+00 : f32
    %249 = vector.broadcast %cst_62 : f32 to vector<4x16xf32>
    %250 = arith.maximumf %248, %249 : vector<4x16xf32>
    %251 = tpu.concatenate %108, %117, %127, %136, %146, %155, %165, %174, %184, %193, %203, %212, %222, %231, %241, %250 in 1 : vector<4x16xf32>, vector<4x16xf32>, vector<4x16xf32>, vector<4x16xf32>, vector<4x16xf32>, vector<4x16xf32>, vector<4x16xf32>, vector<4x16xf32>, vector<4x16xf32>, vector<4x16xf32>, vector<4x16xf32>, vector<4x16xf32>, vector<4x16xf32>, vector<4x16xf32>, vector<4x16xf32>, vector<4x16xf32> -> vector<4x256xf32>
    %252 = tpu.concatenate %251, %37 in 0 : vector<4x256xf32>, vector<4x256xf32> -> vector<8x256xf32>
    %c0_63 = arith.constant 0 : index
    %c0_64 = arith.constant 0 : index
    %c0_65 = arith.constant 0 : index
    %253 = vector.load %arg8[%c0_63, %c0_64, %c0_65] : memref<1x8x256xf32, #tpu.memory_space<vmem>>, vector<1x8x256xf32>
    %254 = vector.shape_cast %253 : vector<1x8x256xf32> to vector<8x256xf32>
    %255 = vector.shape_cast %252 : vector<8x256xf32> to vector<1x8x256xf32>
    tpu.vector_store %arg8[%c0_63, %c0_64, %c0_65], %255 {strides = array<i32>} : memref<1x8x256xf32, #tpu.memory_space<vmem>>, vector<1x8x256xf32>,
    %cst_66 = arith.constant dense<0.000000e+00> : vector<8xf32>
    %256 = vector.multi_reduction <add>, %252, %cst_66 [1] : vector<8x256xf32> to vector<8xf32>
    %257 = vector.shape_cast %256 : vector<8xf32> to vector<8x1xf32>
    %258 = arith.mulf %252, %252 : vector<8x256xf32>
    %cst_67 = arith.constant dense<0.000000e+00> : vector<8xf32>
    %259 = vector.multi_reduction <add>, %258, %cst_67 [1] : vector<8x256xf32> to vector<8xf32>
    %260 = vector.shape_cast %259 : vector<8xf32> to vector<8x1xf32>
    %261 = tpu.concatenate %257, %260 in 1 : vector<8x1xf32>, vector<8x1xf32> -> vector<8x2xf32>
    %c0_68 = arith.constant 0 : index
    %c0_69 = arith.constant 0 : index
    %c0_70 = arith.constant 0 : index
    %262 = vector.load %arg9[%c0_68, %c0_69, %c0_70] : memref<1x8x2xf32, #tpu.memory_space<vmem>>, vector<1x8x2xf32>
    %263 = vector.shape_cast %262 : vector<1x8x2xf32> to vector<8x2xf32>
    %264 = arith.addf %263, %261 : vector<8x2xf32>
    %c0_71 = arith.constant 0 : index
    %c0_72 = arith.constant 0 : index
    %c0_73 = arith.constant 0 : index
    %265 = vector.load %arg9[%c0_71, %c0_72, %c0_73] : memref<1x8x2xf32, #tpu.memory_space<vmem>>, vector<1x8x2xf32>
    %266 = vector.shape_cast %265 : vector<1x8x2xf32> to vector<8x2xf32>
    %267 = vector.shape_cast %264 : vector<8x2xf32> to vector<1x8x2xf32>
    tpu.vector_store %arg9[%c0_71, %c0_72, %c0_73], %267 {strides = array<i32>} : memref<1x8x2xf32, #tpu.memory_space<vmem>>, vector<1x8x2xf32>,
    return
  }
  func.func @transform_0(%arg0: i32, %arg1: i32) -> (i32, i32, i32) {
    %c0_i32 = arith.constant 0 : i32
    %c0_i32_0 = arith.constant 0 : i32
    return %arg0, %c0_i32, %arg1 : i32, i32, i32
  }
  func.func @transform_1(%arg0: i32, %arg1: i32) -> (i32, i32, i32) {
    %c0_i32 = arith.constant 0 : i32
    %c0_i32_0 = arith.constant 0 : i32
    return %arg0, %c0_i32, %arg1 : i32, i32, i32
  }
  func.func @transform_2(%arg0: i32, %arg1: i32) -> (i32, i32) {
    %c0_i32 = arith.constant 0 : i32
    %c0_i32_0 = arith.constant 0 : i32
    %c0_i32_1 = arith.constant 0 : i32
    return %c0_i32, %c0_i32_0 : i32, i32
  }
  func.func @transform_3(%arg0: i32, %arg1: i32) -> (i32, i32) {
    %c0_i32 = arith.constant 0 : i32
    %c0_i32_0 = arith.constant 0 : i32
    %c0_i32_1 = arith.constant 0 : i32
    return %c0_i32, %c0_i32_0 : i32, i32
  }
  func.func @transform_4(%arg0: i32, %arg1: i32) -> (i32, i32) {
    %c0_i32 = arith.constant 0 : i32
    %c0_i32_0 = arith.constant 0 : i32
    %c0_i32_1 = arith.constant 0 : i32
    return %c0_i32, %c0_i32_0 : i32, i32
  }
  func.func @transform_5(%arg0: i32, %arg1: i32) -> (i32, i32) {
    %c0_i32 = arith.constant 0 : i32
    %c0_i32_0 = arith.constant 0 : i32
    %c0_i32_1 = arith.constant 0 : i32
    return %c0_i32, %c0_i32_0 : i32, i32
  }
  func.func @transform_6(%arg0: i32, %arg1: i32) -> (i32, i32, i32) {
    %c0_i32 = arith.constant 0 : i32
    %c0_i32_0 = arith.constant 0 : i32
    return %arg0, %c0_i32, %arg1 : i32, i32, i32
  }
  func.func @transform_7(%arg0: i32, %arg1: i32) -> (i32, i32, i32) {
    %c0_i32 = arith.constant 0 : i32
    %c0_i32_0 = arith.constant 0 : i32
    %c0_i32_1 = arith.constant 0 : i32
    return %arg0, %c0_i32, %c0_i32_0 : i32, i32, i32
  }
}

</mosaic_0001>

<llo_original>
// kernel: tpu_custom_call.1
$region0: #{tpu_custom_call.1}
  #allocation0 [shape = 'u32[]', space=smem, size = 0x4, offset = 0x4, fixed_abs, tag = 'smem constant byte address 0x4 - core index']
  #allocation1 [shape = 'u32[144,128]{1,0:T(1,128)}', space=vmem, size = 0x12000, scoped, tag = 'internal scratch']
  %s0 = inlined_call_operand.vmem [shape: f32[2,8,64], index: 0, kind: input, shape index: {}]
  %s1 = inlined_call_operand.vmem [shape: f32[2,4,256], index: 1, kind: input, shape index: {}]
  %s2 = inlined_call_operand.vmem [shape: f32[16,8], index: 2, kind: input, shape index: {}]
  %s3 = inlined_call_operand.vmem [shape: f32[4,1], index: 3, kind: input, shape index: {}]
  %s4 = inlined_call_operand.vmem [shape: f32[4,4], index: 4, kind: input, shape index: {}]
  %s5 = inlined_call_operand.vmem [shape: f32[4,1], index: 5, kind: input, shape index: {}]
  %s6 = inlined_call_operand.hbm [shape: f32[2,8,256], index: 6, kind: output, shape index: {0}]
  %s7 = inlined_call_operand.vmem [shape: f32[2,8,2], index: 7, kind: output, shape index: {1}]
  %8 = xla_tuple %s6, %s7
  %s9 = sld [smem:[#allocation0]]
  $region69: #{tpu_custom_call.1} parent=0
    _
  %s11 = ssub.s32 1, %s9
  %s12 = scalar_select 0, %s11, %s9
  $region1: #{tpu_custom_call.1} parent=0
    #allocation2 [shape = 'u8[16384]{0}', space=vmem, size = 0x4000, scoped, tag = 'output window, operand 0']
    #allocation3 [shape = 's32[2]{0}', space=sflag, size = 0x8, scoped, tag = 'scoped memory for tpu_custom_call.1']
    %13 = vsyncpa [#allocation3], 0
    %s14 = scalar_lea.sflag [#allocation3], 1
    %15 = vsyncpa %s14, 0
    loop: start=0, step=1, limit=4
    $region2: #{tpu_custom_call.1} parent=1 // loop_pre_header
      _
    $region3: #{tpu_custom_call.1} parent=1 // loop_header
      %s17 = sphi 0, %s21
      %p18 = scmp.ge.s32.totalorder %s17, 4
      %s24 = sphi 0, %s36
      %s25 = sphi 0, %s32
      %s26 = sphi 0, %s24
      %s27 = sphi 0, %s25
      %s28 = sphi 0, %s26
      %s29 = sphi 0, %s27
      %s41 = sphi 0, %s43
      %s44 = sphi 0, %s41
      %s45 = sphi 0, %s44
      %s61 = sphi 0, %s45
      %s69 = sphi 0, %s71
      %s72 = sphi 0, %s69
      %s73 = sphi 0, %s72
      %s89 = sphi 0, %s73
      %s93 = sphi 0, %s93
      %s95 = sphi 0, %s93
      %s96 = sphi 0, %s95
      %s110 = sphi 0, %s96
      %s114 = sphi 0, %s114
      %s116 = sphi 0, %s114
      %s117 = sphi 0, %s116
      %s131 = sphi 0, %s117
      %s135 = sphi 0, %s135
      %s137 = sphi 0, %s135
      %s138 = sphi 0, %s137
      %s152 = sphi 0, %s138
      %s156 = sphi 0, %s156
      %s158 = sphi 0, %s156
      %s159 = sphi 0, %s158
      %s173 = sphi 0, %s159
      %s181 = sphi 0, %s183
      %s184 = sphi 0, %s181
      %s185 = sphi 0, %s184
      %s201 = sphi 0, %s185
      %s207 = sphi 0, %s209
      %s210 = sphi 0, %s207
      %s211 = sphi 0, %s210
      %s227 = sphi 0, %s211
    $region4: #{tpu_custom_call.1} parent=1 // loop_header_branch
      %20 = sbr.rel (%p18) target = $region8
    $region5: #{tpu_custom_call.1} parent=1 // loop_body
      %s22 = ssub.s32 %s17, 1
      %s23 = ssub.s32 %s17, 2
      %s30 = sadd.s32 1, %s25
      %p31 = scmp.ge.s32.totalorder %s30, 1
      %s32 = scalar_select %p31, 0, %s30
      %s33 = sadd.s32 1, %s24
      %s34 = scalar_select %p31, %s33, %s24
      %p35 = scmp.ge.s32.totalorder %s34, 2
      %s36 = scalar_select %p35, 0, %s34
      %s37 = ssub.s32 %s24, %s36
      %s38 = ssub.s32 %s25, %s32
      %s39 = sor.u32 %s37, %s38
      %p40 = scmp.eq.s32.totalorder %s39, 0
      %s42 = sadd.s32 %s41, 1
      %s43 = scalar_select %p40, %s41, %s42
      %p46 = pneg %p40
      %p47 = scmp.eq.s32.totalorder %s17, 1
      %p48 = por %p46, %p47
      %p49 = scmp.ne.s32.totalorder %s41, %s44
      %p50 = scmp.eq.s32.totalorder %s17, 0
      %p51 = por %p49, %p50
      %p52 = scmp.ne.s32.totalorder %s41, %s44
      %p53 = scmp.eq.s32.totalorder %s22, 1
      %p54 = por %p52, %p53
      %p55 = scmp.ne.s32.totalorder %s44, %s45
      %p56 = scmp.eq.s32.totalorder %s22, 0
      %p57 = por %p55, %p56
      %p58 = scmp.ne.s32.totalorder %s44, %s45
      %p59 = scmp.eq.s32.totalorder %s23, 1
      %p60 = por %p58, %p59
      %p62 = scmp.ne.s32.totalorder %s45, %s61
      %p63 = scmp.eq.s32.totalorder %s23, 0
      %p64 = por %p62, %p63
      %s65 = ssub.s32 %s24, %s36
      %s66 = ssub.s32 %s25, %s32
      %s67 = sor.u32 %s65, %s66
      %p68 = scmp.eq.s32.totalorder %s67, 0
      %s70 = sadd.s32 %s69, 1
      %s71 = scalar_select %p68, %s69, %s70
      %p74 = pneg %p68
      %p75 = scmp.eq.s32.totalorder %s17, 1
      %p76 = por %p74, %p75
      %p77 = scmp.ne.s32.totalorder %s69, %s72
      %p78 = scmp.eq.s32.totalorder %s17, 0
      %p79 = por %p77, %p78
      %p80 = scmp.ne.s32.totalorder %s69, %s72
      %p81 = scmp.eq.s32.totalorder %s22, 1
      %p82 = por %p80, %p81
      %p83 = scmp.ne.s32.totalorder %s72, %s73
      %p84 = scmp.eq.s32.totalorder %s22, 0
      %p85 = por %p83, %p84
      %p86 = scmp.ne.s32.totalorder %s72, %s73
      %p87 = scmp.eq.s32.totalorder %s23, 1
      %p88 = por %p86, %p87
      %p90 = scmp.ne.s32.totalorder %s73, %s89
      %p91 = scmp.eq.s32.totalorder %s23, 0
      %p92 = por %p90, %p91
      %s94 = sadd.s32 %s93, 1
      %p97 = scmp.eq.s32.totalorder %s17, 1
      %p98 = scmp.ne.s32.totalorder %s93, %s95
      %p99 = scmp.eq.s32.totalorder %s17, 0
      %p100 = por %p98, %p99
      %p101 = scmp.ne.s32.totalorder %s93, %s95
      %p102 = scmp.eq.s32.totalorder %s22, 1
      %p103 = por %p101, %p102
      %p104 = scmp.ne.s32.totalorder %s95, %s96
      %p105 = scmp.eq.s32.totalorder %s22, 0
      %p106 = por %p104, %p105
      %p107 = scmp.ne.s32.totalorder %s95, %s96
      %p108 = scmp.eq.s32.totalorder %s23, 1
      %p109 = por %p107, %p108
      %p111 = scmp.ne.s32.totalorder %s96, %s110
      %p112 = scmp.eq.s32.totalorder %s23, 0
      %p113 = por %p111, %p112
      %s115 = sadd.s32 %s114, 1
      %p118 = scmp.eq.s32.totalorder %s17, 1
      %p119 = scmp.ne.s32.totalorder %s114, %s116
      %p120 = scmp.eq.s32.totalorder %s17, 0
      %p121 = por %p119, %p120
      %p122 = scmp.ne.s32.totalorder %s114, %s116
      %p123 = scmp.eq.s32.totalorder %s22, 1
      %p124 = por %p122, %p123
      %p125 = scmp.ne.s32.totalorder %s116, %s117
      %p126 = scmp.eq.s32.totalorder %s22, 0
      %p127 = por %p125, %p126
      %p128 = scmp.ne.s32.totalorder %s116, %s117
      %p129 = scmp.eq.s32.totalorder %s23, 1
      %p130 = por %p128, %p129
      %p132 = scmp.ne.s32.totalorder %s117, %s131
      %p133 = scmp.eq.s32.totalorder %s23, 0
      %p134 = por %p132, %p133
      %s136 = sadd.s32 %s135, 1
      %p139 = scmp.eq.s32.totalorder %s17, 1
      %p140 = scmp.ne.s32.totalorder %s135, %s137
      %p141 = scmp.eq.s32.totalorder %s17, 0
      %p142 = por %p140, %p141
      %p143 = scmp.ne.s32.totalorder %s135, %s137
      %p144 = scmp.eq.s32.totalorder %s22, 1
      %p145 = por %p143, %p144
      %p146 = scmp.ne.s32.totalorder %s137, %s138
      %p147 = scmp.eq.s32.totalorder %s22, 0
      %p148 = por %p146, %p147
      %p149 = scmp.ne.s32.totalorder %s137, %s138
      %p150 = scmp.eq.s32.totalorder %s23, 1
      %p151 = por %p149, %p150
      %p153 = scmp.ne.s32.totalorder %s138, %s152
      %p154 = scmp.eq.s32.totalorder %s23, 0
      %p155 = por %p153, %p154
      %s157 = sadd.s32 %s156, 1
      %p160 = scmp.eq.s32.totalorder %s17, 1
      %p161 = scmp.ne.s32.totalorder %s156, %s158
      %p162 = scmp.eq.s32.totalorder %s17, 0
      %p163 = por %p161, %p162
      %p164 = scmp.ne.s32.totalorder %s156, %s158
      %p165 = scmp.eq.s32.totalorder %s22, 1
      %p166 = por %p164, %p165
      %p167 = scmp.ne.s32.totalorder %s158, %s159
      %p168 = scmp.eq.s32.totalorder %s22, 0
      %p169 = por %p167, %p168
      %p170 = scmp.ne.s32.totalorder %s158, %s159
      %p171 = scmp.eq.s32.totalorder %s23, 1
      %p172 = por %p170, %p171
      %p174 = scmp.ne.s32.totalorder %s159, %s173
      %p175 = scmp.eq.s32.totalorder %s23, 0
      %p176 = por %p174, %p175
      %s177 = ssub.s32 %s24, %s36
      %s178 = ssub.s32 %s25, %s32
      %s179 = sor.u32 %s177, %s178
      %p180 = scmp.eq.s32.totalorder %s179, 0
      %s182 = sadd.s32 %s181, 1
      %s183 = scalar_select %p180, %s181, %s182
      %p186 = pneg %p180
      %p187 = scmp.eq.s32.totalorder %s17, 1
      %p188 = por %p186, %p187
      %p189 = scmp.ne.s32.totalorder %s181, %s184
      %p190 = scmp.eq.s32.totalorder %s17, 0
      %p191 = por %p189, %p190
      %p192 = scmp.ne.s32.totalorder %s181, %s184
      %p193 = scmp.eq.s32.totalorder %s22, 1
      %p194 = por %p192, %p193
      %p195 = scmp.ne.s32.totalorder %s184, %s185
      %p196 = scmp.eq.s32.totalorder %s22, 0
      %p197 = por %p195, %p196
      %p198 = scmp.ne.s32.totalorder %s184, %s185
      %p199 = scmp.eq.s32.totalorder %s23, 1
      %p200 = por %p198, %p199
      %p202 = scmp.ne.s32.totalorder %s185, %s201
      %p203 = scmp.eq.s32.totalorder %s23, 0
      %p204 = por %p202, %p203
      %s205 = ssub.s32 %s24, %s36
      %p206 = scmp.eq.s32.totalorder %s205, 0
      %s208 = sadd.s32 %s207, 1
      %s209 = scalar_select %p206, %s207, %s208
      %p212 = pneg %p206
      %p213 = scmp.eq.s32.totalorder %s17, 1
      %p214 = por %p212, %p213
      %p215 = scmp.ne.s32.totalorder %s207, %s210
      %p216 = scmp.eq.s32.totalorder %s17, 0
      %p217 = por %p215, %p216
      %p218 = scmp.ne.s32.totalorder %s207, %s210
      %p219 = scmp.eq.s32.totalorder %s22, 1
      %p220 = por %p218, %p219
      %p221 = scmp.ne.s32.totalorder %s210, %s211
      %p222 = scmp.eq.s32.totalorder %s22, 0
      %p223 = por %p221, %p222
      %p224 = scmp.ne.s32.totalorder %s210, %s211
      %p225 = scmp.eq.s32.totalorder %s23, 1
      %p226 = por %p224, %p225
      %p228 = scmp.ne.s32.totalorder %s211, %s227
      %p229 = scmp.eq.s32.totalorder %s23, 0
      %p230 = por %p228, %p229
      %p231 = scmp.le.s32.totalorder 1, %s17
      %p232 = scmp.lt.s32.totalorder %s17, 3
      %p233 = pnand %p231, %p232
      %p234 = pneg %p233
      // Predicated region
      $region9: #{tpu_custom_call.1} parent=5 // pred_check
        _
      $region10: #{tpu_custom_call.1} parent=5 // pred_check_branch
        %236 = sbr.rel (%p233) target = $region12
      $region11: #{tpu_custom_call.1} parent=5 // pred_region
        %s237 = ssub.s32 %s17, 1
        // Predicated region
        $region13: #{tpu_custom_call.1} parent=11 // pred_check
          %p238 = pneg %p106
        $region14: #{tpu_custom_call.1} parent=11 // pred_check_branch
          %240 = sbr.rel (%p238) target = $region16
        $region15: #{tpu_custom_call.1} parent=11 // pred_region
          _
        $region16: #{tpu_custom_call.1} parent=11 // pred_fallthru
          _
        // Predicated region
        $region17: #{tpu_custom_call.1} parent=11 // pred_check
          %p241 = pneg %p127
        $region18: #{tpu_custom_call.1} parent=11 // pred_check_branch
          %243 = sbr.rel (%p241) target = $region20
        $region19: #{tpu_custom_call.1} parent=11 // pred_region
          _
        $region20: #{tpu_custom_call.1} parent=11 // pred_fallthru
          _
        // Predicated region
        $region21: #{tpu_custom_call.1} parent=11 // pred_check
          %p244 = pneg %p148
        $region22: #{tpu_custom_call.1} parent=11 // pred_check_branch
          %246 = sbr.rel (%p244) target = $region24
        $region23: #{tpu_custom_call.1} parent=11 // pred_region
          _
        $region24: #{tpu_custom_call.1} parent=11 // pred_fallthru
          _
        // Predicated region
        $region25: #{tpu_custom_call.1} parent=11 // pred_check
          %p247 = pneg %p169
        $region26: #{tpu_custom_call.1} parent=11 // pred_check_branch
          %249 = sbr.rel (%p247) target = $region28
        $region27: #{tpu_custom_call.1} parent=11 // pred_region
          _
        $region28: #{tpu_custom_call.1} parent=11 // pred_fallthru
          _
      $region12: #{tpu_custom_call.1} parent=5 // pred_fallthru
        _
      %p250 = scmp.lt.s32.totalorder %s17, 2
      // Predicated region
      $region29: #{tpu_custom_call.1} parent=5 // pred_check
        %p251 = pneg %p250
      $region30: #{tpu_custom_call.1} parent=5 // pred_check_branch
        %253 = sbr.rel (%p251) target = $region32
      $region31: #{tpu_custom_call.1} parent=5 // pred_region
        // Predicated region
        $region33: #{tpu_custom_call.1} parent=31 // pred_check
          %p254 = pneg %p51
        $region34: #{tpu_custom_call.1} parent=31 // pred_check_branch
          %256 = sbr.rel (%p254) target = $region36
        $region35: #{tpu_custom_call.1} parent=31 // pred_region
          %p257 = scmp.lt.s32.totalorder %s24, 1
          %s258 = scalar_select %p257, %s24, 1
          %p259 = scmp.lt.s32.totalorder %s25, 0
          %s260 = scalar_select %p259, %s25, 0
          %s261 = sadd.s32 %s260, %s258
          %s262 = smul.addr %s261, 8
          %s263 = scalar_lea.vmem %s0, %s262
        $region36: #{tpu_custom_call.1} parent=31 // pred_fallthru
          _
        // Predicated region
        $region37: #{tpu_custom_call.1} parent=31 // pred_check
          %p264 = pneg %p79
        $region38: #{tpu_custom_call.1} parent=31 // pred_check_branch
          %266 = sbr.rel (%p264) target = $region40
        $region39: #{tpu_custom_call.1} parent=31 // pred_region
          %s267 = smul.u32 2, %s25
          %p268 = scmp.lt.s32.totalorder %s24, 1
          %s269 = scalar_select %p268, %s24, 1
          %p270 = scmp.lt.s32.totalorder %s267, 1
          %s271 = scalar_select %p270, %s267, 1
          %s272 = smul.addr %s269, 2
          %s273 = sadd.s32 %s271, %s272
          %s274 = smul.addr %s273, 4
          %s275 = scalar_lea.vmem %s1, %s274
          %s276 = smul.u32 2, %s25
        $region40: #{tpu_custom_call.1} parent=31 // pred_fallthru
          _
      $region32: #{tpu_custom_call.1} parent=5 // pred_fallthru
        _
      %p277 = scmp.le.s32.totalorder 1, %s17
      %p278 = scmp.lt.s32.totalorder %s17, 3
      %p279 = pnand %p277, %p278
      %p280 = pneg %p279
      // Predicated region
      $region41: #{tpu_custom_call.1} parent=5 // pred_check
        _
      $region42: #{tpu_custom_call.1} parent=5 // pred_check_branch
        %282 = sbr.rel (%p279) target = $region44
      $region43: #{tpu_custom_call.1} parent=5 // pred_region
        %s283 = ssub.s32 %s17, 1
        %p284 = scmp.lt.s32.totalorder %s26, 1
        %s285 = scalar_select %p284, %s26, 1
        %p286 = scmp.lt.s32.totalorder %s27, 0
        %s287 = scalar_select %p286, %s27, 0
        %s288 = sadd.s32 %s287, %s285
        %s289 = smul.addr %s288, 8
        %s290 = scalar_lea.vmem %s0, %s289
        %p291 = pneg %p57
        %p292 = pneg %p54
        %s293 = smul.u32 2, %s27
        %p294 = scmp.lt.s32.totalorder %s26, 1
        %s295 = scalar_select %p294, %s26, 1
        %p296 = scmp.lt.s32.totalorder %s293, 1
        %s297 = scalar_select %p296, %s293, 1
        %s298 = smul.addr %s295, 2
        %s299 = sadd.s32 %s297, %s298
        %s300 = smul.addr %s299, 4
        %s301 = scalar_lea.vmem %s1, %s300
        %p302 = pneg %p85
        %p303 = pneg %p82
        %p304 = pneg %p106
        %p305 = pneg %p103
        %p306 = pneg %p127
        %p307 = pneg %p124
        %p308 = pneg %p148
        %p309 = pneg %p145
        %p310 = pneg %p169
        %p311 = pneg %p166
        %p312 = pneg %p197
        %p313 = pneg %p194
        %s314 = sand.u32 %s184, 1
        %s315 = scalar_lea.sflag [#allocation3], %s314
        %s316 = sand.u32 %s184, 1
        %s317 = smul.addr %s316, 16
        %s318 = scalar_lea.vmem [#allocation2], %s317
        %p319 = pneg %p223
        %p320 = pneg %p220
        %p321 = scmp.lt.s32.totalorder %s26, 1
        %s322 = scalar_select %p321, %s26, 1
        %s323 = smul.addr %s322, 8
        %s324 = scalar_lea.vmem %s7, %s323
        %p325 = scmp.lt.s32.totalorder %s26, 1
        %s326 = scalar_select %p325, %s26, 1
        %p327 = scmp.lt.s32.totalorder %s27, 0
        %s328 = scalar_select %p327, %s27, 0
        %s329 = sadd.s32 %s328, %s326
        %s330 = smul.addr %s329, 8
        %s331 = scalar_lea.vmem %s0, %s330
        %s332 = smul.u32 2, %s27
        %p333 = scmp.lt.s32.totalorder %s26, 1
        %s334 = scalar_select %p333, %s26, 1
        %p335 = scmp.lt.s32.totalorder %s332, 1
        %s336 = scalar_select %p335, %s332, 1
        %s337 = smul.addr %s334, 2
        %s338 = sadd.s32 %s336, %s337
        %s339 = smul.addr %s338, 4
        %s340 = scalar_lea.vmem %s1, %s339
        %s341 = smul.u32 2, %s27
        %s342 = smul.u32 2, %s27
        %p343 = scmp.lt.s32.totalorder %s26, 1
        %s344 = scalar_select %p343, %s26, 1
        %s345 = smul.addr %s344, 8
        %s346 = scalar_lea.vmem %s7, %s345
        %p347 = scmp.eq.s32.totalorder %s27, 0
        // Predicated region
        $region45: #{tpu_custom_call.1} parent=43 // pred_check
          %p348 = pneg %p347
        $region46: #{tpu_custom_call.1} parent=43 // pred_check_branch
          %350 = sbr.rel (%p348) target = $region48
        $region47: #{tpu_custom_call.1} parent=43 // pred_region
          %vm351 = vcmask 15360
          %352 = vst.msk [vmem:[%s346] sm:$0xff] %vm351, 0.0
        $region48: #{tpu_custom_call.1} parent=43 // pred_fallthru
          _
        %v353 = vld [vmem:[%s331] sm:$0xff]
        %v354 = vld [vmem:[%s340] sm:$0xff]
        %v355 = vld [vmem:[%s2] sm:$0xff]
        %v356 = vld [vmem:[%s2 + $0x8] sm:$0xff]
        %v357 = vld [vmem:[%s4] sm:$0xf]
        %v358 = vld [vmem:[%s3] sm:$0xf]
        %v359 = vld [vmem:[%s5] sm:$0xf]
        %361 = vset.pattern.permute.xlu0 0
        %362 = vperm.xlu0 %361, %v357
        %v363 = vpop.permute.xlu0 %362
        %v366 = vlaneseq
        %v367 = vshrl.u32 %v366, 7
        %v368 = vsub.s32 0, %v367
        %v369 = vrot.slane %v354, %v368
        %v370 = vlaneseq
        %v371 = vshrl.u32 %v370, 7
        %v372 = vsub.s32 4, %v371
        %v373 = vrot.slane %v354, %v372
        %v376 = vlaneseq
        %v377 = vshrl.u32 %v376, 7
        %v378 = vsub.s32 0, %v377
        %v379 = vrot.slane %v369, %v378
        %v380 = vlaneseq
        %v381 = vshrl.u32 %v380, 7
        %v382 = vsub.s32 0, %v381
        %v383 = vrot.slane %v373, %v382
        %v384 = vmul.f32 %v363, %v379
        %v385 = vmul.f32 %v363, %v383
        %386 = vset.pattern.permute.xlu0 1
        %387 = vperm.xlu0 %386, %v357
        %v388 = vpop.permute.xlu0 %387
        %v390 = vlaneseq
        %v391 = vshrl.u32 %v390, 7
        %v392 = vsub.s32 1, %v391
        %v393 = vrot.slane %v354, %v392
        %v394 = vlaneseq
        %v395 = vshrl.u32 %v394, 7
        %v396 = vsub.s32 5, %v395
        %v397 = vrot.slane %v354, %v396
        %v400 = vlaneseq
        %v401 = vshrl.u32 %v400, 7
        %v402 = vsub.s32 1, %v401
        %v403 = vrot.slane %v393, %v402
        %v404 = vlaneseq
        %v405 = vshrl.u32 %v404, 7
        %v406 = vsub.s32 1, %v405
        %v407 = vrot.slane %v397, %v406
        %v408 = vmul.f32 %v388, %v403
        %v409 = vmul.f32 %v388, %v407
        %v410 = vadd.f32 %v384, %v408
        %v411 = vadd.f32 %v385, %v409
        %412 = vset.pattern.permute.xlu0 2
        %413 = vperm.xlu0 %412, %v357
        %v414 = vpop.permute.xlu0 %413
        %v416 = vlaneseq
        %v417 = vshrl.u32 %v416, 7
        %v418 = vsub.s32 2, %v417
        %v419 = vrot.slane %v354, %v418
        %v420 = vlaneseq
        %v421 = vshrl.u32 %v420, 7
        %v422 = vsub.s32 6, %v421
        %v423 = vrot.slane %v354, %v422
        %v426 = vlaneseq
        %v427 = vshrl.u32 %v426, 7
        %v428 = vsub.s32 2, %v427
        %v429 = vrot.slane %v419, %v428
        %v430 = vlaneseq
        %v431 = vshrl.u32 %v430, 7
        %v432 = vsub.s32 2, %v431
        %v433 = vrot.slane %v423, %v432
        %v434 = vmul.f32 %v414, %v429
        %v435 = vmul.f32 %v414, %v433
        %v436 = vadd.f32 %v410, %v434
        %v437 = vadd.f32 %v411, %v435
        %438 = vset.pattern.permute.xlu0 3
        %439 = vperm.xlu0 %438, %v357
        %v440 = vpop.permute.xlu0 %439
        %v442 = vlaneseq
        %v443 = vshrl.u32 %v442, 7
        %v444 = vsub.s32 3, %v443
        %v445 = vrot.slane %v354, %v444
        %v446 = vlaneseq
        %v447 = vshrl.u32 %v446, 7
        %v448 = vsub.s32 7, %v447
        %v449 = vrot.slane %v354, %v448
        %v452 = vlaneseq
        %v453 = vshrl.u32 %v452, 7
        %v454 = vsub.s32 3, %v453
        %v455 = vrot.slane %v445, %v454
        %v456 = vlaneseq
        %v457 = vshrl.u32 %v456, 7
        %v458 = vsub.s32 3, %v457
        %v459 = vrot.slane %v449, %v458
        %v460 = vmul.f32 %v440, %v455
        %v461 = vmul.f32 %v440, %v459
        %v462 = vadd.f32 %v436, %v460
        %v463 = vadd.f32 %v437, %v461
        %465 = vset.pattern.permute.xlu0 0
        %466 = vperm.xlu0 %465, %v359
        %v467 = vpop.permute.xlu0 %466
        %v469 = vadd.f32 %v462, %v467
        %v470 = vadd.f32 %v463, %v467
        %v471 = vmax.f32 %v469, 0.0
        %v472 = vmax.f32 %v470, 0.0
        %474 = vset.pattern.permute.xlu0 0
        %475 = vperm.xlu0 %474, %v355
        %v476 = vpop.permute.xlu0 %475
        %479 = vset.pattern.permute.xlu0 0
        %480 = vperm.xlu0 %479, %v356
        %v481 = vpop.permute.xlu0 %480
        %v483 = vlaneseq
        %v484 = vshrl.u32 %v483, 7
        %v485 = vsub.s32 0, %v484
        %v486 = vrot.slane %v353, %v485
        %v487 = vmul.f32 %v476, %v486
        %v488 = vmul.f32 %v481, %v486
        %489 = vset.pattern.permute.xlu0 1
        %490 = vperm.xlu0 %489, %v355
        %v491 = vpop.permute.xlu0 %490
        %493 = vset.pattern.permute.xlu0 1
        %494 = vperm.xlu0 %493, %v356
        %v495 = vpop.permute.xlu0 %494
        %v497 = vlaneseq
        %v498 = vshrl.u32 %v497, 7
        %v499 = vsub.s32 1, %v498
        %v500 = vrot.slane %v353, %v499
        %v501 = vmul.f32 %v491, %v500
        %v502 = vmul.f32 %v495, %v500
        %v503 = vadd.f32 %v487, %v501
        %v504 = vadd.f32 %v488, %v502
        %505 = vset.pattern.permute.xlu0 2
        %506 = vperm.xlu0 %505, %v355
        %v507 = vpop.permute.xlu0 %506
        %509 = vset.pattern.permute.xlu0 2
        %510 = vperm.xlu0 %509, %v356
        %v511 = vpop.permute.xlu0 %510
        %v513 = vlaneseq
        %v514 = vshrl.u32 %v513, 7
        %v515 = vsub.s32 2, %v514
        %v516 = vrot.slane %v353, %v515
        %v517 = vmul.f32 %v507, %v516
        %v518 = vmul.f32 %v511, %v516
        %v519 = vadd.f32 %v503, %v517
        %v520 = vadd.f32 %v504, %v518
        %521 = vset.pattern.permute.xlu0 3
        %522 = vperm.xlu0 %521, %v355
        %v523 = vpop.permute.xlu0 %522
        %525 = vset.pattern.permute.xlu0 3
        %526 = vperm.xlu0 %525, %v356
        %v527 = vpop.permute.xlu0 %526
        %v529 = vlaneseq
        %v530 = vshrl.u32 %v529, 7
        %v531 = vsub.s32 3, %v530
        %v532 = vrot.slane %v353, %v531
        %v533 = vmul.f32 %v523, %v532
        %v534 = vmul.f32 %v527, %v532
        %v535 = vadd.f32 %v519, %v533
        %v536 = vadd.f32 %v520, %v534
        %537 = vset.pattern.permute.xlu0 4
        %538 = vperm.xlu0 %537, %v355
        %v539 = vpop.permute.xlu0 %538
        %541 = vset.pattern.permute.xlu0 4
        %542 = vperm.xlu0 %541, %v356
        %v543 = vpop.permute.xlu0 %542
        %v545 = vlaneseq
        %v546 = vshrl.u32 %v545, 7
        %v547 = vsub.s32 4, %v546
        %v548 = vrot.slane %v353, %v547
        %v549 = vmul.f32 %v539, %v548
        %v550 = vmul.f32 %v543, %v548
        %v551 = vadd.f32 %v535, %v549
        %v552 = vadd.f32 %v536, %v550
        %553 = vset.pattern.permute.xlu0 5
        %554 = vperm.xlu0 %553, %v355
        %v555 = vpop.permute.xlu0 %554
        %557 = vset.pattern.permute.xlu0 5
        %558 = vperm.xlu0 %557, %v356
        %v559 = vpop.permute.xlu0 %558
        %v561 = vlaneseq
        %v562 = vshrl.u32 %v561, 7
        %v563 = vsub.s32 5, %v562
        %v564 = vrot.slane %v353, %v563
        %v565 = vmul.f32 %v555, %v564
        %v566 = vmul.f32 %v559, %v564
        %v567 = vadd.f32 %v551, %v565
        %v568 = vadd.f32 %v552, %v566
        %569 = vset.pattern.permute.xlu0 6
        %570 = vperm.xlu0 %569, %v355
        %v571 = vpop.permute.xlu0 %570
        %573 = vset.pattern.permute.xlu0 6
        %574 = vperm.xlu0 %573, %v356
        %v575 = vpop.permute.xlu0 %574
        %v577 = vlaneseq
        %v578 = vshrl.u32 %v577, 7
        %v579 = vsub.s32 6, %v578
        %v580 = vrot.slane %v353, %v579
        %v581 = vmul.f32 %v571, %v580
        %v582 = vmul.f32 %v575, %v580
        %v583 = vadd.f32 %v567, %v581
        %v584 = vadd.f32 %v568, %v582
        %585 = vset.pattern.permute.xlu0 7
        %586 = vperm.xlu0 %585, %v355
        %v587 = vpop.permute.xlu0 %586
        %589 = vset.pattern.permute.xlu0 7
        %590 = vperm.xlu0 %589, %v356
        %v591 = vpop.permute.xlu0 %590
        %v593 = vlaneseq
        %v594 = vshrl.u32 %v593, 7
        %v595 = vsub.s32 7, %v594
        %v596 = vrot.slane %v353, %v595
        %v597 = vmul.f32 %v587, %v596
        %v598 = vmul.f32 %v591, %v596
        %v599 = vadd.f32 %v583, %v597
        %v600 = vadd.f32 %v584, %v598
        %v601 = vlaneseq
        %v602 = vand.u32 %v601, 127
        %v603 = vlaneseq
        %v604 = vshrl.u32 %v603, 7
        %v605 = vmul.u32 %v604, 2
        %vm606 = vcmp.eq.s32.totalorder %v602, %v605
        %v607 = vsel %vm606, 1, 0
        %v608 = vcvt.s32.f32 %v607
        %v609 = vadd.s32 %v605, 1
        %vm610 = vcmp.eq.s32.totalorder %v602, %v609
        %v611 = vsel %vm610, 1, 0
        %v612 = vcvt.s32.f32 %v611
        %v614 = vrot.slane %v599, 4
        %vm615 = vcmask 64512
        %v616 = vsel %vm615, %v614, 0
        %618 = vmatprep.subr.mxu0 0.0
        %619 = vmatpush1.msra.mxu0 0.0
        %620 = vmatprep.subr.mxu0 0.0
        %621 = vmatpush1.msra.mxu0 0.0
        %622 = vmatprep.subr.mxu0 0.0
        %623 = vmatpush1.msra.mxu0 0.0
        %624 = vmatprep.subr.mxu0 0.0
        %625 = vmatpush1.msra.mxu0 0.0
        %626 = vmatprep.subr.mxu0 0.0
        %627 = vmatpush1.msra.mxu0 0.0
        %628 = vmatprep.subr.mxu0 0.0
        %629 = vmatpush1.msra.mxu0 0.0
        %630 = vmatprep.subr.mxu0 0.0
        %631 = vmatpush1.msra.mxu0 0.0
        %632 = vmatprep.subr.mxu0 0.0
        %633 = vmatpush1.msra.mxu0 0.0
        %634 = vmatprep.subr.mxu0 0.0
        %635 = vmatpush1.msra.mxu0 0.0
        %636 = vmatprep.subr.mxu0 0.0
        %637 = vmatpush1.msra.mxu0 0.0
        %638 = vmatprep.subr.mxu0 0.0
        %639 = vmatpush1.msra.mxu0 0.0
        %640 = vmatprep.subr.mxu0 0.0
        %641 = vmatpush1.msra.mxu0 0.0
        %642 = vmatprep.subr.mxu0 0.0
        %643 = vmatpush1.msra.mxu0 0.0
        %644 = vmatprep.subr.mxu0 0.0
        %645 = vmatpush1.msra.mxu0 0.0
        %646 = vmatprep.subr.mxu0 0.0
        %647 = vmatpush1.msra.mxu0 0.0
        %648 = vmatprep.subr.mxu0 0.0
        %649 = vmatpush1.msra.mxu0 %v612
        %650 = vmatprep.subr.mxu0 0.0
        %651 = vmatpush2.msra.mxu0 0.0
        %652 = vmatprep.subr.mxu0 0.0
        %653 = vmatpush2.msra.mxu0 0.0
        %654 = vmatprep.subr.mxu0 0.0
        %655 = vmatpush2.msra.mxu0 0.0
        %656 = vmatprep.subr.mxu0 0.0
        %657 = vmatpush2.msra.mxu0 0.0
        %658 = vmatprep.subr.mxu0 0.0
        %659 = vmatpush2.msra.mxu0 0.0
        %660 = vmatprep.subr.mxu0 0.0
        %661 = vmatpush2.msra.mxu0 0.0
        %662 = vmatprep.subr.mxu0 0.0
        %663 = vmatpush2.msra.mxu0 0.0
        %664 = vmatprep.subr.mxu0 0.0
        %665 = vmatpush2.msra.mxu0 0.0
        %666 = vmatprep.subr.mxu0 0.0
        %667 = vmatpush2.msra.mxu0 0.0
        %668 = vmatprep.subr.mxu0 0.0
        %669 = vmatpush2.msra.mxu0 0.0
        %670 = vmatprep.subr.mxu0 0.0
        %671 = vmatpush2.msra.mxu0 0.0
        %672 = vmatprep.subr.mxu0 0.0
        %673 = vmatpush2.msra.mxu0 0.0
        %674 = vmatprep.subr.mxu0 0.0
        %675 = vmatpush2.msra.mxu0 0.0
        %676 = vmatprep.subr.mxu0 0.0
        %677 = vmatpush2.msra.mxu0 0.0
        %678 = vmatprep.subr.mxu0 0.0
        %679 = vmatpush2.msra.mxu0 0.0
        %680 = vmatprep.subr.mxu0 0.0
        %681 = vmatpush2.msra.mxu0 0.0
        %682 = vmatprep.mubr.f32.mxu0 0.0
        %683 = vmatmul.mubr.f32.gmra.mxu0 %v616
        %v684 = vpop.f32.mrf.mxu0
        %v685 = vadd.f32 0.0, %v684
        %v686 = vpop.f32.mrf.mxu0
        %687 = vdwg.mxu0
        %v688 = vsel %vm615, %v599, 0
        %690 = vmatprep.subr.mxu0 0.0
        %691 = vmatpush1.msra.mxu0 0.0
        %692 = vmatprep.subr.mxu0 0.0
        %693 = vmatpush1.msra.mxu0 0.0
        %694 = vmatprep.subr.mxu0 0.0
        %695 = vmatpush1.msra.mxu0 0.0
        %696 = vmatprep.subr.mxu0 0.0
        %697 = vmatpush1.msra.mxu0 0.0
        %698 = vmatprep.subr.mxu0 0.0
        %699 = vmatpush1.msra.mxu0 0.0
        %700 = vmatprep.subr.mxu0 0.0
        %701 = vmatpush1.msra.mxu0 0.0
        %702 = vmatprep.subr.mxu0 0.0
        %703 = vmatpush1.msra.mxu0 0.0
        %704 = vmatprep.subr.mxu0 0.0
        %705 = vmatpush1.msra.mxu0 0.0
        %706 = vmatprep.subr.mxu0 0.0
        %707 = vmatpush1.msra.mxu0 0.0
        %708 = vmatprep.subr.mxu0 0.0
        %709 = vmatpush1.msra.mxu0 0.0
        %710 = vmatprep.subr.mxu0 0.0
        %711 = vmatpush1.msra.mxu0 0.0
        %712 = vmatprep.subr.mxu0 0.0
        %713 = vmatpush1.msra.mxu0 0.0
        %714 = vmatprep.subr.mxu0 0.0
        %715 = vmatpush1.msra.mxu0 0.0
        %716 = vmatprep.subr.mxu0 0.0
        %717 = vmatpush1.msra.mxu0 0.0
        %718 = vmatprep.subr.mxu0 0.0
        %719 = vmatpush1.msra.mxu0 0.0
        %720 = vmatprep.subr.mxu0 0.0
        %721 = vmatpush1.msra.mxu0 %v608
        %722 = vmatprep.subr.mxu0 0.0
        %723 = vmatpush2.msra.mxu0 0.0
        %724 = vmatprep.subr.mxu0 0.0
        %725 = vmatpush2.msra.mxu0 0.0
        %726 = vmatprep.subr.mxu0 0.0
        %727 = vmatpush2.msra.mxu0 0.0
        %728 = vmatprep.subr.mxu0 0.0
        %729 = vmatpush2.msra.mxu0 0.0
        %730 = vmatprep.subr.mxu0 0.0
        %731 = vmatpush2.msra.mxu0 0.0
        %732 = vmatprep.subr.mxu0 0.0
        %733 = vmatpush2.msra.mxu0 0.0
        %734 = vmatprep.subr.mxu0 0.0
        %735 = vmatpush2.msra.mxu0 0.0
        %736 = vmatprep.subr.mxu0 0.0
        %737 = vmatpush2.msra.mxu0 0.0
        %738 = vmatprep.subr.mxu0 0.0
        %739 = vmatpush2.msra.mxu0 0.0
        %740 = vmatprep.subr.mxu0 0.0
        %741 = vmatpush2.msra.mxu0 0.0
        %742 = vmatprep.subr.mxu0 0.0
        %743 = vmatpush2.msra.mxu0 0.0
        %744 = vmatprep.subr.mxu0 0.0
        %745 = vmatpush2.msra.mxu0 0.0
        %746 = vmatprep.subr.mxu0 0.0
        %747 = vmatpush2.msra.mxu0 0.0
        %748 = vmatprep.subr.mxu0 0.0
        %749 = vmatpush2.msra.mxu0 0.0
        %750 = vmatprep.subr.mxu0 0.0
        %751 = vmatpush2.msra.mxu0 0.0
        %752 = vmatprep.subr.mxu0 0.0
        %753 = vmatpush2.msra.mxu0 0.0
        %754 = vmatprep.mubr.f32.mxu0 0.0
        %755 = vmatmul.mubr.f32.gmra.mxu0 %v688
        %v756 = vpop.f32.mrf.mxu0
        %v757 = vadd.f32 %v685, %v756
        %v758 = vpop.f32.mrf.mxu0
        %759 = vdwg.mxu0
        %761 = vset.pattern.permute.xlu0 0
        %762 = vperm.xlu0 %761, %v358
        %v763 = vpop.permute.xlu0 %762
        %v765 = vadd.f32 %v757, %v763
        %v766 = vmax.f32 %v765, 0.0
        %v768 = vrot.slane %v600, 4
        %v769 = vsel %vm615, %v768, 0
        %771 = vmatprep.subr.mxu0 0.0
        %772 = vmatpush1.msra.mxu0 0.0
        %773 = vmatprep.subr.mxu0 0.0
        %774 = vmatpush1.msra.mxu0 0.0
        %775 = vmatprep.subr.mxu0 0.0
        %776 = vmatpush1.msra.mxu0 0.0
        %777 = vmatprep.subr.mxu0 0.0
        %778 = vmatpush1.msra.mxu0 0.0
        %779 = vmatprep.subr.mxu0 0.0
        %780 = vmatpush1.msra.mxu0 0.0
        %781 = vmatprep.subr.mxu0 0.0
        %782 = vmatpush1.msra.mxu0 0.0
        %783 = vmatprep.subr.mxu0 0.0
        %784 = vmatpush1.msra.mxu0 0.0
        %785 = vmatprep.subr.mxu0 0.0
        %786 = vmatpush1.msra.mxu0 0.0
        %787 = vmatprep.subr.mxu0 0.0
        %788 = vmatpush1.msra.mxu0 0.0
        %789 = vmatprep.subr.mxu0 0.0
        %790 = vmatpush1.msra.mxu0 0.0
        %791 = vmatprep.subr.mxu0 0.0
        %792 = vmatpush1.msra.mxu0 0.0
        %793 = vmatprep.subr.mxu0 0.0
        %794 = vmatpush1.msra.mxu0 0.0
        %795 = vmatprep.subr.mxu0 0.0
        %796 = vmatpush1.msra.mxu0 0.0
        %797 = vmatprep.subr.mxu0 0.0
        %798 = vmatpush1.msra.mxu0 0.0
        %799 = vmatprep.subr.mxu0 0.0
        %800 = vmatpush1.msra.mxu0 0.0
        %801 = vmatprep.subr.mxu0 0.0
        %802 = vmatpush1.msra.mxu0 %v612
        %803 = vmatprep.subr.mxu0 0.0
        %804 = vmatpush2.msra.mxu0 0.0
        %805 = vmatprep.subr.mxu0 0.0
        %806 = vmatpush2.msra.mxu0 0.0
        %807 = vmatprep.subr.mxu0 0.0
        %808 = vmatpush2.msra.mxu0 0.0
        %809 = vmatprep.subr.mxu0 0.0
        %810 = vmatpush2.msra.mxu0 0.0
        %811 = vmatprep.subr.mxu0 0.0
        %812 = vmatpush2.msra.mxu0 0.0
        %813 = vmatprep.subr.mxu0 0.0
        %814 = vmatpush2.msra.mxu0 0.0
        %815 = vmatprep.subr.mxu0 0.0
        %816 = vmatpush2.msra.mxu0 0.0
        %817 = vmatprep.subr.mxu0 0.0
        %818 = vmatpush2.msra.mxu0 0.0
        %819 = vmatprep.subr.mxu0 0.0
        %820 = vmatpush2.msra.mxu0 0.0
        %821 = vmatprep.subr.mxu0 0.0
        %822 = vmatpush2.msra.mxu0 0.0
        %823 = vmatprep.subr.mxu0 0.0
        %824 = vmatpush2.msra.mxu0 0.0
        %825 = vmatprep.subr.mxu0 0.0
        %826 = vmatpush2.msra.mxu0 0.0
        %827 = vmatprep.subr.mxu0 0.0
        %828 = vmatpush2.msra.mxu0 0.0
        %829 = vmatprep.subr.mxu0 0.0
        %830 = vmatpush2.msra.mxu0 0.0
        %831 = vmatprep.subr.mxu0 0.0
        %832 = vmatpush2.msra.mxu0 0.0
        %833 = vmatprep.subr.mxu0 0.0
        %834 = vmatpush2.msra.mxu0 0.0
        %835 = vmatprep.mubr.f32.mxu0 0.0
        %836 = vmatmul.mubr.f32.gmra.mxu0 %v769
        %v837 = vpop.f32.mrf.mxu0
        %v838 = vadd.f32 0.0, %v837
        %v839 = vpop.f32.mrf.mxu0
        %840 = vdwg.mxu0
        %v841 = vsel %vm615, %v600, 0
        %843 = vmatprep.subr.mxu0 0.0
        %844 = vmatpush1.msra.mxu0 0.0
        %845 = vmatprep.subr.mxu0 0.0
        %846 = vmatpush1.msra.mxu0 0.0
        %847 = vmatprep.subr.mxu0 0.0
        %848 = vmatpush1.msra.mxu0 0.0
        %849 = vmatprep.subr.mxu0 0.0
        %850 = vmatpush1.msra.mxu0 0.0
        %851 = vmatprep.subr.mxu0 0.0
        %852 = vmatpush1.msra.mxu0 0.0
        %853 = vmatprep.subr.mxu0 0.0
        %854 = vmatpush1.msra.mxu0 0.0
        %855 = vmatprep.subr.mxu0 0.0
        %856 = vmatpush1.msra.mxu0 0.0
        %857 = vmatprep.subr.mxu0 0.0
        %858 = vmatpush1.msra.mxu0 0.0
        %859 = vmatprep.subr.mxu0 0.0
        %860 = vmatpush1.msra.mxu0 0.0
        %861 = vmatprep.subr.mxu0 0.0
        %862 = vmatpush1.msra.mxu0 0.0
        %863 = vmatprep.subr.mxu0 0.0
        %864 = vmatpush1.msra.mxu0 0.0
        %865 = vmatprep.subr.mxu0 0.0
        %866 = vmatpush1.msra.mxu0 0.0
        %867 = vmatprep.subr.mxu0 0.0
        %868 = vmatpush1.msra.mxu0 0.0
        %869 = vmatprep.subr.mxu0 0.0
        %870 = vmatpush1.msra.mxu0 0.0
        %871 = vmatprep.subr.mxu0 0.0
        %872 = vmatpush1.msra.mxu0 0.0
        %873 = vmatprep.subr.mxu0 0.0
        %874 = vmatpush1.msra.mxu0 %v608
        %875 = vmatprep.subr.mxu0 0.0
        %876 = vmatpush2.msra.mxu0 0.0
        %877 = vmatprep.subr.mxu0 0.0
        %878 = vmatpush2.msra.mxu0 0.0
        %879 = vmatprep.subr.mxu0 0.0
        %880 = vmatpush2.msra.mxu0 0.0
        %881 = vmatprep.subr.mxu0 0.0
        %882 = vmatpush2.msra.mxu0 0.0
        %883 = vmatprep.subr.mxu0 0.0
        %884 = vmatpush2.msra.mxu0 0.0
        %885 = vmatprep.subr.mxu0 0.0
        %886 = vmatpush2.msra.mxu0 0.0
        %887 = vmatprep.subr.mxu0 0.0
        %888 = vmatpush2.msra.mxu0 0.0
        %889 = vmatprep.subr.mxu0 0.0
        %890 = vmatpush2.msra.mxu0 0.0
        %891 = vmatprep.subr.mxu0 0.0
        %892 = vmatpush2.msra.mxu0 0.0
        %893 = vmatprep.subr.mxu0 0.0
        %894 = vmatpush2.msra.mxu0 0.0
        %895 = vmatprep.subr.mxu0 0.0
        %896 = vmatpush2.msra.mxu0 0.0
        %897 = vmatprep.subr.mxu0 0.0
        %898 = vmatpush2.msra.mxu0 0.0
        %899 = vmatprep.subr.mxu0 0.0
        %900 = vmatpush2.msra.mxu0 0.0
        %901 = vmatprep.subr.mxu0 0.0
        %902 = vmatpush2.msra.mxu0 0.0
        %903 = vmatprep.subr.mxu0 0.0
        %904 = vmatpush2.msra.mxu0 0.0
        %905 = vmatprep.subr.mxu0 0.0
        %906 = vmatpush2.msra.mxu0 0.0
        %907 = vmatprep.mubr.f32.mxu0 0.0
        %908 = vmatmul.mubr.f32.gmra.mxu0 %v841
        %v909 = vpop.f32.mrf.mxu0
        %v910 = vadd.f32 %v838, %v909
        %v911 = vpop.f32.mrf.mxu0
        %912 = vdwg.mxu0
        %v913 = vadd.f32 %v910, %v763
        %v914 = vmax.f32 %v913, 0.0
        %915 = vrot.lane.b32.xlu0 %v614, 120
        %v916 = vpop.permute.xlu0 %915
        %v917 = vsel %vm615, %v916, 0
        %919 = vmatprep.subr.mxu0 0.0
        %920 = vmatpush1.msra.mxu0 0.0
        %921 = vmatprep.subr.mxu0 0.0
        %922 = vmatpush1.msra.mxu0 0.0
        %923 = vmatprep.subr.mxu0 0.0
        %924 = vmatpush1.msra.mxu0 0.0
        %925 = vmatprep.subr.mxu0 0.0
        %926 = vmatpush1.msra.mxu0 0.0
        %927 = vmatprep.subr.mxu0 0.0
        %928 = vmatpush1.msra.mxu0 0.0
        %929 = vmatprep.subr.mxu0 0.0
        %930 = vmatpush1.msra.mxu0 0.0
        %931 = vmatprep.subr.mxu0 0.0
        %932 = vmatpush1.msra.mxu0 0.0
        %933 = vmatprep.subr.mxu0 0.0
        %934 = vmatpush1.msra.mxu0 0.0
        %935 = vmatprep.subr.mxu0 0.0
        %936 = vmatpush1.msra.mxu0 0.0
        %937 = vmatprep.subr.mxu0 0.0
        %938 = vmatpush1.msra.mxu0 0.0
        %939 = vmatprep.subr.mxu0 0.0
        %940 = vmatpush1.msra.mxu0 0.0
        %941 = vmatprep.subr.mxu0 0.0
        %942 = vmatpush1.msra.mxu0 0.0
        %943 = vmatprep.subr.mxu0 0.0
        %944 = vmatpush1.msra.mxu0 0.0
        %945 = vmatprep.subr.mxu0 0.0
        %946 = vmatpush1.msra.mxu0 0.0
        %947 = vmatprep.subr.mxu0 0.0
        %948 = vmatpush1.msra.mxu0 0.0
        %949 = vmatprep.subr.mxu0 0.0
        %950 = vmatpush1.msra.mxu0 %v612
        %951 = vmatprep.subr.mxu0 0.0
        %952 = vmatpush2.msra.mxu0 0.0
        %953 = vmatprep.subr.mxu0 0.0
        %954 = vmatpush2.msra.mxu0 0.0
        %955 = vmatprep.subr.mxu0 0.0
        %956 = vmatpush2.msra.mxu0 0.0
        %957 = vmatprep.subr.mxu0 0.0
        %958 = vmatpush2.msra.mxu0 0.0
        %959 = vmatprep.subr.mxu0 0.0
        %960 = vmatpush2.msra.mxu0 0.0
        %961 = vmatprep.subr.mxu0 0.0
        %962 = vmatpush2.msra.mxu0 0.0
        %963 = vmatprep.subr.mxu0 0.0
        %964 = vmatpush2.msra.mxu0 0.0
        %965 = vmatprep.subr.mxu0 0.0
        %966 = vmatpush2.msra.mxu0 0.0
        %967 = vmatprep.subr.mxu0 0.0
        %968 = vmatpush2.msra.mxu0 0.0
        %969 = vmatprep.subr.mxu0 0.0
        %970 = vmatpush2.msra.mxu0 0.0
        %971 = vmatprep.subr.mxu0 0.0
        %972 = vmatpush2.msra.mxu0 0.0
        %973 = vmatprep.subr.mxu0 0.0
        %974 = vmatpush2.msra.mxu0 0.0
        %975 = vmatprep.subr.mxu0 0.0
        %976 = vmatpush2.msra.mxu0 0.0
        %977 = vmatprep.subr.mxu0 0.0
        %978 = vmatpush2.msra.mxu0 0.0
        %979 = vmatprep.subr.mxu0 0.0
        %980 = vmatpush2.msra.mxu0 0.0
        %981 = vmatprep.subr.mxu0 0.0
        %982 = vmatpush2.msra.mxu0 0.0
        %983 = vmatprep.mubr.f32.mxu0 0.0
        %984 = vmatmul.mubr.f32.gmra.mxu0 %v917
        %v985 = vpop.f32.mrf.mxu0
        %v986 = vadd.f32 0.0, %v985
        %v987 = vpop.f32.mrf.mxu0
        %988 = vdwg.mxu0
        %989 = vrot.lane.b32.xlu0 %v599, 120
        %v990 = vpop.permute.xlu0 %989
        %v991 = vsel %vm615, %v990, 0
        %993 = vmatprep.subr.mxu0 0.0
        %994 = vmatpush1.msra.mxu0 0.0
        %995 = vmatprep.subr.mxu0 0.0
        %996 = vmatpush1.msra.mxu0 0.0
        %997 = vmatprep.subr.mxu0 0.0
        %998 = vmatpush1.msra.mxu0 0.0
        %999 = vmatprep.subr.mxu0 0.0
        %1000 = vmatpush1.msra.mxu0 0.0
        %1001 = vmatprep.subr.mxu0 0.0
        %1002 = vmatpush1.msra.mxu0 0.0
        %1003 = vmatprep.subr.mxu0 0.0
        %1004 = vmatpush1.msra.mxu0 0.0
        %1005 = vmatprep.subr.mxu0 0.0
        %1006 = vmatpush1.msra.mxu0 0.0
        %1007 = vmatprep.subr.mxu0 0.0
        %1008 = vmatpush1.msra.mxu0 0.0
        %1009 = vmatprep.subr.mxu0 0.0
        %1010 = vmatpush1.msra.mxu0 0.0
        %1011 = vmatprep.subr.mxu0 0.0
        %1012 = vmatpush1.msra.mxu0 0.0
        %1013 = vmatprep.subr.mxu0 0.0
        %1014 = vmatpush1.msra.mxu0 0.0
        %1015 = vmatprep.subr.mxu0 0.0
        %1016 = vmatpush1.msra.mxu0 0.0
        %1017 = vmatprep.subr.mxu0 0.0
        %1018 = vmatpush1.msra.mxu0 0.0
        %1019 = vmatprep.subr.mxu0 0.0
        %1020 = vmatpush1.msra.mxu0 0.0
        %1021 = vmatprep.subr.mxu0 0.0
        %1022 = vmatpush1.msra.mxu0 0.0
        %1023 = vmatprep.subr.mxu0 0.0
        %1024 = vmatpush1.msra.mxu0 %v608
        %1025 = vmatprep.subr.mxu0 0.0
        %1026 = vmatpush2.msra.mxu0 0.0
        %1027 = vmatprep.subr.mxu0 0.0
        %1028 = vmatpush2.msra.mxu0 0.0
        %1029 = vmatprep.subr.mxu0 0.0
        %1030 = vmatpush2.msra.mxu0 0.0
        %1031 = vmatprep.subr.mxu0 0.0
        %1032 = vmatpush2.msra.mxu0 0.0
        %1033 = vmatprep.subr.mxu0 0.0
        %1034 = vmatpush2.msra.mxu0 0.0
        %1035 = vmatprep.subr.mxu0 0.0
        %1036 = vmatpush2.msra.mxu0 0.0
        %1037 = vmatprep.subr.mxu0 0.0
        %1038 = vmatpush2.msra.mxu0 0.0
        %1039 = vmatprep.subr.mxu0 0.0
        %1040 = vmatpush2.msra.mxu0 0.0
        %1041 = vmatprep.subr.mxu0 0.0
        %1042 = vmatpush2.msra.mxu0 0.0
        %1043 = vmatprep.subr.mxu0 0.0
        %1044 = vmatpush2.msra.mxu0 0.0
        %1045 = vmatprep.subr.mxu0 0.0
        %1046 = vmatpush2.msra.mxu0 0.0
        %1047 = vmatprep.subr.mxu0 0.0
        %1048 = vmatpush2.msra.mxu0 0.0
        %1049 = vmatprep.subr.mxu0 0.0
        %1050 = vmatpush2.msra.mxu0 0.0
        %1051 = vmatprep.subr.mxu0 0.0
        %1052 = vmatpush2.msra.mxu0 0.0
        %1053 = vmatprep.subr.mxu0 0.0
        %1054 = vmatpush2.msra.mxu0 0.0
        %1055 = vmatprep.subr.mxu0 0.0
        %1056 = vmatpush2.msra.mxu0 0.0
        %1057 = vmatprep.mubr.f32.mxu0 0.0
        %1058 = vmatmul.mubr.f32.gmra.mxu0 %v991
        %v1059 = vpop.f32.mrf.mxu0
        %v1060 = vadd.f32 %v986, %v1059
        %v1061 = vpop.f32.mrf.mxu0
        %1062 = vdwg.mxu0
        %v1063 = vadd.f32 %v1060, %v763
        %v1064 = vmax.f32 %v1063, 0.0
        %1065 = vrot.lane.b32.xlu0 %v768, 120
        %v1066 = vpop.permute.xlu0 %1065
        %v1067 = vsel %vm615, %v1066, 0
        %1069 = vmatprep.subr.mxu0 0.0
        %1070 = vmatpush1.msra.mxu0 0.0
        %1071 = vmatprep.subr.mxu0 0.0
        %1072 = vmatpush1.msra.mxu0 0.0
        %1073 = vmatprep.subr.mxu0 0.0
        %1074 = vmatpush1.msra.mxu0 0.0
        %1075 = vmatprep.subr.mxu0 0.0
        %1076 = vmatpush1.msra.mxu0 0.0
        %1077 = vmatprep.subr.mxu0 0.0
        %1078 = vmatpush1.msra.mxu0 0.0
        %1079 = vmatprep.subr.mxu0 0.0
        %1080 = vmatpush1.msra.mxu0 0.0
        %1081 = vmatprep.subr.mxu0 0.0
        %1082 = vmatpush1.msra.mxu0 0.0
        %1083 = vmatprep.subr.mxu0 0.0
        %1084 = vmatpush1.msra.mxu0 0.0
        %1085 = vmatprep.subr.mxu0 0.0
        %1086 = vmatpush1.msra.mxu0 0.0
        %1087 = vmatprep.subr.mxu0 0.0
        %1088 = vmatpush1.msra.mxu0 0.0
        %1089 = vmatprep.subr.mxu0 0.0
        %1090 = vmatpush1.msra.mxu0 0.0
        %1091 = vmatprep.subr.mxu0 0.0
        %1092 = vmatpush1.msra.mxu0 0.0
        %1093 = vmatprep.subr.mxu0 0.0
        %1094 = vmatpush1.msra.mxu0 0.0
        %1095 = vmatprep.subr.mxu0 0.0
        %1096 = vmatpush1.msra.mxu0 0.0
        %1097 = vmatprep.subr.mxu0 0.0
        %1098 = vmatpush1.msra.mxu0 0.0
        %1099 = vmatprep.subr.mxu0 0.0
        %1100 = vmatpush1.msra.mxu0 %v612
        %1101 = vmatprep.subr.mxu0 0.0
        %1102 = vmatpush2.msra.mxu0 0.0
        %1103 = vmatprep.subr.mxu0 0.0
        %1104 = vmatpush2.msra.mxu0 0.0
        %1105 = vmatprep.subr.mxu0 0.0
        %1106 = vmatpush2.msra.mxu0 0.0
        %1107 = vmatprep.subr.mxu0 0.0
        %1108 = vmatpush2.msra.mxu0 0.0
        %1109 = vmatprep.subr.mxu0 0.0
        %1110 = vmatpush2.msra.mxu0 0.0
        %1111 = vmatprep.subr.mxu0 0.0
        %1112 = vmatpush2.msra.mxu0 0.0
        %1113 = vmatprep.subr.mxu0 0.0
        %1114 = vmatpush2.msra.mxu0 0.0
        %1115 = vmatprep.subr.mxu0 0.0
        %1116 = vmatpush2.msra.mxu0 0.0
        %1117 = vmatprep.subr.mxu0 0.0
        %1118 = vmatpush2.msra.mxu0 0.0
        %1119 = vmatprep.subr.mxu0 0.0
        %1120 = vmatpush2.msra.mxu0 0.0
        %1121 = vmatprep.subr.mxu0 0.0
        %1122 = vmatpush2.msra.mxu0 0.0
        %1123 = vmatprep.subr.mxu0 0.0
        %1124 = vmatpush2.msra.mxu0 0.0
        %1125 = vmatprep.subr.mxu0 0.0
        %1126 = vmatpush2.msra.mxu0 0.0
        %1127 = vmatprep.subr.mxu0 0.0
        %1128 = vmatpush2.msra.mxu0 0.0
        %1129 = vmatprep.subr.mxu0 0.0
        %1130 = vmatpush2.msra.mxu0 0.0
        %1131 = vmatprep.subr.mxu0 0.0
        %1132 = vmatpush2.msra.mxu0 0.0
        %1133 = vmatprep.mubr.f32.mxu0 0.0
        %1134 = vmatmul.mubr.f32.gmra.mxu0 %v1067
        %v1135 = vpop.f32.mrf.mxu0
        %v1136 = vadd.f32 0.0, %v1135
        %v1137 = vpop.f32.mrf.mxu0
        %1138 = vdwg.mxu0
        %1139 = vrot.lane.b32.xlu0 %v600, 120
        %v1140 = vpop.permute.xlu0 %1139
        %v1141 = vsel %vm615, %v1140, 0
        %1143 = vmatprep.subr.mxu0 0.0
        %1144 = vmatpush1.msra.mxu0 0.0
        %1145 = vmatprep.subr.mxu0 0.0
        %1146 = vmatpush1.msra.mxu0 0.0
        %1147 = vmatprep.subr.mxu0 0.0
        %1148 = vmatpush1.msra.mxu0 0.0
        %1149 = vmatprep.subr.mxu0 0.0
        %1150 = vmatpush1.msra.mxu0 0.0
        %1151 = vmatprep.subr.mxu0 0.0
        %1152 = vmatpush1.msra.mxu0 0.0
        %1153 = vmatprep.subr.mxu0 0.0
        %1154 = vmatpush1.msra.mxu0 0.0
        %1155 = vmatprep.subr.mxu0 0.0
        %1156 = vmatpush1.msra.mxu0 0.0
        %1157 = vmatprep.subr.mxu0 0.0
        %1158 = vmatpush1.msra.mxu0 0.0
        %1159 = vmatprep.subr.mxu0 0.0
        %1160 = vmatpush1.msra.mxu0 0.0
        %1161 = vmatprep.subr.mxu0 0.0
        %1162 = vmatpush1.msra.mxu0 0.0
        %1163 = vmatprep.subr.mxu0 0.0
        %1164 = vmatpush1.msra.mxu0 0.0
        %1165 = vmatprep.subr.mxu0 0.0
        %1166 = vmatpush1.msra.mxu0 0.0
        %1167 = vmatprep.subr.mxu0 0.0
        %1168 = vmatpush1.msra.mxu0 0.0
        %1169 = vmatprep.subr.mxu0 0.0
        %1170 = vmatpush1.msra.mxu0 0.0
        %1171 = vmatprep.subr.mxu0 0.0
        %1172 = vmatpush1.msra.mxu0 0.0
        %1173 = vmatprep.subr.mxu0 0.0
        %1174 = vmatpush1.msra.mxu0 %v608
        %1175 = vmatprep.subr.mxu0 0.0
        %1176 = vmatpush2.msra.mxu0 0.0
        %1177 = vmatprep.subr.mxu0 0.0
        %1178 = vmatpush2.msra.mxu0 0.0
        %1179 = vmatprep.subr.mxu0 0.0
        %1180 = vmatpush2.msra.mxu0 0.0
        %1181 = vmatprep.subr.mxu0 0.0
        %1182 = vmatpush2.msra.mxu0 0.0
        %1183 = vmatprep.subr.mxu0 0.0
        %1184 = vmatpush2.msra.mxu0 0.0
        %1185 = vmatprep.subr.mxu0 0.0
        %1186 = vmatpush2.msra.mxu0 0.0
        %1187 = vmatprep.subr.mxu0 0.0
        %1188 = vmatpush2.msra.mxu0 0.0
        %1189 = vmatprep.subr.mxu0 0.0
        %1190 = vmatpush2.msra.mxu0 0.0
        %1191 = vmatprep.subr.mxu0 0.0
        %1192 = vmatpush2.msra.mxu0 0.0
        %1193 = vmatprep.subr.mxu0 0.0
        %1194 = vmatpush2.msra.mxu0 0.0
        %1195 = vmatprep.subr.mxu0 0.0
        %1196 = vmatpush2.msra.mxu0 0.0
        %1197 = vmatprep.subr.mxu0 0.0
        %1198 = vmatpush2.msra.mxu0 0.0
        %1199 = vmatprep.subr.mxu0 0.0
        %1200 = vmatpush2.msra.mxu0 0.0
        %1201 = vmatprep.subr.mxu0 0.0
        %1202 = vmatpush2.msra.mxu0 0.0
        %1203 = vmatprep.subr.mxu0 0.0
        %1204 = vmatpush2.msra.mxu0 0.0
        %1205 = vmatprep.subr.mxu0 0.0
        %1206 = vmatpush2.msra.mxu0 0.0
        %1207 = vmatprep.mubr.f32.mxu0 0.0
        %1208 = vmatmul.mubr.f32.gmra.mxu0 %v1141
        %v1209 = vpop.f32.mrf.mxu0
        %v1210 = vadd.f32 %v1136, %v1209
        %v1211 = vpop.f32.mrf.mxu0
        %1212 = vdwg.mxu0
        %v1213 = vadd.f32 %v1210, %v763
        %v1214 = vmax.f32 %v1213, 0.0
        %1215 = vrot.lane.b32.xlu0 %v614, 112
        %v1216 = vpop.permute.xlu0 %1215
        %v1217 = vsel %vm615, %v1216, 0
        %1219 = vmatprep.subr.mxu0 0.0
        %1220 = vmatpush1.msra.mxu0 0.0
        %1221 = vmatprep.subr.mxu0 0.0
        %1222 = vmatpush1.msra.mxu0 0.0
        %1223 = vmatprep.subr.mxu0 0.0
        %1224 = vmatpush1.msra.mxu0 0.0
        %1225 = vmatprep.subr.mxu0 0.0
        %1226 = vmatpush1.msra.mxu0 0.0
        %1227 = vmatprep.subr.mxu0 0.0
        %1228 = vmatpush1.msra.mxu0 0.0
        %1229 = vmatprep.subr.mxu0 0.0
        %1230 = vmatpush1.msra.mxu0 0.0
        %1231 = vmatprep.subr.mxu0 0.0
        %1232 = vmatpush1.msra.mxu0 0.0
        %1233 = vmatprep.subr.mxu0 0.0
        %1234 = vmatpush1.msra.mxu0 0.0
        %1235 = vmatprep.subr.mxu0 0.0
        %1236 = vmatpush1.msra.mxu0 0.0
        %1237 = vmatprep.subr.mxu0 0.0
        %1238 = vmatpush1.msra.mxu0 0.0
        %1239 = vmatprep.subr.mxu0 0.0
        %1240 = vmatpush1.msra.mxu0 0.0
        %1241 = vmatprep.subr.mxu0 0.0
        %1242 = vmatpush1.msra.mxu0 0.0
        %1243 = vmatprep.subr.mxu0 0.0
        %1244 = vmatpush1.msra.mxu0 0.0
        %1245 = vmatprep.subr.mxu0 0.0
        %1246 = vmatpush1.msra.mxu0 0.0
        %1247 = vmatprep.subr.mxu0 0.0
        %1248 = vmatpush1.msra.mxu0 0.0
        %1249 = vmatprep.subr.mxu0 0.0
        %1250 = vmatpush1.msra.mxu0 %v612
        %1251 = vmatprep.subr.mxu0 0.0
        %1252 = vmatpush2.msra.mxu0 0.0
        %1253 = vmatprep.subr.mxu0 0.0
        %1254 = vmatpush2.msra.mxu0 0.0
        %1255 = vmatprep.subr.mxu0 0.0
        %1256 = vmatpush2.msra.mxu0 0.0
        %1257 = vmatprep.subr.mxu0 0.0
        %1258 = vmatpush2.msra.mxu0 0.0
        %1259 = vmatprep.subr.mxu0 0.0
        %1260 = vmatpush2.msra.mxu0 0.0
        %1261 = vmatprep.subr.mxu0 0.0
        %1262 = vmatpush2.msra.mxu0 0.0
        %1263 = vmatprep.subr.mxu0 0.0
        %1264 = vmatpush2.msra.mxu0 0.0
        %1265 = vmatprep.subr.mxu0 0.0
        %1266 = vmatpush2.msra.mxu0 0.0
        %1267 = vmatprep.subr.mxu0 0.0
        %1268 = vmatpush2.msra.mxu0 0.0
        %1269 = vmatprep.subr.mxu0 0.0
        %1270 = vmatpush2.msra.mxu0 0.0
        %1271 = vmatprep.subr.mxu0 0.0
        %1272 = vmatpush2.msra.mxu0 0.0
        %1273 = vmatprep.subr.mxu0 0.0
        %1274 = vmatpush2.msra.mxu0 0.0
        %1275 = vmatprep.subr.mxu0 0.0
        %1276 = vmatpush2.msra.mxu0 0.0
        %1277 = vmatprep.subr.mxu0 0.0
        %1278 = vmatpush2.msra.mxu0 0.0
        %1279 = vmatprep.subr.mxu0 0.0
        %1280 = vmatpush2.msra.mxu0 0.0
        %1281 = vmatprep.subr.mxu0 0.0
        %1282 = vmatpush2.msra.mxu0 0.0
        %1283 = vmatprep.mubr.f32.mxu0 0.0
        %1284 = vmatmul.mubr.f32.gmra.mxu0 %v1217
        %v1285 = vpop.f32.mrf.mxu0
        %v1286 = vadd.f32 0.0, %v1285
        %v1287 = vpop.f32.mrf.mxu0
        %1288 = vdwg.mxu0
        %1289 = vrot.lane.b32.xlu0 %v599, 112
        %v1290 = vpop.permute.xlu0 %1289
        %v1291 = vsel %vm615, %v1290, 0
        %1293 = vmatprep.subr.mxu0 0.0
        %1294 = vmatpush1.msra.mxu0 0.0
        %1295 = vmatprep.subr.mxu0 0.0
        %1296 = vmatpush1.msra.mxu0 0.0
        %1297 = vmatprep.subr.mxu0 0.0
        %1298 = vmatpush1.msra.mxu0 0.0
        %1299 = vmatprep.subr.mxu0 0.0
        %1300 = vmatpush1.msra.mxu0 0.0
        %1301 = vmatprep.subr.mxu0 0.0
        %1302 = vmatpush1.msra.mxu0 0.0
        %1303 = vmatprep.subr.mxu0 0.0
        %1304 = vmatpush1.msra.mxu0 0.0
        %1305 = vmatprep.subr.mxu0 0.0
        %1306 = vmatpush1.msra.mxu0 0.0
        %1307 = vmatprep.subr.mxu0 0.0
        %1308 = vmatpush1.msra.mxu0 0.0
        %1309 = vmatprep.subr.mxu0 0.0
        %1310 = vmatpush1.msra.mxu0 0.0
        %1311 = vmatprep.subr.mxu0 0.0
        %1312 = vmatpush1.msra.mxu0 0.0
        %1313 = vmatprep.subr.mxu0 0.0
        %1314 = vmatpush1.msra.mxu0 0.0
        %1315 = vmatprep.subr.mxu0 0.0
        %1316 = vmatpush1.msra.mxu0 0.0
        %1317 = vmatprep.subr.mxu0 0.0
        %1318 = vmatpush1.msra.mxu0 0.0
        %1319 = vmatprep.subr.mxu0 0.0
        %1320 = vmatpush1.msra.mxu0 0.0
        %1321 = vmatprep.subr.mxu0 0.0
        %1322 = vmatpush1.msra.mxu0 0.0
        %1323 = vmatprep.subr.mxu0 0.0
        %1324 = vmatpush1.msra.mxu0 %v608
        %1325 = vmatprep.subr.mxu0 0.0
        %1326 = vmatpush2.msra.mxu0 0.0
        %1327 = vmatprep.subr.mxu0 0.0
        %1328 = vmatpush2.msra.mxu0 0.0
        %1329 = vmatprep.subr.mxu0 0.0
        %1330 = vmatpush2.msra.mxu0 0.0
        %1331 = vmatprep.subr.mxu0 0.0
        %1332 = vmatpush2.msra.mxu0 0.0
        %1333 = vmatprep.subr.mxu0 0.0
        %1334 = vmatpush2.msra.mxu0 0.0
        %1335 = vmatprep.subr.mxu0 0.0
        %1336 = vmatpush2.msra.mxu0 0.0
        %1337 = vmatprep.subr.mxu0 0.0
        %1338 = vmatpush2.msra.mxu0 0.0
        %1339 = vmatprep.subr.mxu0 0.0
        %1340 = vmatpush2.msra.mxu0 0.0
        %1341 = vmatprep.subr.mxu0 0.0
        %1342 = vmatpush2.msra.mxu0 0.0
        %1343 = vmatprep.subr.mxu0 0.0
        %1344 = vmatpush2.msra.mxu0 0.0
        %1345 = vmatprep.subr.mxu0 0.0
        %1346 = vmatpush2.msra.mxu0 0.0
        %1347 = vmatprep.subr.mxu0 0.0
        %1348 = vmatpush2.msra.mxu0 0.0
        %1349 = vmatprep.subr.mxu0 0.0
        %1350 = vmatpush2.msra.mxu0 0.0
        %1351 = vmatprep.subr.mxu0 0.0
        %1352 = vmatpush2.msra.mxu0 0.0
        %1353 = vmatprep.subr.mxu0 0.0
        %1354 = vmatpush2.msra.mxu0 0.0
        %1355 = vmatprep.subr.mxu0 0.0
        %1356 = vmatpush2.msra.mxu0 0.0
        %1357 = vmatprep.mubr.f32.mxu0 0.0
        %1358 = vmatmul.mubr.f32.gmra.mxu0 %v1291
        %v1359 = vpop.f32.mrf.mxu0
        %v1360 = vadd.f32 %v1286, %v1359
        %v1361 = vpop.f32.mrf.mxu0
        %1362 = vdwg.mxu0
        %v1363 = vadd.f32 %v1360, %v763
        %v1364 = vmax.f32 %v1363, 0.0
        %1365 = vrot.lane.b32.xlu0 %v768, 112
        %v1366 = vpop.permute.xlu0 %1365
        %v1367 = vsel %vm615, %v1366, 0
        %1369 = vmatprep.subr.mxu0 0.0
        %1370 = vmatpush1.msra.mxu0 0.0
        %1371 = vmatprep.subr.mxu0 0.0
        %1372 = vmatpush1.msra.mxu0 0.0
        %1373 = vmatprep.subr.mxu0 0.0
        %1374 = vmatpush1.msra.mxu0 0.0
        %1375 = vmatprep.subr.mxu0 0.0
        %1376 = vmatpush1.msra.mxu0 0.0
        %1377 = vmatprep.subr.mxu0 0.0
        %1378 = vmatpush1.msra.mxu0 0.0
        %1379 = vmatprep.subr.mxu0 0.0
        %1380 = vmatpush1.msra.mxu0 0.0
        %1381 = vmatprep.subr.mxu0 0.0
        %1382 = vmatpush1.msra.mxu0 0.0
        %1383 = vmatprep.subr.mxu0 0.0
        %1384 = vmatpush1.msra.mxu0 0.0
        %1385 = vmatprep.subr.mxu0 0.0
        %1386 = vmatpush1.msra.mxu0 0.0
        %1387 = vmatprep.subr.mxu0 0.0
        %1388 = vmatpush1.msra.mxu0 0.0
        %1389 = vmatprep.subr.mxu0 0.0
        %1390 = vmatpush1.msra.mxu0 0.0
        %1391 = vmatprep.subr.mxu0 0.0
        %1392 = vmatpush1.msra.mxu0 0.0
        %1393 = vmatprep.subr.mxu0 0.0
        %1394 = vmatpush1.msra.mxu0 0.0
        %1395 = vmatprep.subr.mxu0 0.0
        %1396 = vmatpush1.msra.mxu0 0.0
        %1397 = vmatprep.subr.mxu0 0.0
        %1398 = vmatpush1.msra.mxu0 0.0
        %1399 = vmatprep.subr.mxu0 0.0
        %1400 = vmatpush1.msra.mxu0 %v612
        %1401 = vmatprep.subr.mxu0 0.0
        %1402 = vmatpush2.msra.mxu0 0.0
        %1403 = vmatprep.subr.mxu0 0.0
        %1404 = vmatpush2.msra.mxu0 0.0
        %1405 = vmatprep.subr.mxu0 0.0
        %1406 = vmatpush2.msra.mxu0 0.0
        %1407 = vmatprep.subr.mxu0 0.0
        %1408 = vmatpush2.msra.mxu0 0.0
        %1409 = vmatprep.subr.mxu0 0.0
        %1410 = vmatpush2.msra.mxu0 0.0
        %1411 = vmatprep.subr.mxu0 0.0
        %1412 = vmatpush2.msra.mxu0 0.0
        %1413 = vmatprep.subr.mxu0 0.0
        %1414 = vmatpush2.msra.mxu0 0.0
        %1415 = vmatprep.subr.mxu0 0.0
        %1416 = vmatpush2.msra.mxu0 0.0
        %1417 = vmatprep.subr.mxu0 0.0
        %1418 = vmatpush2.msra.mxu0 0.0
        %1419 = vmatprep.subr.mxu0 0.0
        %1420 = vmatpush2.msra.mxu0 0.0
        %1421 = vmatprep.subr.mxu0 0.0
        %1422 = vmatpush2.msra.mxu0 0.0
        %1423 = vmatprep.subr.mxu0 0.0
        %1424 = vmatpush2.msra.mxu0 0.0
        %1425 = vmatprep.subr.mxu0 0.0
        %1426 = vmatpush2.msra.mxu0 0.0
        %1427 = vmatprep.subr.mxu0 0.0
        %1428 = vmatpush2.msra.mxu0 0.0
        %1429 = vmatprep.subr.mxu0 0.0
        %1430 = vmatpush2.msra.mxu0 0.0
        %1431 = vmatprep.subr.mxu0 0.0
        %1432 = vmatpush2.msra.mxu0 0.0
        %1433 = vmatprep.mubr.f32.mxu0 0.0
        %1434 = vmatmul.mubr.f32.gmra.mxu0 %v1367
        %v1435 = vpop.f32.mrf.mxu0
        %v1436 = vadd.f32 0.0, %v1435
        %v1437 = vpop.f32.mrf.mxu0
        %1438 = vdwg.mxu0
        %1439 = vrot.lane.b32.xlu0 %v600, 112
        %v1440 = vpop.permute.xlu0 %1439
        %v1441 = vsel %vm615, %v1440, 0
        %1443 = vmatprep.subr.mxu0 0.0
        %1444 = vmatpush1.msra.mxu0 0.0
        %1445 = vmatprep.subr.mxu0 0.0
        %1446 = vmatpush1.msra.mxu0 0.0
        %1447 = vmatprep.subr.mxu0 0.0
        %1448 = vmatpush1.msra.mxu0 0.0
        %1449 = vmatprep.subr.mxu0 0.0
        %1450 = vmatpush1.msra.mxu0 0.0
        %1451 = vmatprep.subr.mxu0 0.0
        %1452 = vmatpush1.msra.mxu0 0.0
        %1453 = vmatprep.subr.mxu0 0.0
        %1454 = vmatpush1.msra.mxu0 0.0
        %1455 = vmatprep.subr.mxu0 0.0
        %1456 = vmatpush1.msra.mxu0 0.0
        %1457 = vmatprep.subr.mxu0 0.0
        %1458 = vmatpush1.msra.mxu0 0.0
        %1459 = vmatprep.subr.mxu0 0.0
        %1460 = vmatpush1.msra.mxu0 0.0
        %1461 = vmatprep.subr.mxu0 0.0
        %1462 = vmatpush1.msra.mxu0 0.0
        %1463 = vmatprep.subr.mxu0 0.0
        %1464 = vmatpush1.msra.mxu0 0.0
        %1465 = vmatprep.subr.mxu0 0.0
        %1466 = vmatpush1.msra.mxu0 0.0
        %1467 = vmatprep.subr.mxu0 0.0
        %1468 = vmatpush1.msra.mxu0 0.0
        %1469 = vmatprep.subr.mxu0 0.0
        %1470 = vmatpush1.msra.mxu0 0.0
        %1471 = vmatprep.subr.mxu0 0.0
        %1472 = vmatpush1.msra.mxu0 0.0
        %1473 = vmatprep.subr.mxu0 0.0
        %1474 = vmatpush1.msra.mxu0 %v608
        %1475 = vmatprep.subr.mxu0 0.0
        %1476 = vmatpush2.msra.mxu0 0.0
        %1477 = vmatprep.subr.mxu0 0.0
        %1478 = vmatpush2.msra.mxu0 0.0
        %1479 = vmatprep.subr.mxu0 0.0
        %1480 = vmatpush2.msra.mxu0 0.0
        %1481 = vmatprep.subr.mxu0 0.0
        %1482 = vmatpush2.msra.mxu0 0.0
        %1483 = vmatprep.subr.mxu0 0.0
        %1484 = vmatpush2.msra.mxu0 0.0
        %1485 = vmatprep.subr.mxu0 0.0
        %1486 = vmatpush2.msra.mxu0 0.0
        %1487 = vmatprep.subr.mxu0 0.0
        %1488 = vmatpush2.msra.mxu0 0.0
        %1489 = vmatprep.subr.mxu0 0.0
        %1490 = vmatpush2.msra.mxu0 0.0
        %1491 = vmatprep.subr.mxu0 0.0
        %1492 = vmatpush2.msra.mxu0 0.0
        %1493 = vmatprep.subr.mxu0 0.0
        %1494 = vmatpush2.msra.mxu0 0.0
        %1495 = vmatprep.subr.mxu0 0.0
        %1496 = vmatpush2.msra.mxu0 0.0
        %1497 = vmatprep.subr.mxu0 0.0
        %1498 = vmatpush2.msra.mxu0 0.0
        %1499 = vmatprep.subr.mxu0 0.0
        %1500 = vmatpush2.msra.mxu0 0.0
        %1501 = vmatprep.subr.mxu0 0.0
        %1502 = vmatpush2.msra.mxu0 0.0
        %1503 = vmatprep.subr.mxu0 0.0
        %1504 = vmatpush2.msra.mxu0 0.0
        %1505 = vmatprep.subr.mxu0 0.0
        %1506 = vmatpush2.msra.mxu0 0.0
        %1507 = vmatprep.mubr.f32.mxu0 0.0
        %1508 = vmatmul.mubr.f32.gmra.mxu0 %v1441
        %v1509 = vpop.f32.mrf.mxu0
        %v1510 = vadd.f32 %v1436, %v1509
        %v1511 = vpop.f32.mrf.mxu0
        %1512 = vdwg.mxu0
        %v1513 = vadd.f32 %v1510, %v763
        %v1514 = vmax.f32 %v1513, 0.0
        %1515 = vrot.lane.b32.xlu0 %v614, 104
        %v1516 = vpop.permute.xlu0 %1515
        %v1517 = vsel %vm615, %v1516, 0
        %1519 = vmatprep.subr.mxu0 0.0
        %1520 = vmatpush1.msra.mxu0 0.0
        %1521 = vmatprep.subr.mxu0 0.0
        %1522 = vmatpush1.msra.mxu0 0.0
        %1523 = vmatprep.subr.mxu0 0.0
        %1524 = vmatpush1.msra.mxu0 0.0
        %1525 = vmatprep.subr.mxu0 0.0
        %1526 = vmatpush1.msra.mxu0 0.0
        %1527 = vmatprep.subr.mxu0 0.0
        %1528 = vmatpush1.msra.mxu0 0.0
        %1529 = vmatprep.subr.mxu0 0.0
        %1530 = vmatpush1.msra.mxu0 0.0
        %1531 = vmatprep.subr.mxu0 0.0
        %1532 = vmatpush1.msra.mxu0 0.0
        %1533 = vmatprep.subr.mxu0 0.0
        %1534 = vmatpush1.msra.mxu0 0.0
        %1535 = vmatprep.subr.mxu0 0.0
        %1536 = vmatpush1.msra.mxu0 0.0
        %1537 = vmatprep.subr.mxu0 0.0
        %1538 = vmatpush1.msra.mxu0 0.0
        %1539 = vmatprep.subr.mxu0 0.0
        %1540 = vmatpush1.msra.mxu0 0.0
        %1541 = vmatprep.subr.mxu0 0.0
        %1542 = vmatpush1.msra.mxu0 0.0
        %1543 = vmatprep.subr.mxu0 0.0
        %1544 = vmatpush1.msra.mxu0 0.0
        %1545 = vmatprep.subr.mxu0 0.0
        %1546 = vmatpush1.msra.mxu0 0.0
        %1547 = vmatprep.subr.mxu0 0.0
        %1548 = vmatpush1.msra.mxu0 0.0
        %1549 = vmatprep.subr.mxu0 0.0
        %1550 = vmatpush1.msra.mxu0 %v612
        %1551 = vmatprep.subr.mxu0 0.0
        %1552 = vmatpush2.msra.mxu0 0.0
        %1553 = vmatprep.subr.mxu0 0.0
        %1554 = vmatpush2.msra.mxu0 0.0
        %1555 = vmatprep.subr.mxu0 0.0
        %1556 = vmatpush2.msra.mxu0 0.0
        %1557 = vmatprep.subr.mxu0 0.0
        %1558 = vmatpush2.msra.mxu0 0.0
        %1559 = vmatprep.subr.mxu0 0.0
        %1560 = vmatpush2.msra.mxu0 0.0
        %1561 = vmatprep.subr.mxu0 0.0
        %1562 = vmatpush2.msra.mxu0 0.0
        %1563 = vmatprep.subr.mxu0 0.0
        %1564 = vmatpush2.msra.mxu0 0.0
        %1565 = vmatprep.subr.mxu0 0.0
        %1566 = vmatpush2.msra.mxu0 0.0
        %1567 = vmatprep.subr.mxu0 0.0
        %1568 = vmatpush2.msra.mxu0 0.0
        %1569 = vmatprep.subr.mxu0 0.0
        %1570 = vmatpush2.msra.mxu0 0.0
        %1571 = vmatprep.subr.mxu0 0.0
        %1572 = vmatpush2.msra.mxu0 0.0
        %1573 = vmatprep.subr.mxu0 0.0
        %1574 = vmatpush2.msra.mxu0 0.0
        %1575 = vmatprep.subr.mxu0 0.0
        %1576 = vmatpush2.msra.mxu0 0.0
        %1577 = vmatprep.subr.mxu0 0.0
        %1578 = vmatpush2.msra.mxu0 0.0
        %1579 = vmatprep.subr.mxu0 0.0
        %1580 = vmatpush2.msra.mxu0 0.0
        %1581 = vmatprep.subr.mxu0 0.0
        %1582 = vmatpush2.msra.mxu0 0.0
        %1583 = vmatprep.mubr.f32.mxu0 0.0
        %1584 = vmatmul.mubr.f32.gmra.mxu0 %v1517
        %v1585 = vpop.f32.mrf.mxu0
        %v1586 = vadd.f32 0.0, %v1585
        %v1587 = vpop.f32.mrf.mxu0
        %1588 = vdwg.mxu0
        %1589 = vrot.lane.b32.xlu0 %v599, 104
        %v1590 = vpop.permute.xlu0 %1589
        %v1591 = vsel %vm615, %v1590, 0
        %1593 = vmatprep.subr.mxu0 0.0
        %1594 = vmatpush1.msra.mxu0 0.0
        %1595 = vmatprep.subr.mxu0 0.0
        %1596 = vmatpush1.msra.mxu0 0.0
        %1597 = vmatprep.subr.mxu0 0.0
        %1598 = vmatpush1.msra.mxu0 0.0
        %1599 = vmatprep.subr.mxu0 0.0
        %1600 = vmatpush1.msra.mxu0 0.0
        %1601 = vmatprep.subr.mxu0 0.0
        %1602 = vmatpush1.msra.mxu0 0.0
        %1603 = vmatprep.subr.mxu0 0.0
        %1604 = vmatpush1.msra.mxu0 0.0
        %1605 = vmatprep.subr.mxu0 0.0
        %1606 = vmatpush1.msra.mxu0 0.0
        %1607 = vmatprep.subr.mxu0 0.0
        %1608 = vmatpush1.msra.mxu0 0.0
        %1609 = vmatprep.subr.mxu0 0.0
        %1610 = vmatpush1.msra.mxu0 0.0
        %1611 = vmatprep.subr.mxu0 0.0
        %1612 = vmatpush1.msra.mxu0 0.0
        %1613 = vmatprep.subr.mxu0 0.0
        %1614 = vmatpush1.msra.mxu0 0.0
        %1615 = vmatprep.subr.mxu0 0.0
        %1616 = vmatpush1.msra.mxu0 0.0
        %1617 = vmatprep.subr.mxu0 0.0
        %1618 = vmatpush1.msra.mxu0 0.0
        %1619 = vmatprep.subr.mxu0 0.0
        %1620 = vmatpush1.msra.mxu0 0.0
        %1621 = vmatprep.subr.mxu0 0.0
        %1622 = vmatpush1.msra.mxu0 0.0
        %1623 = vmatprep.subr.mxu0 0.0
        %1624 = vmatpush1.msra.mxu0 %v608
        %1625 = vmatprep.subr.mxu0 0.0
        %1626 = vmatpush2.msra.mxu0 0.0
        %1627 = vmatprep.subr.mxu0 0.0
        %1628 = vmatpush2.msra.mxu0 0.0
        %1629 = vmatprep.subr.mxu0 0.0
        %1630 = vmatpush2.msra.mxu0 0.0
        %1631 = vmatprep.subr.mxu0 0.0
        %1632 = vmatpush2.msra.mxu0 0.0
        %1633 = vmatprep.subr.mxu0 0.0
        %1634 = vmatpush2.msra.mxu0 0.0
        %1635 = vmatprep.subr.mxu0 0.0
        %1636 = vmatpush2.msra.mxu0 0.0
        %1637 = vmatprep.subr.mxu0 0.0
        %1638 = vmatpush2.msra.mxu0 0.0
        %1639 = vmatprep.subr.mxu0 0.0
        %1640 = vmatpush2.msra.mxu0 0.0
        %1641 = vmatprep.subr.mxu0 0.0
        %1642 = vmatpush2.msra.mxu0 0.0
        %1643 = vmatprep.subr.mxu0 0.0
        %1644 = vmatpush2.msra.mxu0 0.0
        %1645 = vmatprep.subr.mxu0 0.0
        %1646 = vmatpush2.msra.mxu0 0.0
        %1647 = vmatprep.subr.mxu0 0.0
        %1648 = vmatpush2.msra.mxu0 0.0
        %1649 = vmatprep.subr.mxu0 0.0
        %1650 = vmatpush2.msra.mxu0 0.0
        %1651 = vmatprep.subr.mxu0 0.0
        %1652 = vmatpush2.msra.mxu0 0.0
        %1653 = vmatprep.subr.mxu0 0.0
        %1654 = vmatpush2.msra.mxu0 0.0
        %1655 = vmatprep.subr.mxu0 0.0
        %1656 = vmatpush2.msra.mxu0 0.0
        %1657 = vmatprep.mubr.f32.mxu0 0.0
        %1658 = vmatmul.mubr.f32.gmra.mxu0 %v1591
        %v1659 = vpop.f32.mrf.mxu0
        %v1660 = vadd.f32 %v1586, %v1659
        %v1661 = vpop.f32.mrf.mxu0
        %1662 = vdwg.mxu0
        %v1663 = vadd.f32 %v1660, %v763
        %v1664 = vmax.f32 %v1663, 0.0
        %1665 = vrot.lane.b32.xlu0 %v768, 104
        %v1666 = vpop.permute.xlu0 %1665
        %v1667 = vsel %vm615, %v1666, 0
        %1669 = vmatprep.subr.mxu0 0.0
        %1670 = vmatpush1.msra.mxu0 0.0
        %1671 = vmatprep.subr.mxu0 0.0
        %1672 = vmatpush1.msra.mxu0 0.0
        %1673 = vmatprep.subr.mxu0 0.0
        %1674 = vmatpush1.msra.mxu0 0.0
        %1675 = vmatprep.subr.mxu0 0.0
        %1676 = vmatpush1.msra.mxu0 0.0
        %1677 = vmatprep.subr.mxu0 0.0
        %1678 = vmatpush1.msra.mxu0 0.0
        %1679 = vmatprep.subr.mxu0 0.0
        %1680 = vmatpush1.msra.mxu0 0.0
        %1681 = vmatprep.subr.mxu0 0.0
        %1682 = vmatpush1.msra.mxu0 0.0
        %1683 = vmatprep.subr.mxu0 0.0
        %1684 = vmatpush1.msra.mxu0 0.0
        %1685 = vmatprep.subr.mxu0 0.0
        %1686 = vmatpush1.msra.mxu0 0.0
        %1687 = vmatprep.subr.mxu0 0.0
        %1688 = vmatpush1.msra.mxu0 0.0
        %1689 = vmatprep.subr.mxu0 0.0
        %1690 = vmatpush1.msra.mxu0 0.0
        %1691 = vmatprep.subr.mxu0 0.0
        %1692 = vmatpush1.msra.mxu0 0.0
        %1693 = vmatprep.subr.mxu0 0.0
        %1694 = vmatpush1.msra.mxu0 0.0
        %1695 = vmatprep.subr.mxu0 0.0
        %1696 = vmatpush1.msra.mxu0 0.0
        %1697 = vmatprep.subr.mxu0 0.0
        %1698 = vmatpush1.msra.mxu0 0.0
        %1699 = vmatprep.subr.mxu0 0.0
        %1700 = vmatpush1.msra.mxu0 %v612
        %1701 = vmatprep.subr.mxu0 0.0
        %1702 = vmatpush2.msra.mxu0 0.0
        %1703 = vmatprep.subr.mxu0 0.0
        %1704 = vmatpush2.msra.mxu0 0.0
        %1705 = vmatprep.subr.mxu0 0.0
        %1706 = vmatpush2.msra.mxu0 0.0
        %1707 = vmatprep.subr.mxu0 0.0
        %1708 = vmatpush2.msra.mxu0 0.0
        %1709 = vmatprep.subr.mxu0 0.0
        %1710 = vmatpush2.msra.mxu0 0.0
        %1711 = vmatprep.subr.mxu0 0.0
        %1712 = vmatpush2.msra.mxu0 0.0
        %1713 = vmatprep.subr.mxu0 0.0
        %1714 = vmatpush2.msra.mxu0 0.0
        %1715 = vmatprep.subr.mxu0 0.0
        %1716 = vmatpush2.msra.mxu0 0.0
        %1717 = vmatprep.subr.mxu0 0.0
        %1718 = vmatpush2.msra.mxu0 0.0
        %1719 = vmatprep.subr.mxu0 0.0
        %1720 = vmatpush2.msra.mxu0 0.0
        %1721 = vmatprep.subr.mxu0 0.0
        %1722 = vmatpush2.msra.mxu0 0.0
        %1723 = vmatprep.subr.mxu0 0.0
        %1724 = vmatpush2.msra.mxu0 0.0
        %1725 = vmatprep.subr.mxu0 0.0
        %1726 = vmatpush2.msra.mxu0 0.0
        %1727 = vmatprep.subr.mxu0 0.0
        %1728 = vmatpush2.msra.mxu0 0.0
        %1729 = vmatprep.subr.mxu0 0.0
        %1730 = vmatpush2.msra.mxu0 0.0
        %1731 = vmatprep.subr.mxu0 0.0
        %1732 = vmatpush2.msra.mxu0 0.0
        %1733 = vmatprep.mubr.f32.mxu0 0.0
        %1734 = vmatmul.mubr.f32.gmra.mxu0 %v1667
        %v1735 = vpop.f32.mrf.mxu0
        %v1736 = vadd.f32 0.0, %v1735
        %v1737 = vpop.f32.mrf.mxu0
        %1738 = vdwg.mxu0
        %1739 = vrot.lane.b32.xlu0 %v600, 104
        %v1740 = vpop.permute.xlu0 %1739
        %v1741 = vsel %vm615, %v1740, 0
        %1743 = vmatprep.subr.mxu0 0.0
        %1744 = vmatpush1.msra.mxu0 0.0
        %1745 = vmatprep.subr.mxu0 0.0
        %1746 = vmatpush1.msra.mxu0 0.0
        %1747 = vmatprep.subr.mxu0 0.0
        %1748 = vmatpush1.msra.mxu0 0.0
        %1749 = vmatprep.subr.mxu0 0.0
        %1750 = vmatpush1.msra.mxu0 0.0
        %1751 = vmatprep.subr.mxu0 0.0
        %1752 = vmatpush1.msra.mxu0 0.0
        %1753 = vmatprep.subr.mxu0 0.0
        %1754 = vmatpush1.msra.mxu0 0.0
        %1755 = vmatprep.subr.mxu0 0.0
        %1756 = vmatpush1.msra.mxu0 0.0
        %1757 = vmatprep.subr.mxu0 0.0
        %1758 = vmatpush1.msra.mxu0 0.0
        %1759 = vmatprep.subr.mxu0 0.0
        %1760 = vmatpush1.msra.mxu0 0.0
        %1761 = vmatprep.subr.mxu0 0.0
        %1762 = vmatpush1.msra.mxu0 0.0
        %1763 = vmatprep.subr.mxu0 0.0
        %1764 = vmatpush1.msra.mxu0 0.0
        %1765 = vmatprep.subr.mxu0 0.0
        %1766 = vmatpush1.msra.mxu0 0.0
        %1767 = vmatprep.subr.mxu0 0.0
        %1768 = vmatpush1.msra.mxu0 0.0
        %1769 = vmatprep.subr.mxu0 0.0
        %1770 = vmatpush1.msra.mxu0 0.0
        %1771 = vmatprep.subr.mxu0 0.0
        %1772 = vmatpush1.msra.mxu0 0.0
        %1773 = vmatprep.subr.mxu0 0.0
        %1774 = vmatpush1.msra.mxu0 %v608
        %1775 = vmatprep.subr.mxu0 0.0
        %1776 = vmatpush2.msra.mxu0 0.0
        %1777 = vmatprep.subr.mxu0 0.0
        %1778 = vmatpush2.msra.mxu0 0.0
        %1779 = vmatprep.subr.mxu0 0.0
        %1780 = vmatpush2.msra.mxu0 0.0
        %1781 = vmatprep.subr.mxu0 0.0
        %1782 = vmatpush2.msra.mxu0 0.0
        %1783 = vmatprep.subr.mxu0 0.0
        %1784 = vmatpush2.msra.mxu0 0.0
        %1785 = vmatprep.subr.mxu0 0.0
        %1786 = vmatpush2.msra.mxu0 0.0
        %1787 = vmatprep.subr.mxu0 0.0
        %1788 = vmatpush2.msra.mxu0 0.0
        %1789 = vmatprep.subr.mxu0 0.0
        %1790 = vmatpush2.msra.mxu0 0.0
        %1791 = vmatprep.subr.mxu0 0.0
        %1792 = vmatpush2.msra.mxu0 0.0
        %1793 = vmatprep.subr.mxu0 0.0
        %1794 = vmatpush2.msra.mxu0 0.0
        %1795 = vmatprep.subr.mxu0 0.0
        %1796 = vmatpush2.msra.mxu0 0.0
        %1797 = vmatprep.subr.mxu0 0.0
        %1798 = vmatpush2.msra.mxu0 0.0
        %1799 = vmatprep.subr.mxu0 0.0
        %1800 = vmatpush2.msra.mxu0 0.0
        %1801 = vmatprep.subr.mxu0 0.0
        %1802 = vmatpush2.msra.mxu0 0.0
        %1803 = vmatprep.subr.mxu0 0.0
        %1804 = vmatpush2.msra.mxu0 0.0
        %1805 = vmatprep.subr.mxu0 0.0
        %1806 = vmatpush2.msra.mxu0 0.0
        %1807 = vmatprep.mubr.f32.mxu0 0.0
        %1808 = vmatmul.mubr.f32.gmra.mxu0 %v1741
        %v1809 = vpop.f32.mrf.mxu0
        %v1810 = vadd.f32 %v1736, %v1809
        %v1811 = vpop.f32.mrf.mxu0
        %1812 = vdwg.mxu0
        %v1813 = vadd.f32 %v1810, %v763
        %v1814 = vmax.f32 %v1813, 0.0
        %1815 = vrot.lane.b32.xlu0 %v614, 96
        %v1816 = vpop.permute.xlu0 %1815
        %v1817 = vsel %vm615, %v1816, 0
        %1819 = vmatprep.subr.mxu0 0.0
        %1820 = vmatpush1.msra.mxu0 0.0
        %1821 = vmatprep.subr.mxu0 0.0
        %1822 = vmatpush1.msra.mxu0 0.0
        %1823 = vmatprep.subr.mxu0 0.0
        %1824 = vmatpush1.msra.mxu0 0.0
        %1825 = vmatprep.subr.mxu0 0.0
        %1826 = vmatpush1.msra.mxu0 0.0
        %1827 = vmatprep.subr.mxu0 0.0
        %1828 = vmatpush1.msra.mxu0 0.0
        %1829 = vmatprep.subr.mxu0 0.0
        %1830 = vmatpush1.msra.mxu0 0.0
        %1831 = vmatprep.subr.mxu0 0.0
        %1832 = vmatpush1.msra.mxu0 0.0
        %1833 = vmatprep.subr.mxu0 0.0
        %1834 = vmatpush1.msra.mxu0 0.0
        %1835 = vmatprep.subr.mxu0 0.0
        %1836 = vmatpush1.msra.mxu0 0.0
        %1837 = vmatprep.subr.mxu0 0.0
        %1838 = vmatpush1.msra.mxu0 0.0
        %1839 = vmatprep.subr.mxu0 0.0
        %1840 = vmatpush1.msra.mxu0 0.0
        %1841 = vmatprep.subr.mxu0 0.0
        %1842 = vmatpush1.msra.mxu0 0.0
        %1843 = vmatprep.subr.mxu0 0.0
        %1844 = vmatpush1.msra.mxu0 0.0
        %1845 = vmatprep.subr.mxu0 0.0
        %1846 = vmatpush1.msra.mxu0 0.0
        %1847 = vmatprep.subr.mxu0 0.0
        %1848 = vmatpush1.msra.mxu0 0.0
        %1849 = vmatprep.subr.mxu0 0.0
        %1850 = vmatpush1.msra.mxu0 %v612
        %1851 = vmatprep.subr.mxu0 0.0
        %1852 = vmatpush2.msra.mxu0 0.0
        %1853 = vmatprep.subr.mxu0 0.0
        %1854 = vmatpush2.msra.mxu0 0.0
        %1855 = vmatprep.subr.mxu0 0.0
        %1856 = vmatpush2.msra.mxu0 0.0
        %1857 = vmatprep.subr.mxu0 0.0
        %1858 = vmatpush2.msra.mxu0 0.0
        %1859 = vmatprep.subr.mxu0 0.0
        %1860 = vmatpush2.msra.mxu0 0.0
        %1861 = vmatprep.subr.mxu0 0.0
        %1862 = vmatpush2.msra.mxu0 0.0
        %1863 = vmatprep.subr.mxu0 0.0
        %1864 = vmatpush2.msra.mxu0 0.0
        %1865 = vmatprep.subr.mxu0 0.0
        %1866 = vmatpush2.msra.mxu0 0.0
        %1867 = vmatprep.subr.mxu0 0.0
        %1868 = vmatpush2.msra.mxu0 0.0
        %1869 = vmatprep.subr.mxu0 0.0
        %1870 = vmatpush2.msra.mxu0 0.0
        %1871 = vmatprep.subr.mxu0 0.0
        %1872 = vmatpush2.msra.mxu0 0.0
        %1873 = vmatprep.subr.mxu0 0.0
        %1874 = vmatpush2.msra.mxu0 0.0
        %1875 = vmatprep.subr.mxu0 0.0
        %1876 = vmatpush2.msra.mxu0 0.0
        %1877 = vmatprep.subr.mxu0 0.0
        %1878 = vmatpush2.msra.mxu0 0.0
        %1879 = vmatprep.subr.mxu0 0.0
        %1880 = vmatpush2.msra.mxu0 0.0
        %1881 = vmatprep.subr.mxu0 0.0
        %1882 = vmatpush2.msra.mxu0 0.0
        %1883 = vmatprep.mubr.f32.mxu0 0.0
        %1884 = vmatmul.mubr.f32.gmra.mxu0 %v1817
        %v1885 = vpop.f32.mrf.mxu0
        %v1886 = vadd.f32 0.0, %v1885
        %v1887 = vpop.f32.mrf.mxu0
        %1888 = vdwg.mxu0
        %1889 = vrot.lane.b32.xlu0 %v599, 96
        %v1890 = vpop.permute.xlu0 %1889
        %v1891 = vsel %vm615, %v1890, 0
        %1893 = vmatprep.subr.mxu0 0.0
        %1894 = vmatpush1.msra.mxu0 0.0
        %1895 = vmatprep.subr.mxu0 0.0
        %1896 = vmatpush1.msra.mxu0 0.0
        %1897 = vmatprep.subr.mxu0 0.0
        %1898 = vmatpush1.msra.mxu0 0.0
        %1899 = vmatprep.subr.mxu0 0.0
        %1900 = vmatpush1.msra.mxu0 0.0
        %1901 = vmatprep.subr.mxu0 0.0
        %1902 = vmatpush1.msra.mxu0 0.0
        %1903 = vmatprep.subr.mxu0 0.0
        %1904 = vmatpush1.msra.mxu0 0.0
        %1905 = vmatprep.subr.mxu0 0.0
        %1906 = vmatpush1.msra.mxu0 0.0
        %1907 = vmatprep.subr.mxu0 0.0
        %1908 = vmatpush1.msra.mxu0 0.0
        %1909 = vmatprep.subr.mxu0 0.0
        %1910 = vmatpush1.msra.mxu0 0.0
        %1911 = vmatprep.subr.mxu0 0.0
        %1912 = vmatpush1.msra.mxu0 0.0
        %1913 = vmatprep.subr.mxu0 0.0
        %1914 = vmatpush1.msra.mxu0 0.0
        %1915 = vmatprep.subr.mxu0 0.0
        %1916 = vmatpush1.msra.mxu0 0.0
        %1917 = vmatprep.subr.mxu0 0.0
        %1918 = vmatpush1.msra.mxu0 0.0
        %1919 = vmatprep.subr.mxu0 0.0
        %1920 = vmatpush1.msra.mxu0 0.0
        %1921 = vmatprep.subr.mxu0 0.0
        %1922 = vmatpush1.msra.mxu0 0.0
        %1923 = vmatprep.subr.mxu0 0.0
        %1924 = vmatpush1.msra.mxu0 %v608
        %1925 = vmatprep.subr.mxu0 0.0
        %1926 = vmatpush2.msra.mxu0 0.0
        %1927 = vmatprep.subr.mxu0 0.0
        %1928 = vmatpush2.msra.mxu0 0.0
        %1929 = vmatprep.subr.mxu0 0.0
        %1930 = vmatpush2.msra.mxu0 0.0
        %1931 = vmatprep.subr.mxu0 0.0
        %1932 = vmatpush2.msra.mxu0 0.0
        %1933 = vmatprep.subr.mxu0 0.0
        %1934 = vmatpush2.msra.mxu0 0.0
        %1935 = vmatprep.subr.mxu0 0.0
        %1936 = vmatpush2.msra.mxu0 0.0
        %1937 = vmatprep.subr.mxu0 0.0
        %1938 = vmatpush2.msra.mxu0 0.0
        %1939 = vmatprep.subr.mxu0 0.0
        %1940 = vmatpush2.msra.mxu0 0.0
        %1941 = vmatprep.subr.mxu0 0.0
        %1942 = vmatpush2.msra.mxu0 0.0
        %1943 = vmatprep.subr.mxu0 0.0
        %1944 = vmatpush2.msra.mxu0 0.0
        %1945 = vmatprep.subr.mxu0 0.0
        %1946 = vmatpush2.msra.mxu0 0.0
        %1947 = vmatprep.subr.mxu0 0.0
        %1948 = vmatpush2.msra.mxu0 0.0
        %1949 = vmatprep.subr.mxu0 0.0
        %1950 = vmatpush2.msra.mxu0 0.0
        %1951 = vmatprep.subr.mxu0 0.0
        %1952 = vmatpush2.msra.mxu0 0.0
        %1953 = vmatprep.subr.mxu0 0.0
        %1954 = vmatpush2.msra.mxu0 0.0
        %1955 = vmatprep.subr.mxu0 0.0
        %1956 = vmatpush2.msra.mxu0 0.0
        %1957 = vmatprep.mubr.f32.mxu0 0.0
        %1958 = vmatmul.mubr.f32.gmra.mxu0 %v1891
        %v1959 = vpop.f32.mrf.mxu0
        %v1960 = vadd.f32 %v1886, %v1959
        %v1961 = vpop.f32.mrf.mxu0
        %1962 = vdwg.mxu0
        %v1963 = vadd.f32 %v1960, %v763
        %v1964 = vmax.f32 %v1963, 0.0
        %1965 = vrot.lane.b32.xlu0 %v768, 96
        %v1966 = vpop.permute.xlu0 %1965
        %v1967 = vsel %vm615, %v1966, 0
        %1969 = vmatprep.subr.mxu0 0.0
        %1970 = vmatpush1.msra.mxu0 0.0
        %1971 = vmatprep.subr.mxu0 0.0
        %1972 = vmatpush1.msra.mxu0 0.0
        %1973 = vmatprep.subr.mxu0 0.0
        %1974 = vmatpush1.msra.mxu0 0.0
        %1975 = vmatprep.subr.mxu0 0.0
        %1976 = vmatpush1.msra.mxu0 0.0
        %1977 = vmatprep.subr.mxu0 0.0
        %1978 = vmatpush1.msra.mxu0 0.0
        %1979 = vmatprep.subr.mxu0 0.0
        %1980 = vmatpush1.msra.mxu0 0.0
        %1981 = vmatprep.subr.mxu0 0.0
        %1982 = vmatpush1.msra.mxu0 0.0
        %1983 = vmatprep.subr.mxu0 0.0
        %1984 = vmatpush1.msra.mxu0 0.0
        %1985 = vmatprep.subr.mxu0 0.0
        %1986 = vmatpush1.msra.mxu0 0.0
        %1987 = vmatprep.subr.mxu0 0.0
        %1988 = vmatpush1.msra.mxu0 0.0
        %1989 = vmatprep.subr.mxu0 0.0
        %1990 = vmatpush1.msra.mxu0 0.0
        %1991 = vmatprep.subr.mxu0 0.0
        %1992 = vmatpush1.msra.mxu0 0.0
        %1993 = vmatprep.subr.mxu0 0.0
        %1994 = vmatpush1.msra.mxu0 0.0
        %1995 = vmatprep.subr.mxu0 0.0
        %1996 = vmatpush1.msra.mxu0 0.0
        %1997 = vmatprep.subr.mxu0 0.0
        %1998 = vmatpush1.msra.mxu0 0.0
        %1999 = vmatprep.subr.mxu0 0.0
        %2000 = vmatpush1.msra.mxu0 %v612
        %2001 = vmatprep.subr.mxu0 0.0
        %2002 = vmatpush2.msra.mxu0 0.0
        %2003 = vmatprep.subr.mxu0 0.0
        %2004 = vmatpush2.msra.mxu0 0.0
        %2005 = vmatprep.subr.mxu0 0.0
        %2006 = vmatpush2.msra.mxu0 0.0
        %2007 = vmatprep.subr.mxu0 0.0
        %2008 = vmatpush2.msra.mxu0 0.0
        %2009 = vmatprep.subr.mxu0 0.0
        %2010 = vmatpush2.msra.mxu0 0.0
        %2011 = vmatprep.subr.mxu0 0.0
        %2012 = vmatpush2.msra.mxu0 0.0
        %2013 = vmatprep.subr.mxu0 0.0
        %2014 = vmatpush2.msra.mxu0 0.0
        %2015 = vmatprep.subr.mxu0 0.0
        %2016 = vmatpush2.msra.mxu0 0.0
        %2017 = vmatprep.subr.mxu0 0.0
        %2018 = vmatpush2.msra.mxu0 0.0
        %2019 = vmatprep.subr.mxu0 0.0
        %2020 = vmatpush2.msra.mxu0 0.0
        %2021 = vmatprep.subr.mxu0 0.0
        %2022 = vmatpush2.msra.mxu0 0.0
        %2023 = vmatprep.subr.mxu0 0.0
        %2024 = vmatpush2.msra.mxu0 0.0
        %2025 = vmatprep.subr.mxu0 0.0
        %2026 = vmatpush2.msra.mxu0 0.0
        %2027 = vmatprep.subr.mxu0 0.0
        %2028 = vmatpush2.msra.mxu0 0.0
        %2029 = vmatprep.subr.mxu0 0.0
        %2030 = vmatpush2.msra.mxu0 0.0
        %2031 = vmatprep.subr.mxu0 0.0
        %2032 = vmatpush2.msra.mxu0 0.0
        %2033 = vmatprep.mubr.f32.mxu0 0.0
        %2034 = vmatmul.mubr.f32.gmra.mxu0 %v1967
        %v2035 = vpop.f32.mrf.mxu0
        %v2036 = vadd.f32 0.0, %v2035
        %v2037 = vpop.f32.mrf.mxu0
        %2038 = vdwg.mxu0
        %2039 = vrot.lane.b32.xlu0 %v600, 96
        %v2040 = vpop.permute.xlu0 %2039
        %v2041 = vsel %vm615, %v2040, 0
        %2043 = vmatprep.subr.mxu0 0.0
        %2044 = vmatpush1.msra.mxu0 0.0
        %2045 = vmatprep.subr.mxu0 0.0
        %2046 = vmatpush1.msra.mxu0 0.0
        %2047 = vmatprep.subr.mxu0 0.0
        %2048 = vmatpush1.msra.mxu0 0.0
        %2049 = vmatprep.subr.mxu0 0.0
        %2050 = vmatpush1.msra.mxu0 0.0
        %2051 = vmatprep.subr.mxu0 0.0
        %2052 = vmatpush1.msra.mxu0 0.0
        %2053 = vmatprep.subr.mxu0 0.0
        %2054 = vmatpush1.msra.mxu0 0.0
        %2055 = vmatprep.subr.mxu0 0.0
        %2056 = vmatpush1.msra.mxu0 0.0
        %2057 = vmatprep.subr.mxu0 0.0
        %2058 = vmatpush1.msra.mxu0 0.0
        %2059 = vmatprep.subr.mxu0 0.0
        %2060 = vmatpush1.msra.mxu0 0.0
        %2061 = vmatprep.subr.mxu0 0.0
        %2062 = vmatpush1.msra.mxu0 0.0
        %2063 = vmatprep.subr.mxu0 0.0
        %2064 = vmatpush1.msra.mxu0 0.0
        %2065 = vmatprep.subr.mxu0 0.0
        %2066 = vmatpush1.msra.mxu0 0.0
        %2067 = vmatprep.subr.mxu0 0.0
        %2068 = vmatpush1.msra.mxu0 0.0
        %2069 = vmatprep.subr.mxu0 0.0
        %2070 = vmatpush1.msra.mxu0 0.0
        %2071 = vmatprep.subr.mxu0 0.0
        %2072 = vmatpush1.msra.mxu0 0.0
        %2073 = vmatprep.subr.mxu0 0.0
        %2074 = vmatpush1.msra.mxu0 %v608
        %2075 = vmatprep.subr.mxu0 0.0
        %2076 = vmatpush2.msra.mxu0 0.0
        %2077 = vmatprep.subr.mxu0 0.0
        %2078 = vmatpush2.msra.mxu0 0.0
        %2079 = vmatprep.subr.mxu0 0.0
        %2080 = vmatpush2.msra.mxu0 0.0
        %2081 = vmatprep.subr.mxu0 0.0
        %2082 = vmatpush2.msra.mxu0 0.0
        %2083 = vmatprep.subr.mxu0 0.0
        %2084 = vmatpush2.msra.mxu0 0.0
        %2085 = vmatprep.subr.mxu0 0.0
        %2086 = vmatpush2.msra.mxu0 0.0
        %2087 = vmatprep.subr.mxu0 0.0
        %2088 = vmatpush2.msra.mxu0 0.0
        %2089 = vmatprep.subr.mxu0 0.0
        %2090 = vmatpush2.msra.mxu0 0.0
        %2091 = vmatprep.subr.mxu0 0.0
        %2092 = vmatpush2.msra.mxu0 0.0
        %2093 = vmatprep.subr.mxu0 0.0
        %2094 = vmatpush2.msra.mxu0 0.0
        %2095 = vmatprep.subr.mxu0 0.0
        %2096 = vmatpush2.msra.mxu0 0.0
        %2097 = vmatprep.subr.mxu0 0.0
        %2098 = vmatpush2.msra.mxu0 0.0
        %2099 = vmatprep.subr.mxu0 0.0
        %2100 = vmatpush2.msra.mxu0 0.0
        %2101 = vmatprep.subr.mxu0 0.0
        %2102 = vmatpush2.msra.mxu0 0.0
        %2103 = vmatprep.subr.mxu0 0.0
        %2104 = vmatpush2.msra.mxu0 0.0
        %2105 = vmatprep.subr.mxu0 0.0
        %2106 = vmatpush2.msra.mxu0 0.0
        %2107 = vmatprep.mubr.f32.mxu0 0.0
        %2108 = vmatmul.mubr.f32.gmra.mxu0 %v2041
        %v2109 = vpop.f32.mrf.mxu0
        %v2110 = vadd.f32 %v2036, %v2109
        %v2111 = vpop.f32.mrf.mxu0
        %2112 = vdwg.mxu0
        %v2113 = vadd.f32 %v2110, %v763
        %v2114 = vmax.f32 %v2113, 0.0
        %2115 = vrot.lane.b32.xlu0 %v614, 88
        %v2116 = vpop.permute.xlu0 %2115
        %v2117 = vsel %vm615, %v2116, 0
        %2119 = vmatprep.subr.mxu0 0.0
        %2120 = vmatpush1.msra.mxu0 0.0
        %2121 = vmatprep.subr.mxu0 0.0
        %2122 = vmatpush1.msra.mxu0 0.0
        %2123 = vmatprep.subr.mxu0 0.0
        %2124 = vmatpush1.msra.mxu0 0.0
        %2125 = vmatprep.subr.mxu0 0.0
        %2126 = vmatpush1.msra.mxu0 0.0
        %2127 = vmatprep.subr.mxu0 0.0
        %2128 = vmatpush1.msra.mxu0 0.0
        %2129 = vmatprep.subr.mxu0 0.0
        %2130 = vmatpush1.msra.mxu0 0.0
        %2131 = vmatprep.subr.mxu0 0.0
        %2132 = vmatpush1.msra.mxu0 0.0
        %2133 = vmatprep.subr.mxu0 0.0
        %2134 = vmatpush1.msra.mxu0 0.0
        %2135 = vmatprep.subr.mxu0 0.0
        %2136 = vmatpush1.msra.mxu0 0.0
        %2137 = vmatprep.subr.mxu0 0.0
        %2138 = vmatpush1.msra.mxu0 0.0
        %2139 = vmatprep.subr.mxu0 0.0
        %2140 = vmatpush1.msra.mxu0 0.0
        %2141 = vmatprep.subr.mxu0 0.0
        %2142 = vmatpush1.msra.mxu0 0.0
        %2143 = vmatprep.subr.mxu0 0.0
        %2144 = vmatpush1.msra.mxu0 0.0
        %2145 = vmatprep.subr.mxu0 0.0
        %2146 = vmatpush1.msra.mxu0 0.0
        %2147 = vmatprep.subr.mxu0 0.0
        %2148 = vmatpush1.msra.mxu0 0.0
        %2149 = vmatprep.subr.mxu0 0.0
        %2150 = vmatpush1.msra.mxu0 %v612
        %2151 = vmatprep.subr.mxu0 0.0
        %2152 = vmatpush2.msra.mxu0 0.0
        %2153 = vmatprep.subr.mxu0 0.0
        %2154 = vmatpush2.msra.mxu0 0.0
        %2155 = vmatprep.subr.mxu0 0.0
        %2156 = vmatpush2.msra.mxu0 0.0
        %2157 = vmatprep.subr.mxu0 0.0
        %2158 = vmatpush2.msra.mxu0 0.0
        %2159 = vmatprep.subr.mxu0 0.0
        %2160 = vmatpush2.msra.mxu0 0.0
        %2161 = vmatprep.subr.mxu0 0.0
        %2162 = vmatpush2.msra.mxu0 0.0
        %2163 = vmatprep.subr.mxu0 0.0
        %2164 = vmatpush2.msra.mxu0 0.0
        %2165 = vmatprep.subr.mxu0 0.0
        %2166 = vmatpush2.msra.mxu0 0.0
        %2167 = vmatprep.subr.mxu0 0.0
        %2168 = vmatpush2.msra.mxu0 0.0
        %2169 = vmatprep.subr.mxu0 0.0
        %2170 = vmatpush2.msra.mxu0 0.0
        %2171 = vmatprep.subr.mxu0 0.0
        %2172 = vmatpush2.msra.mxu0 0.0
        %2173 = vmatprep.subr.mxu0 0.0
        %2174 = vmatpush2.msra.mxu0 0.0
        %2175 = vmatprep.subr.mxu0 0.0
        %2176 = vmatpush2.msra.mxu0 0.0
        %2177 = vmatprep.subr.mxu0 0.0
        %2178 = vmatpush2.msra.mxu0 0.0
        %2179 = vmatprep.subr.mxu0 0.0
        %2180 = vmatpush2.msra.mxu0 0.0
        %2181 = vmatprep.subr.mxu0 0.0
        %2182 = vmatpush2.msra.mxu0 0.0
        %2183 = vmatprep.mubr.f32.mxu0 0.0
        %2184 = vmatmul.mubr.f32.gmra.mxu0 %v2117
        %v2185 = vpop.f32.mrf.mxu0
        %v2186 = vadd.f32 0.0, %v2185
        %v2187 = vpop.f32.mrf.mxu0
        %2188 = vdwg.mxu0
        %2189 = vrot.lane.b32.xlu0 %v599, 88
        %v2190 = vpop.permute.xlu0 %2189
        %v2191 = vsel %vm615, %v2190, 0
        %2193 = vmatprep.subr.mxu0 0.0
        %2194 = vmatpush1.msra.mxu0 0.0
        %2195 = vmatprep.subr.mxu0 0.0
        %2196 = vmatpush1.msra.mxu0 0.0
        %2197 = vmatprep.subr.mxu0 0.0
        %2198 = vmatpush1.msra.mxu0 0.0
        %2199 = vmatprep.subr.mxu0 0.0
        %2200 = vmatpush1.msra.mxu0 0.0
        %2201 = vmatprep.subr.mxu0 0.0
        %2202 = vmatpush1.msra.mxu0 0.0
        %2203 = vmatprep.subr.mxu0 0.0
        %2204 = vmatpush1.msra.mxu0 0.0
        %2205 = vmatprep.subr.mxu0 0.0
        %2206 = vmatpush1.msra.mxu0 0.0
        %2207 = vmatprep.subr.mxu0 0.0
        %2208 = vmatpush1.msra.mxu0 0.0
        %2209 = vmatprep.subr.mxu0 0.0
        %2210 = vmatpush1.msra.mxu0 0.0
        %2211 = vmatprep.subr.mxu0 0.0
        %2212 = vmatpush1.msra.mxu0 0.0
        %2213 = vmatprep.subr.mxu0 0.0
        %2214 = vmatpush1.msra.mxu0 0.0
        %2215 = vmatprep.subr.mxu0 0.0
        %2216 = vmatpush1.msra.mxu0 0.0
        %2217 = vmatprep.subr.mxu0 0.0
        %2218 = vmatpush1.msra.mxu0 0.0
        %2219 = vmatprep.subr.mxu0 0.0
        %2220 = vmatpush1.msra.mxu0 0.0
        %2221 = vmatprep.subr.mxu0 0.0
        %2222 = vmatpush1.msra.mxu0 0.0
        %2223 = vmatprep.subr.mxu0 0.0
        %2224 = vmatpush1.msra.mxu0 %v608
        %2225 = vmatprep.subr.mxu0 0.0
        %2226 = vmatpush2.msra.mxu0 0.0
        %2227 = vmatprep.subr.mxu0 0.0
        %2228 = vmatpush2.msra.mxu0 0.0
        %2229 = vmatprep.subr.mxu0 0.0
        %2230 = vmatpush2.msra.mxu0 0.0
        %2231 = vmatprep.subr.mxu0 0.0
        %2232 = vmatpush2.msra.mxu0 0.0
        %2233 = vmatprep.subr.mxu0 0.0
        %2234 = vmatpush2.msra.mxu0 0.0
        %2235 = vmatprep.subr.mxu0 0.0
        %2236 = vmatpush2.msra.mxu0 0.0
        %2237 = vmatprep.subr.mxu0 0.0
        %2238 = vmatpush2.msra.mxu0 0.0
        %2239 = vmatprep.subr.mxu0 0.0
        %2240 = vmatpush2.msra.mxu0 0.0
        %2241 = vmatprep.subr.mxu0 0.0
        %2242 = vmatpush2.msra.mxu0 0.0
        %2243 = vmatprep.subr.mxu0 0.0
        %2244 = vmatpush2.msra.mxu0 0.0
        %2245 = vmatprep.subr.mxu0 0.0
        %2246 = vmatpush2.msra.mxu0 0.0
        %2247 = vmatprep.subr.mxu0 0.0
        %2248 = vmatpush2.msra.mxu0 0.0
        %2249 = vmatprep.subr.mxu0 0.0
        %2250 = vmatpush2.msra.mxu0 0.0
        %2251 = vmatprep.subr.mxu0 0.0
        %2252 = vmatpush2.msra.mxu0 0.0
        %2253 = vmatprep.subr.mxu0 0.0
        %2254 = vmatpush2.msra.mxu0 0.0
        %2255 = vmatprep.subr.mxu0 0.0
        %2256 = vmatpush2.msra.mxu0 0.0
        %2257 = vmatprep.mubr.f32.mxu0 0.0
        %2258 = vmatmul.mubr.f32.gmra.mxu0 %v2191
        %v2259 = vpop.f32.mrf.mxu0
        %v2260 = vadd.f32 %v2186, %v2259
        %v2261 = vpop.f32.mrf.mxu0
        %2262 = vdwg.mxu0
        %v2263 = vadd.f32 %v2260, %v763
        %v2264 = vmax.f32 %v2263, 0.0
        %2265 = vrot.lane.b32.xlu0 %v768, 88
        %v2266 = vpop.permute.xlu0 %2265
        %v2267 = vsel %vm615, %v2266, 0
        %2269 = vmatprep.subr.mxu0 0.0
        %2270 = vmatpush1.msra.mxu0 0.0
        %2271 = vmatprep.subr.mxu0 0.0
        %2272 = vmatpush1.msra.mxu0 0.0
        %2273 = vmatprep.subr.mxu0 0.0
        %2274 = vmatpush1.msra.mxu0 0.0
        %2275 = vmatprep.subr.mxu0 0.0
        %2276 = vmatpush1.msra.mxu0 0.0
        %2277 = vmatprep.subr.mxu0 0.0
        %2278 = vmatpush1.msra.mxu0 0.0
        %2279 = vmatprep.subr.mxu0 0.0
        %2280 = vmatpush1.msra.mxu0 0.0
        %2281 = vmatprep.subr.mxu0 0.0
        %2282 = vmatpush1.msra.mxu0 0.0
        %2283 = vmatprep.subr.mxu0 0.0
        %2284 = vmatpush1.msra.mxu0 0.0
        %2285 = vmatprep.subr.mxu0 0.0
        %2286 = vmatpush1.msra.mxu0 0.0
        %2287 = vmatprep.subr.mxu0 0.0
        %2288 = vmatpush1.msra.mxu0 0.0
        %2289 = vmatprep.subr.mxu0 0.0
        %2290 = vmatpush1.msra.mxu0 0.0
        %2291 = vmatprep.subr.mxu0 0.0
        %2292 = vmatpush1.msra.mxu0 0.0
        %2293 = vmatprep.subr.mxu0 0.0
        %2294 = vmatpush1.msra.mxu0 0.0
        %2295 = vmatprep.subr.mxu0 0.0
        %2296 = vmatpush1.msra.mxu0 0.0
        %2297 = vmatprep.subr.mxu0 0.0
        %2298 = vmatpush1.msra.mxu0 0.0
        %2299 = vmatprep.subr.mxu0 0.0
        %2300 = vmatpush1.msra.mxu0 %v612
        %2301 = vmatprep.subr.mxu0 0.0
        %2302 = vmatpush2.msra.mxu0 0.0
        %2303 = vmatprep.subr.mxu0 0.0
        %2304 = vmatpush2.msra.mxu0 0.0
        %2305 = vmatprep.subr.mxu0 0.0
        %2306 = vmatpush2.msra.mxu0 0.0
        %2307 = vmatprep.subr.mxu0 0.0
        %2308 = vmatpush2.msra.mxu0 0.0
        %2309 = vmatprep.subr.mxu0 0.0
        %2310 = vmatpush2.msra.mxu0 0.0
        %2311 = vmatprep.subr.mxu0 0.0
        %2312 = vmatpush2.msra.mxu0 0.0
        %2313 = vmatprep.subr.mxu0 0.0
        %2314 = vmatpush2.msra.mxu0 0.0
        %2315 = vmatprep.subr.mxu0 0.0
        %2316 = vmatpush2.msra.mxu0 0.0
        %2317 = vmatprep.subr.mxu0 0.0
        %2318 = vmatpush2.msra.mxu0 0.0
        %2319 = vmatprep.subr.mxu0 0.0
        %2320 = vmatpush2.msra.mxu0 0.0
        %2321 = vmatprep.subr.mxu0 0.0
        %2322 = vmatpush2.msra.mxu0 0.0
        %2323 = vmatprep.subr.mxu0 0.0
        %2324 = vmatpush2.msra.mxu0 0.0
        %2325 = vmatprep.subr.mxu0 0.0
        %2326 = vmatpush2.msra.mxu0 0.0
        %2327 = vmatprep.subr.mxu0 0.0
        %2328 = vmatpush2.msra.mxu0 0.0
        %2329 = vmatprep.subr.mxu0 0.0
        %2330 = vmatpush2.msra.mxu0 0.0
        %2331 = vmatprep.subr.mxu0 0.0
        %2332 = vmatpush2.msra.mxu0 0.0
        %2333 = vmatprep.mubr.f32.mxu0 0.0
        %2334 = vmatmul.mubr.f32.gmra.mxu0 %v2267
        %v2335 = vpop.f32.mrf.mxu0
        %v2336 = vadd.f32 0.0, %v2335
        %v2337 = vpop.f32.mrf.mxu0
        %2338 = vdwg.mxu0
        %2339 = vrot.lane.b32.xlu0 %v600, 88
        %v2340 = vpop.permute.xlu0 %2339
        %v2341 = vsel %vm615, %v2340, 0
        %2343 = vmatprep.subr.mxu0 0.0
        %2344 = vmatpush1.msra.mxu0 0.0
        %2345 = vmatprep.subr.mxu0 0.0
        %2346 = vmatpush1.msra.mxu0 0.0
        %2347 = vmatprep.subr.mxu0 0.0
        %2348 = vmatpush1.msra.mxu0 0.0
        %2349 = vmatprep.subr.mxu0 0.0
        %2350 = vmatpush1.msra.mxu0 0.0
        %2351 = vmatprep.subr.mxu0 0.0
        %2352 = vmatpush1.msra.mxu0 0.0
        %2353 = vmatprep.subr.mxu0 0.0
        %2354 = vmatpush1.msra.mxu0 0.0
        %2355 = vmatprep.subr.mxu0 0.0
        %2356 = vmatpush1.msra.mxu0 0.0
        %2357 = vmatprep.subr.mxu0 0.0
        %2358 = vmatpush1.msra.mxu0 0.0
        %2359 = vmatprep.subr.mxu0 0.0
        %2360 = vmatpush1.msra.mxu0 0.0
        %2361 = vmatprep.subr.mxu0 0.0
        %2362 = vmatpush1.msra.mxu0 0.0
        %2363 = vmatprep.subr.mxu0 0.0
        %2364 = vmatpush1.msra.mxu0 0.0
        %2365 = vmatprep.subr.mxu0 0.0
        %2366 = vmatpush1.msra.mxu0 0.0
        %2367 = vmatprep.subr.mxu0 0.0
        %2368 = vmatpush1.msra.mxu0 0.0
        %2369 = vmatprep.subr.mxu0 0.0
        %2370 = vmatpush1.msra.mxu0 0.0
        %2371 = vmatprep.subr.mxu0 0.0
        %2372 = vmatpush1.msra.mxu0 0.0
        %2373 = vmatprep.subr.mxu0 0.0
        %2374 = vmatpush1.msra.mxu0 %v608
        %2375 = vmatprep.subr.mxu0 0.0
        %2376 = vmatpush2.msra.mxu0 0.0
        %2377 = vmatprep.subr.mxu0 0.0
        %2378 = vmatpush2.msra.mxu0 0.0
        %2379 = vmatprep.subr.mxu0 0.0
        %2380 = vmatpush2.msra.mxu0 0.0
        %2381 = vmatprep.subr.mxu0 0.0
        %2382 = vmatpush2.msra.mxu0 0.0
        %2383 = vmatprep.subr.mxu0 0.0
        %2384 = vmatpush2.msra.mxu0 0.0
        %2385 = vmatprep.subr.mxu0 0.0
        %2386 = vmatpush2.msra.mxu0 0.0
        %2387 = vmatprep.subr.mxu0 0.0
        %2388 = vmatpush2.msra.mxu0 0.0
        %2389 = vmatprep.subr.mxu0 0.0
        %2390 = vmatpush2.msra.mxu0 0.0
        %2391 = vmatprep.subr.mxu0 0.0
        %2392 = vmatpush2.msra.mxu0 0.0
        %2393 = vmatprep.subr.mxu0 0.0
        %2394 = vmatpush2.msra.mxu0 0.0
        %2395 = vmatprep.subr.mxu0 0.0
        %2396 = vmatpush2.msra.mxu0 0.0
        %2397 = vmatprep.subr.mxu0 0.0
        %2398 = vmatpush2.msra.mxu0 0.0
        %2399 = vmatprep.subr.mxu0 0.0
        %2400 = vmatpush2.msra.mxu0 0.0
        %2401 = vmatprep.subr.mxu0 0.0
        %2402 = vmatpush2.msra.mxu0 0.0
        %2403 = vmatprep.subr.mxu0 0.0
        %2404 = vmatpush2.msra.mxu0 0.0
        %2405 = vmatprep.subr.mxu0 0.0
        %2406 = vmatpush2.msra.mxu0 0.0
        %2407 = vmatprep.mubr.f32.mxu0 0.0
        %2408 = vmatmul.mubr.f32.gmra.mxu0 %v2341
        %v2409 = vpop.f32.mrf.mxu0
        %v2410 = vadd.f32 %v2336, %v2409
        %v2411 = vpop.f32.mrf.mxu0
        %2412 = vdwg.mxu0
        %v2413 = vadd.f32 %v2410, %v763
        %v2414 = vmax.f32 %v2413, 0.0
        %2415 = vrot.lane.b32.xlu0 %v614, 80
        %v2416 = vpop.permute.xlu0 %2415
        %v2417 = vsel %vm615, %v2416, 0
        %2419 = vmatprep.subr.mxu0 0.0
        %2420 = vmatpush1.msra.mxu0 0.0
        %2421 = vmatprep.subr.mxu0 0.0
        %2422 = vmatpush1.msra.mxu0 0.0
        %2423 = vmatprep.subr.mxu0 0.0
        %2424 = vmatpush1.msra.mxu0 0.0
        %2425 = vmatprep.subr.mxu0 0.0
        %2426 = vmatpush1.msra.mxu0 0.0
        %2427 = vmatprep.subr.mxu0 0.0
        %2428 = vmatpush1.msra.mxu0 0.0
        %2429 = vmatprep.subr.mxu0 0.0
        %2430 = vmatpush1.msra.mxu0 0.0
        %2431 = vmatprep.subr.mxu0 0.0
        %2432 = vmatpush1.msra.mxu0 0.0
        %2433 = vmatprep.subr.mxu0 0.0
        %2434 = vmatpush1.msra.mxu0 0.0
        %2435 = vmatprep.subr.mxu0 0.0
        %2436 = vmatpush1.msra.mxu0 0.0
        %2437 = vmatprep.subr.mxu0 0.0
        %2438 = vmatpush1.msra.mxu0 0.0
        %2439 = vmatprep.subr.mxu0 0.0
        %2440 = vmatpush1.msra.mxu0 0.0
        %2441 = vmatprep.subr.mxu0 0.0
        %2442 = vmatpush1.msra.mxu0 0.0
        %2443 = vmatprep.subr.mxu0 0.0
        %2444 = vmatpush1.msra.mxu0 0.0
        %2445 = vmatprep.subr.mxu0 0.0
        %2446 = vmatpush1.msra.mxu0 0.0
        %2447 = vmatprep.subr.mxu0 0.0
        %2448 = vmatpush1.msra.mxu0 0.0
        %2449 = vmatprep.subr.mxu0 0.0
        %2450 = vmatpush1.msra.mxu0 %v612
        %2451 = vmatprep.subr.mxu0 0.0
        %2452 = vmatpush2.msra.mxu0 0.0
        %2453 = vmatprep.subr.mxu0 0.0
        %2454 = vmatpush2.msra.mxu0 0.0
        %2455 = vmatprep.subr.mxu0 0.0
        %2456 = vmatpush2.msra.mxu0 0.0
        %2457 = vmatprep.subr.mxu0 0.0
        %2458 = vmatpush2.msra.mxu0 0.0
        %2459 = vmatprep.subr.mxu0 0.0
        %2460 = vmatpush2.msra.mxu0 0.0
        %2461 = vmatprep.subr.mxu0 0.0
        %2462 = vmatpush2.msra.mxu0 0.0
        %2463 = vmatprep.subr.mxu0 0.0
        %2464 = vmatpush2.msra.mxu0 0.0
        %2465 = vmatprep.subr.mxu0 0.0
        %2466 = vmatpush2.msra.mxu0 0.0
        %2467 = vmatprep.subr.mxu0 0.0
        %2468 = vmatpush2.msra.mxu0 0.0
        %2469 = vmatprep.subr.mxu0 0.0
        %2470 = vmatpush2.msra.mxu0 0.0
        %2471 = vmatprep.subr.mxu0 0.0
        %2472 = vmatpush2.msra.mxu0 0.0
        %2473 = vmatprep.subr.mxu0 0.0
        %2474 = vmatpush2.msra.mxu0 0.0
        %2475 = vmatprep.subr.mxu0 0.0
        %2476 = vmatpush2.msra.mxu0 0.0
        %2477 = vmatprep.subr.mxu0 0.0
        %2478 = vmatpush2.msra.mxu0 0.0
        %2479 = vmatprep.subr.mxu0 0.0
        %2480 = vmatpush2.msra.mxu0 0.0
        %2481 = vmatprep.subr.mxu0 0.0
        %2482 = vmatpush2.msra.mxu0 0.0
        %2483 = vmatprep.mubr.f32.mxu0 0.0
        %2484 = vmatmul.mubr.f32.gmra.mxu0 %v2417
        %v2485 = vpop.f32.mrf.mxu0
        %v2486 = vadd.f32 0.0, %v2485
        %v2487 = vpop.f32.mrf.mxu0
        %2488 = vdwg.mxu0
        %2489 = vrot.lane.b32.xlu0 %v599, 80
        %v2490 = vpop.permute.xlu0 %2489
        %v2491 = vsel %vm615, %v2490, 0
        %2493 = vmatprep.subr.mxu0 0.0
        %2494 = vmatpush1.msra.mxu0 0.0
        %2495 = vmatprep.subr.mxu0 0.0
        %2496 = vmatpush1.msra.mxu0 0.0
        %2497 = vmatprep.subr.mxu0 0.0
        %2498 = vmatpush1.msra.mxu0 0.0
        %2499 = vmatprep.subr.mxu0 0.0
        %2500 = vmatpush1.msra.mxu0 0.0
        %2501 = vmatprep.subr.mxu0 0.0
        %2502 = vmatpush1.msra.mxu0 0.0
        %2503 = vmatprep.subr.mxu0 0.0
        %2504 = vmatpush1.msra.mxu0 0.0
        %2505 = vmatprep.subr.mxu0 0.0
        %2506 = vmatpush1.msra.mxu0 0.0
        %2507 = vmatprep.subr.mxu0 0.0
        %2508 = vmatpush1.msra.mxu0 0.0
        %2509 = vmatprep.subr.mxu0 0.0
        %2510 = vmatpush1.msra.mxu0 0.0
        %2511 = vmatprep.subr.mxu0 0.0
        %2512 = vmatpush1.msra.mxu0 0.0
        %2513 = vmatprep.subr.mxu0 0.0
        %2514 = vmatpush1.msra.mxu0 0.0
        %2515 = vmatprep.subr.mxu0 0.0
        %2516 = vmatpush1.msra.mxu0 0.0
        %2517 = vmatprep.subr.mxu0 0.0
        %2518 = vmatpush1.msra.mxu0 0.0
        %2519 = vmatprep.subr.mxu0 0.0
        %2520 = vmatpush1.msra.mxu0 0.0
        %2521 = vmatprep.subr.mxu0 0.0
        %2522 = vmatpush1.msra.mxu0 0.0
        %2523 = vmatprep.subr.mxu0 0.0
        %2524 = vmatpush1.msra.mxu0 %v608
        %2525 = vmatprep.subr.mxu0 0.0
        %2526 = vmatpush2.msra.mxu0 0.0
        %2527 = vmatprep.subr.mxu0 0.0
        %2528 = vmatpush2.msra.mxu0 0.0
        %2529 = vmatprep.subr.mxu0 0.0
        %2530 = vmatpush2.msra.mxu0 0.0
        %2531 = vmatprep.subr.mxu0 0.0
        %2532 = vmatpush2.msra.mxu0 0.0
        %2533 = vmatprep.subr.mxu0 0.0
        %2534 = vmatpush2.msra.mxu0 0.0
        %2535 = vmatprep.subr.mxu0 0.0
        %2536 = vmatpush2.msra.mxu0 0.0
        %2537 = vmatprep.subr.mxu0 0.0
        %2538 = vmatpush2.msra.mxu0 0.0
        %2539 = vmatprep.subr.mxu0 0.0
        %2540 = vmatpush2.msra.mxu0 0.0
        %2541 = vmatprep.subr.mxu0 0.0
        %2542 = vmatpush2.msra.mxu0 0.0
        %2543 = vmatprep.subr.mxu0 0.0
        %2544 = vmatpush2.msra.mxu0 0.0
        %2545 = vmatprep.subr.mxu0 0.0
        %2546 = vmatpush2.msra.mxu0 0.0
        %2547 = vmatprep.subr.mxu0 0.0
        %2548 = vmatpush2.msra.mxu0 0.0
        %2549 = vmatprep.subr.mxu0 0.0
        %2550 = vmatpush2.msra.mxu0 0.0
        %2551 = vmatprep.subr.mxu0 0.0
        %2552 = vmatpush2.msra.mxu0 0.0
        %2553 = vmatprep.subr.mxu0 0.0
        %2554 = vmatpush2.msra.mxu0 0.0
        %2555 = vmatprep.subr.mxu0 0.0
        %2556 = vmatpush2.msra.mxu0 0.0
        %2557 = vmatprep.mubr.f32.mxu0 0.0
        %2558 = vmatmul.mubr.f32.gmra.mxu0 %v2491
        %v2559 = vpop.f32.mrf.mxu0
        %v2560 = vadd.f32 %v2486, %v2559
        %v2561 = vpop.f32.mrf.mxu0
        %2562 = vdwg.mxu0
        %v2563 = vadd.f32 %v2560, %v763
        %v2564 = vmax.f32 %v2563, 0.0
        %2565 = vrot.lane.b32.xlu0 %v768, 80
        %v2566 = vpop.permute.xlu0 %2565
        %v2567 = vsel %vm615, %v2566, 0
        %2569 = vmatprep.subr.mxu0 0.0
        %2570 = vmatpush1.msra.mxu0 0.0
        %2571 = vmatprep.subr.mxu0 0.0
        %2572 = vmatpush1.msra.mxu0 0.0
        %2573 = vmatprep.subr.mxu0 0.0
        %2574 = vmatpush1.msra.mxu0 0.0
        %2575 = vmatprep.subr.mxu0 0.0
        %2576 = vmatpush1.msra.mxu0 0.0
        %2577 = vmatprep.subr.mxu0 0.0
        %2578 = vmatpush1.msra.mxu0 0.0
        %2579 = vmatprep.subr.mxu0 0.0
        %2580 = vmatpush1.msra.mxu0 0.0
        %2581 = vmatprep.subr.mxu0 0.0
        %2582 = vmatpush1.msra.mxu0 0.0
        %2583 = vmatprep.subr.mxu0 0.0
        %2584 = vmatpush1.msra.mxu0 0.0
        %2585 = vmatprep.subr.mxu0 0.0
        %2586 = vmatpush1.msra.mxu0 0.0
        %2587 = vmatprep.subr.mxu0 0.0
        %2588 = vmatpush1.msra.mxu0 0.0
        %2589 = vmatprep.subr.mxu0 0.0
        %2590 = vmatpush1.msra.mxu0 0.0
        %2591 = vmatprep.subr.mxu0 0.0
        %2592 = vmatpush1.msra.mxu0 0.0
        %2593 = vmatprep.subr.mxu0 0.0
        %2594 = vmatpush1.msra.mxu0 0.0
        %2595 = vmatprep.subr.mxu0 0.0
        %2596 = vmatpush1.msra.mxu0 0.0
        %2597 = vmatprep.subr.mxu0 0.0
        %2598 = vmatpush1.msra.mxu0 0.0
        %2599 = vmatprep.subr.mxu0 0.0
        %2600 = vmatpush1.msra.mxu0 %v612
        %2601 = vmatprep.subr.mxu0 0.0
        %2602 = vmatpush2.msra.mxu0 0.0
        %2603 = vmatprep.subr.mxu0 0.0
        %2604 = vmatpush2.msra.mxu0 0.0
        %2605 = vmatprep.subr.mxu0 0.0
        %2606 = vmatpush2.msra.mxu0 0.0
        %2607 = vmatprep.subr.mxu0 0.0
        %2608 = vmatpush2.msra.mxu0 0.0
        %2609 = vmatprep.subr.mxu0 0.0
        %2610 = vmatpush2.msra.mxu0 0.0
        %2611 = vmatprep.subr.mxu0 0.0
        %2612 = vmatpush2.msra.mxu0 0.0
        %2613 = vmatprep.subr.mxu0 0.0
        %2614 = vmatpush2.msra.mxu0 0.0
        %2615 = vmatprep.subr.mxu0 0.0
        %2616 = vmatpush2.msra.mxu0 0.0
        %2617 = vmatprep.subr.mxu0 0.0
        %2618 = vmatpush2.msra.mxu0 0.0
        %2619 = vmatprep.subr.mxu0 0.0
        %2620 = vmatpush2.msra.mxu0 0.0
        %2621 = vmatprep.subr.mxu0 0.0
        %2622 = vmatpush2.msra.mxu0 0.0
        %2623 = vmatprep.subr.mxu0 0.0
        %2624 = vmatpush2.msra.mxu0 0.0
        %2625 = vmatprep.subr.mxu0 0.0
        %2626 = vmatpush2.msra.mxu0 0.0
        %2627 = vmatprep.subr.mxu0 0.0
        %2628 = vmatpush2.msra.mxu0 0.0
        %2629 = vmatprep.subr.mxu0 0.0
        %2630 = vmatpush2.msra.mxu0 0.0
        %2631 = vmatprep.subr.mxu0 0.0
        %2632 = vmatpush2.msra.mxu0 0.0
        %2633 = vmatprep.mubr.f32.mxu0 0.0
        %2634 = vmatmul.mubr.f32.gmra.mxu0 %v2567
        %v2635 = vpop.f32.mrf.mxu0
        %v2636 = vadd.f32 0.0, %v2635
        %v2637 = vpop.f32.mrf.mxu0
        %2638 = vdwg.mxu0
        %2639 = vrot.lane.b32.xlu0 %v600, 80
        %v2640 = vpop.permute.xlu0 %2639
        %v2641 = vsel %vm615, %v2640, 0
        %2643 = vmatprep.subr.mxu0 0.0
        %2644 = vmatpush1.msra.mxu0 0.0
        %2645 = vmatprep.subr.mxu0 0.0
        %2646 = vmatpush1.msra.mxu0 0.0
        %2647 = vmatprep.subr.mxu0 0.0
        %2648 = vmatpush1.msra.mxu0 0.0
        %2649 = vmatprep.subr.mxu0 0.0
        %2650 = vmatpush1.msra.mxu0 0.0
        %2651 = vmatprep.subr.mxu0 0.0
        %2652 = vmatpush1.msra.mxu0 0.0
        %2653 = vmatprep.subr.mxu0 0.0
        %2654 = vmatpush1.msra.mxu0 0.0
        %2655 = vmatprep.subr.mxu0 0.0
        %2656 = vmatpush1.msra.mxu0 0.0
        %2657 = vmatprep.subr.mxu0 0.0
        %2658 = vmatpush1.msra.mxu0 0.0
        %2659 = vmatprep.subr.mxu0 0.0
        %2660 = vmatpush1.msra.mxu0 0.0
        %2661 = vmatprep.subr.mxu0 0.0
        %2662 = vmatpush1.msra.mxu0 0.0
        %2663 = vmatprep.subr.mxu0 0.0
        %2664 = vmatpush1.msra.mxu0 0.0
        %2665 = vmatprep.subr.mxu0 0.0
        %2666 = vmatpush1.msra.mxu0 0.0
        %2667 = vmatprep.subr.mxu0 0.0
        %2668 = vmatpush1.msra.mxu0 0.0
        %2669 = vmatprep.subr.mxu0 0.0
        %2670 = vmatpush1.msra.mxu0 0.0
        %2671 = vmatprep.subr.mxu0 0.0
        %2672 = vmatpush1.msra.mxu0 0.0
        %2673 = vmatprep.subr.mxu0 0.0
        %2674 = vmatpush1.msra.mxu0 %v608
        %2675 = vmatprep.subr.mxu0 0.0
        %2676 = vmatpush2.msra.mxu0 0.0
        %2677 = vmatprep.subr.mxu0 0.0
        %2678 = vmatpush2.msra.mxu0 0.0
        %2679 = vmatprep.subr.mxu0 0.0
        %2680 = vmatpush2.msra.mxu0 0.0
        %2681 = vmatprep.subr.mxu0 0.0
        %2682 = vmatpush2.msra.mxu0 0.0
        %2683 = vmatprep.subr.mxu0 0.0
        %2684 = vmatpush2.msra.mxu0 0.0
        %2685 = vmatprep.subr.mxu0 0.0
        %2686 = vmatpush2.msra.mxu0 0.0
        %2687 = vmatprep.subr.mxu0 0.0
        %2688 = vmatpush2.msra.mxu0 0.0
        %2689 = vmatprep.subr.mxu0 0.0
        %2690 = vmatpush2.msra.mxu0 0.0
        %2691 = vmatprep.subr.mxu0 0.0
        %2692 = vmatpush2.msra.mxu0 0.0
        %2693 = vmatprep.subr.mxu0 0.0
        %2694 = vmatpush2.msra.mxu0 0.0
        %2695 = vmatprep.subr.mxu0 0.0
        %2696 = vmatpush2.msra.mxu0 0.0
        %2697 = vmatprep.subr.mxu0 0.0
        %2698 = vmatpush2.msra.mxu0 0.0
        %2699 = vmatprep.subr.mxu0 0.0
        %2700 = vmatpush2.msra.mxu0 0.0
        %2701 = vmatprep.subr.mxu0 0.0
        %2702 = vmatpush2.msra.mxu0 0.0
        %2703 = vmatprep.subr.mxu0 0.0
        %2704 = vmatpush2.msra.mxu0 0.0
        %2705 = vmatprep.subr.mxu0 0.0
        %2706 = vmatpush2.msra.mxu0 0.0
        %2707 = vmatprep.mubr.f32.mxu0 0.0
        %2708 = vmatmul.mubr.f32.gmra.mxu0 %v2641
        %v2709 = vpop.f32.mrf.mxu0
        %v2710 = vadd.f32 %v2636, %v2709
        %v2711 = vpop.f32.mrf.mxu0
        %2712 = vdwg.mxu0
        %v2713 = vadd.f32 %v2710, %v763
        %v2714 = vmax.f32 %v2713, 0.0
        %2715 = vrot.lane.b32.xlu0 %v614, 72
        %v2716 = vpop.permute.xlu0 %2715
        %v2717 = vsel %vm615, %v2716, 0
        %2719 = vmatprep.subr.mxu0 0.0
        %2720 = vmatpush1.msra.mxu0 0.0
        %2721 = vmatprep.subr.mxu0 0.0
        %2722 = vmatpush1.msra.mxu0 0.0
        %2723 = vmatprep.subr.mxu0 0.0
        %2724 = vmatpush1.msra.mxu0 0.0
        %2725 = vmatprep.subr.mxu0 0.0
        %2726 = vmatpush1.msra.mxu0 0.0
        %2727 = vmatprep.subr.mxu0 0.0
        %2728 = vmatpush1.msra.mxu0 0.0
        %2729 = vmatprep.subr.mxu0 0.0
        %2730 = vmatpush1.msra.mxu0 0.0
        %2731 = vmatprep.subr.mxu0 0.0
        %2732 = vmatpush1.msra.mxu0 0.0
        %2733 = vmatprep.subr.mxu0 0.0
        %2734 = vmatpush1.msra.mxu0 0.0
        %2735 = vmatprep.subr.mxu0 0.0
        %2736 = vmatpush1.msra.mxu0 0.0
        %2737 = vmatprep.subr.mxu0 0.0
        %2738 = vmatpush1.msra.mxu0 0.0
        %2739 = vmatprep.subr.mxu0 0.0
        %2740 = vmatpush1.msra.mxu0 0.0
        %2741 = vmatprep.subr.mxu0 0.0
        %2742 = vmatpush1.msra.mxu0 0.0
        %2743 = vmatprep.subr.mxu0 0.0
        %2744 = vmatpush1.msra.mxu0 0.0
        %2745 = vmatprep.subr.mxu0 0.0
        %2746 = vmatpush1.msra.mxu0 0.0
        %2747 = vmatprep.subr.mxu0 0.0
        %2748 = vmatpush1.msra.mxu0 0.0
        %2749 = vmatprep.subr.mxu0 0.0
        %2750 = vmatpush1.msra.mxu0 %v612
        %2751 = vmatprep.subr.mxu0 0.0
        %2752 = vmatpush2.msra.mxu0 0.0
        %2753 = vmatprep.subr.mxu0 0.0
        %2754 = vmatpush2.msra.mxu0 0.0
        %2755 = vmatprep.subr.mxu0 0.0
        %2756 = vmatpush2.msra.mxu0 0.0
        %2757 = vmatprep.subr.mxu0 0.0
        %2758 = vmatpush2.msra.mxu0 0.0
        %2759 = vmatprep.subr.mxu0 0.0
        %2760 = vmatpush2.msra.mxu0 0.0
        %2761 = vmatprep.subr.mxu0 0.0
        %2762 = vmatpush2.msra.mxu0 0.0
        %2763 = vmatprep.subr.mxu0 0.0
        %2764 = vmatpush2.msra.mxu0 0.0
        %2765 = vmatprep.subr.mxu0 0.0
        %2766 = vmatpush2.msra.mxu0 0.0
        %2767 = vmatprep.subr.mxu0 0.0
        %2768 = vmatpush2.msra.mxu0 0.0
        %2769 = vmatprep.subr.mxu0 0.0
        %2770 = vmatpush2.msra.mxu0 0.0
        %2771 = vmatprep.subr.mxu0 0.0
        %2772 = vmatpush2.msra.mxu0 0.0
        %2773 = vmatprep.subr.mxu0 0.0
        %2774 = vmatpush2.msra.mxu0 0.0
        %2775 = vmatprep.subr.mxu0 0.0
        %2776 = vmatpush2.msra.mxu0 0.0
        %2777 = vmatprep.subr.mxu0 0.0
        %2778 = vmatpush2.msra.mxu0 0.0
        %2779 = vmatprep.subr.mxu0 0.0
        %2780 = vmatpush2.msra.mxu0 0.0
        %2781 = vmatprep.subr.mxu0 0.0
        %2782 = vmatpush2.msra.mxu0 0.0
        %2783 = vmatprep.mubr.f32.mxu0 0.0
        %2784 = vmatmul.mubr.f32.gmra.mxu0 %v2717
        %v2785 = vpop.f32.mrf.mxu0
        %v2786 = vadd.f32 0.0, %v2785
        %v2787 = vpop.f32.mrf.mxu0
        %2788 = vdwg.mxu0
        %2789 = vrot.lane.b32.xlu0 %v599, 72
        %v2790 = vpop.permute.xlu0 %2789
        %v2791 = vsel %vm615, %v2790, 0
        %2793 = vmatprep.subr.mxu0 0.0
        %2794 = vmatpush1.msra.mxu0 0.0
        %2795 = vmatprep.subr.mxu0 0.0
        %2796 = vmatpush1.msra.mxu0 0.0
        %2797 = vmatprep.subr.mxu0 0.0
        %2798 = vmatpush1.msra.mxu0 0.0
        %2799 = vmatprep.subr.mxu0 0.0
        %2800 = vmatpush1.msra.mxu0 0.0
        %2801 = vmatprep.subr.mxu0 0.0
        %2802 = vmatpush1.msra.mxu0 0.0
        %2803 = vmatprep.subr.mxu0 0.0
        %2804 = vmatpush1.msra.mxu0 0.0
        %2805 = vmatprep.subr.mxu0 0.0
        %2806 = vmatpush1.msra.mxu0 0.0
        %2807 = vmatprep.subr.mxu0 0.0
        %2808 = vmatpush1.msra.mxu0 0.0
        %2809 = vmatprep.subr.mxu0 0.0
        %2810 = vmatpush1.msra.mxu0 0.0
        %2811 = vmatprep.subr.mxu0 0.0
        %2812 = vmatpush1.msra.mxu0 0.0
        %2813 = vmatprep.subr.mxu0 0.0
        %2814 = vmatpush1.msra.mxu0 0.0
        %2815 = vmatprep.subr.mxu0 0.0
        %2816 = vmatpush1.msra.mxu0 0.0
        %2817 = vmatprep.subr.mxu0 0.0
        %2818 = vmatpush1.msra.mxu0 0.0
        %2819 = vmatprep.subr.mxu0 0.0
        %2820 = vmatpush1.msra.mxu0 0.0
        %2821 = vmatprep.subr.mxu0 0.0
        %2822 = vmatpush1.msra.mxu0 0.0
        %2823 = vmatprep.subr.mxu0 0.0
        %2824 = vmatpush1.msra.mxu0 %v608
        %2825 = vmatprep.subr.mxu0 0.0
        %2826 = vmatpush2.msra.mxu0 0.0
        %2827 = vmatprep.subr.mxu0 0.0
        %2828 = vmatpush2.msra.mxu0 0.0
        %2829 = vmatprep.subr.mxu0 0.0
        %2830 = vmatpush2.msra.mxu0 0.0
        %2831 = vmatprep.subr.mxu0 0.0
        %2832 = vmatpush2.msra.mxu0 0.0
        %2833 = vmatprep.subr.mxu0 0.0
        %2834 = vmatpush2.msra.mxu0 0.0
        %2835 = vmatprep.subr.mxu0 0.0
        %2836 = vmatpush2.msra.mxu0 0.0
        %2837 = vmatprep.subr.mxu0 0.0
        %2838 = vmatpush2.msra.mxu0 0.0
        %2839 = vmatprep.subr.mxu0 0.0
        %2840 = vmatpush2.msra.mxu0 0.0
        %2841 = vmatprep.subr.mxu0 0.0
        %2842 = vmatpush2.msra.mxu0 0.0
        %2843 = vmatprep.subr.mxu0 0.0
        %2844 = vmatpush2.msra.mxu0 0.0
        %2845 = vmatprep.subr.mxu0 0.0
        %2846 = vmatpush2.msra.mxu0 0.0
        %2847 = vmatprep.subr.mxu0 0.0
        %2848 = vmatpush2.msra.mxu0 0.0
        %2849 = vmatprep.subr.mxu0 0.0
        %2850 = vmatpush2.msra.mxu0 0.0
        %2851 = vmatprep.subr.mxu0 0.0
        %2852 = vmatpush2.msra.mxu0 0.0
        %2853 = vmatprep.subr.mxu0 0.0
        %2854 = vmatpush2.msra.mxu0 0.0
        %2855 = vmatprep.subr.mxu0 0.0
        %2856 = vmatpush2.msra.mxu0 0.0
        %2857 = vmatprep.mubr.f32.mxu0 0.0
        %2858 = vmatmul.mubr.f32.gmra.mxu0 %v2791
        %v2859 = vpop.f32.mrf.mxu0
        %v2860 = vadd.f32 %v2786, %v2859
        %v2861 = vpop.f32.mrf.mxu0
        %2862 = vdwg.mxu0
        %v2863 = vadd.f32 %v2860, %v763
        %v2864 = vmax.f32 %v2863, 0.0
        %2865 = vrot.lane.b32.xlu0 %v768, 72
        %v2866 = vpop.permute.xlu0 %2865
        %v2867 = vsel %vm615, %v2866, 0
        %2869 = vmatprep.subr.mxu0 0.0
        %2870 = vmatpush1.msra.mxu0 0.0
        %2871 = vmatprep.subr.mxu0 0.0
        %2872 = vmatpush1.msra.mxu0 0.0
        %2873 = vmatprep.subr.mxu0 0.0
        %2874 = vmatpush1.msra.mxu0 0.0
        %2875 = vmatprep.subr.mxu0 0.0
        %2876 = vmatpush1.msra.mxu0 0.0
        %2877 = vmatprep.subr.mxu0 0.0
        %2878 = vmatpush1.msra.mxu0 0.0
        %2879 = vmatprep.subr.mxu0 0.0
        %2880 = vmatpush1.msra.mxu0 0.0
        %2881 = vmatprep.subr.mxu0 0.0
        %2882 = vmatpush1.msra.mxu0 0.0
        %2883 = vmatprep.subr.mxu0 0.0
        %2884 = vmatpush1.msra.mxu0 0.0
        %2885 = vmatprep.subr.mxu0 0.0
        %2886 = vmatpush1.msra.mxu0 0.0
        %2887 = vmatprep.subr.mxu0 0.0
        %2888 = vmatpush1.msra.mxu0 0.0
        %2889 = vmatprep.subr.mxu0 0.0
        %2890 = vmatpush1.msra.mxu0 0.0
        %2891 = vmatprep.subr.mxu0 0.0
        %2892 = vmatpush1.msra.mxu0 0.0
        %2893 = vmatprep.subr.mxu0 0.0
        %2894 = vmatpush1.msra.mxu0 0.0
        %2895 = vmatprep.subr.mxu0 0.0
        %2896 = vmatpush1.msra.mxu0 0.0
        %2897 = vmatprep.subr.mxu0 0.0
        %2898 = vmatpush1.msra.mxu0 0.0
        %2899 = vmatprep.subr.mxu0 0.0
        %2900 = vmatpush1.msra.mxu0 %v612
        %2901 = vmatprep.subr.mxu0 0.0
        %2902 = vmatpush2.msra.mxu0 0.0
        %2903 = vmatprep.subr.mxu0 0.0
        %2904 = vmatpush2.msra.mxu0 0.0
        %2905 = vmatprep.subr.mxu0 0.0
        %2906 = vmatpush2.msra.mxu0 0.0
        %2907 = vmatprep.subr.mxu0 0.0
        %2908 = vmatpush2.msra.mxu0 0.0
        %2909 = vmatprep.subr.mxu0 0.0
        %2910 = vmatpush2.msra.mxu0 0.0
        %2911 = vmatprep.subr.mxu0 0.0
        %2912 = vmatpush2.msra.mxu0 0.0
        %2913 = vmatprep.subr.mxu0 0.0
        %2914 = vmatpush2.msra.mxu0 0.0
        %2915 = vmatprep.subr.mxu0 0.0
        %2916 = vmatpush2.msra.mxu0 0.0
        %2917 = vmatprep.subr.mxu0 0.0
        %2918 = vmatpush2.msra.mxu0 0.0
        %2919 = vmatprep.subr.mxu0 0.0
        %2920 = vmatpush2.msra.mxu0 0.0
        %2921 = vmatprep.subr.mxu0 0.0
        %2922 = vmatpush2.msra.mxu0 0.0
        %2923 = vmatprep.subr.mxu0 0.0
        %2924 = vmatpush2.msra.mxu0 0.0
        %2925 = vmatprep.subr.mxu0 0.0
        %2926 = vmatpush2.msra.mxu0 0.0
        %2927 = vmatprep.subr.mxu0 0.0
        %2928 = vmatpush2.msra.mxu0 0.0
        %2929 = vmatprep.subr.mxu0 0.0
        %2930 = vmatpush2.msra.mxu0 0.0
        %2931 = vmatprep.subr.mxu0 0.0
        %2932 = vmatpush2.msra.mxu0 0.0
        %2933 = vmatprep.mubr.f32.mxu0 0.0
        %2934 = vmatmul.mubr.f32.gmra.mxu0 %v2867
        %v2935 = vpop.f32.mrf.mxu0
        %v2936 = vadd.f32 0.0, %v2935
        %v2937 = vpop.f32.mrf.mxu0
        %2938 = vdwg.mxu0
        %2939 = vrot.lane.b32.xlu0 %v600, 72
        %v2940 = vpop.permute.xlu0 %2939
        %v2941 = vsel %vm615, %v2940, 0
        %2943 = vmatprep.subr.mxu0 0.0
        %2944 = vmatpush1.msra.mxu0 0.0
        %2945 = vmatprep.subr.mxu0 0.0
        %2946 = vmatpush1.msra.mxu0 0.0
        %2947 = vmatprep.subr.mxu0 0.0
        %2948 = vmatpush1.msra.mxu0 0.0
        %2949 = vmatprep.subr.mxu0 0.0
        %2950 = vmatpush1.msra.mxu0 0.0
        %2951 = vmatprep.subr.mxu0 0.0
        %2952 = vmatpush1.msra.mxu0 0.0
        %2953 = vmatprep.subr.mxu0 0.0
        %2954 = vmatpush1.msra.mxu0 0.0
        %2955 = vmatprep.subr.mxu0 0.0
        %2956 = vmatpush1.msra.mxu0 0.0
        %2957 = vmatprep.subr.mxu0 0.0
        %2958 = vmatpush1.msra.mxu0 0.0
        %2959 = vmatprep.subr.mxu0 0.0
        %2960 = vmatpush1.msra.mxu0 0.0
        %2961 = vmatprep.subr.mxu0 0.0
        %2962 = vmatpush1.msra.mxu0 0.0
        %2963 = vmatprep.subr.mxu0 0.0
        %2964 = vmatpush1.msra.mxu0 0.0
        %2965 = vmatprep.subr.mxu0 0.0
        %2966 = vmatpush1.msra.mxu0 0.0
        %2967 = vmatprep.subr.mxu0 0.0
        %2968 = vmatpush1.msra.mxu0 0.0
        %2969 = vmatprep.subr.mxu0 0.0
        %2970 = vmatpush1.msra.mxu0 0.0
        %2971 = vmatprep.subr.mxu0 0.0
        %2972 = vmatpush1.msra.mxu0 0.0
        %2973 = vmatprep.subr.mxu0 0.0
        %2974 = vmatpush1.msra.mxu0 %v608
        %2975 = vmatprep.subr.mxu0 0.0
        %2976 = vmatpush2.msra.mxu0 0.0
        %2977 = vmatprep.subr.mxu0 0.0
        %2978 = vmatpush2.msra.mxu0 0.0
        %2979 = vmatprep.subr.mxu0 0.0
        %2980 = vmatpush2.msra.mxu0 0.0
        %2981 = vmatprep.subr.mxu0 0.0
        %2982 = vmatpush2.msra.mxu0 0.0
        %2983 = vmatprep.subr.mxu0 0.0
        %2984 = vmatpush2.msra.mxu0 0.0
        %2985 = vmatprep.subr.mxu0 0.0
        %2986 = vmatpush2.msra.mxu0 0.0
        %2987 = vmatprep.subr.mxu0 0.0
        %2988 = vmatpush2.msra.mxu0 0.0
        %2989 = vmatprep.subr.mxu0 0.0
        %2990 = vmatpush2.msra.mxu0 0.0
        %2991 = vmatprep.subr.mxu0 0.0
        %2992 = vmatpush2.msra.mxu0 0.0
        %2993 = vmatprep.subr.mxu0 0.0
        %2994 = vmatpush2.msra.mxu0 0.0
        %2995 = vmatprep.subr.mxu0 0.0
        %2996 = vmatpush2.msra.mxu0 0.0
        %2997 = vmatprep.subr.mxu0 0.0
        %2998 = vmatpush2.msra.mxu0 0.0
        %2999 = vmatprep.subr.mxu0 0.0
        %3000 = vmatpush2.msra.mxu0 0.0
        %3001 = vmatprep.subr.mxu0 0.0
        %3002 = vmatpush2.msra.mxu0 0.0
        %3003 = vmatprep.subr.mxu0 0.0
        %3004 = vmatpush2.msra.mxu0 0.0
        %3005 = vmatprep.subr.mxu0 0.0
        %3006 = vmatpush2.msra.mxu0 0.0
        %3007 = vmatprep.mubr.f32.mxu0 0.0
        %3008 = vmatmul.mubr.f32.gmra.mxu0 %v2941
        %v3009 = vpop.f32.mrf.mxu0
        %v3010 = vadd.f32 %v2936, %v3009
        %v3011 = vpop.f32.mrf.mxu0
        %3012 = vdwg.mxu0
        %v3013 = vadd.f32 %v3010, %v763
        %v3014 = vmax.f32 %v3013, 0.0
        %3016 = vrot.lane.b32.xlu0 %v914, 16
        %v3017 = vpop.permute.xlu0 %3016
        %3020 = vrot.lane.b32.xlu0 %v1064, 32
        %v3021 = vpop.permute.xlu0 %3020
        %3024 = vrot.lane.b32.xlu0 %v1214, 48
        %v3025 = vpop.permute.xlu0 %3024
        %3028 = vrot.lane.b32.xlu0 %v1364, 64
        %v3029 = vpop.permute.xlu0 %3028
        %3032 = vrot.lane.b32.xlu0 %v1514, 80
        %v3033 = vpop.permute.xlu0 %3032
        %3036 = vrot.lane.b32.xlu0 %v1664, 96
        %v3037 = vpop.permute.xlu0 %3036
        %3040 = vrot.lane.b32.xlu0 %v1814, 112
        %v3041 = vpop.permute.xlu0 %3040
        %3044 = vrot.lane.b32.xlu0 %v2114, 16
        %v3045 = vpop.permute.xlu0 %3044
        %3048 = vrot.lane.b32.xlu0 %v2264, 32
        %v3049 = vpop.permute.xlu0 %3048
        %3052 = vrot.lane.b32.xlu0 %v2414, 48
        %v3053 = vpop.permute.xlu0 %3052
        %3056 = vrot.lane.b32.xlu0 %v2564, 64
        %v3057 = vpop.permute.xlu0 %3056
        %3060 = vrot.lane.b32.xlu0 %v2714, 80
        %v3061 = vpop.permute.xlu0 %3060
        %3064 = vrot.lane.b32.xlu0 %v2864, 96
        %v3065 = vpop.permute.xlu0 %3064
        %3068 = vrot.lane.b32.xlu0 %v3014, 112
        %v3069 = vpop.permute.xlu0 %3068
        %vm3071 = vcmask 130048
        %v3072 = vsel %vm3071, %v766, %v3017
        %vm3073 = vcmask 261120
        %v3074 = vsel %vm3073, %v3072, %v3021
        %vm3075 = vcmask 392192
        %v3076 = vsel %vm3075, %v3074, %v3025
        %vm3077 = vcmask 523264
        %v3078 = vsel %vm3077, %v3076, %v3029
        %vm3079 = vcmask 654336
        %v3080 = vsel %vm3079, %v3078, %v3033
        %vm3081 = vcmask 785408
        %v3082 = vsel %vm3081, %v3080, %v3037
        %vm3083 = vcmask 916480
        %v3084 = vsel %vm3083, %v3082, %v3041
        %v3085 = vsel %vm3071, %v1964, %v3045
        %v3086 = vsel %vm3073, %v3085, %v3049
        %v3087 = vsel %vm3075, %v3086, %v3053
        %v3088 = vsel %vm3077, %v3087, %v3057
        %v3089 = vsel %vm3079, %v3088, %v3061
        %v3090 = vsel %vm3081, %v3089, %v3065
        %v3091 = vsel %vm3083, %v3090, %v3069
        %v3094 = vrot.slane %v471, 4
        %v3095 = vrot.slane %v472, 4
        %vm3098 = vcmask 1043456
        %v3099 = vsel %vm3098, %v3084, %v3094
        %v3100 = vsel %vm3098, %v3091, %v3095
        %3101 = vst [vmem:[%s318] sm:$0xff] %v3099
        %3102 = vst [vmem:[%s318 + $0x8] sm:$0xff] %v3100
        %v3103 = vadd.f32 %v3099, %v3100
        %3104 = vadd.xlane.f32.xlu0 %v3103
        %v3105 = vpop.xlane.xlu0 %3104
        %v3106 = vmul.f32 %v3099, %v3099
        %v3107 = vmul.f32 %v3100, %v3100
        %v3108 = vadd.f32 %v3106, %v3107
        %3109 = vadd.xlane.f32.xlu0 %v3108
        %v3110 = vpop.xlane.xlu0 %3109
        %vm3111 = vcmask 7168
        %v3112 = vsel %vm3111, %v3105, %v3110
        %v3113 = vld [vmem:[%s346] sm:$0xff]
        %v3114 = vadd.f32 %v3113, %v3112
        %vm3115 = vcmask 15360
        %3116 = vst.msk [vmem:[%s346] sm:$0xff] %vm3115, %v3114
        %s3117 = sand.u32 %s184, 1
        %s3118 = scalar_lea.sflag [#allocation3], %s3117
        %s3119 = sand.u32 %s184, 1
        %s3120 = smul.addr %s3119, 16
        %s3121 = scalar_lea.vmem [#allocation2], %s3120
        %p3122 = scmp.lt.s32.totalorder %s26, 1
        %s3123 = scalar_select %p3122, %s26, 1
        %s3124 = smul.addr %s3123, 8
        %s3125 = scalar_lea.vmem %s7, %s3124
        // Predicated region
        $region49: #{tpu_custom_call.1} parent=43 // pred_check
          %p3126 = pneg %p194
        $region50: #{tpu_custom_call.1} parent=43 // pred_check_branch
          %3128 = sbr.rel (%p3126) target = $region52
        $region51: #{tpu_custom_call.1} parent=43 // pred_region
          %s3129 = smul.u32 2, %s27
          %s3131 = ssub.s32 256, 256
          %3132 = vsyncadd %s3118, %s3131
          %s3133 = smul.addr %s26, 2
          %s3134 = sadd.s32 %s3129, %s3133
          %s3135 = smul.addr %s3134, 128
          %s3136 = scalar_lea.hbm %s6, %s3135
          %s3138 = sshll.u32 %s3121, 4
          %s3139 = int_to_ptr.vmem [resolvable:$true] %s3138
          %3141 = dma.vmem_to_hbm [thread:$0]  %s3139, 256, %s3136, %s3118
        $region52: #{tpu_custom_call.1} parent=43 // pred_fallthru
          _
        // Predicated region
        $region53: #{tpu_custom_call.1} parent=43 // pred_check
          %p3142 = pneg %p220
        $region54: #{tpu_custom_call.1} parent=43 // pred_check_branch
          %3144 = sbr.rel (%p3142) target = $region56
        $region55: #{tpu_custom_call.1} parent=43 // pred_region
          _
        $region56: #{tpu_custom_call.1} parent=43 // pred_fallthru
          _
      $region44: #{tpu_custom_call.1} parent=5 // pred_fallthru
        _
      %p3145 = scmp.le.s32.totalorder 2, %s17
      // Predicated region
      $region57: #{tpu_custom_call.1} parent=5 // pred_check
        %p3146 = pneg %p3145
      $region58: #{tpu_custom_call.1} parent=5 // pred_check_branch
        %3148 = sbr.rel (%p3146) target = $region60
      $region59: #{tpu_custom_call.1} parent=5 // pred_region
        %s3149 = ssub.s32 %s17, 2
        // Predicated region
        $region61: #{tpu_custom_call.1} parent=59 // pred_check
          %p3150 = pneg %p200
        $region62: #{tpu_custom_call.1} parent=59 // pred_check_branch
          %3152 = sbr.rel (%p3150) target = $region64
        $region63: #{tpu_custom_call.1} parent=59 // pred_region
          %s3153 = sand.u32 %s185, 1
          %s3154 = scalar_lea.sflag [#allocation3], %s3153
          %s3155 = sand.u32 %s185, 1
          %s3156 = smul.addr %s3155, 16
          %s3157 = scalar_lea.vmem [#allocation2], %s3156
          %3158 = dma.done %s3154, 256
        $region64: #{tpu_custom_call.1} parent=59 // pred_fallthru
          _
        // Predicated region
        $region65: #{tpu_custom_call.1} parent=59 // pred_check
          %p3159 = pneg %p226
        $region66: #{tpu_custom_call.1} parent=59 // pred_check_branch
          %3161 = sbr.rel (%p3159) target = $region68
        $region67: #{tpu_custom_call.1} parent=59 // pred_region
          %p3162 = scmp.lt.s32.totalorder %s28, 1
          %s3163 = scalar_select %p3162, %s28, 1
          %s3164 = smul.addr %s3163, 8
          %s3165 = scalar_lea.vmem %s7, %s3164
        $region68: #{tpu_custom_call.1} parent=59 // pred_fallthru
          _
      $region60: #{tpu_custom_call.1} parent=5 // pred_fallthru
        _
    $region6: #{tpu_custom_call.1} parent=1 // loop_footer
      %s21 = sadd.s32 1, %s17
    $region7: #{tpu_custom_call.1} parent=1 // loop_footer_branch
      %16 = sbr.rel target = $region3
    $region8: #{tpu_custom_call.1} parent=1 // loop_exit
      _
    %3166 = vsyncpa [#allocation3], 1
    %s3167 = scalar_lea.sflag [#allocation3], 1
    %3168 = vsyncpa %s3167, 1

</llo_original>
